<compile_context>
chip_gen: v6e
topology: v6e:2x2x1
jax: 0.10.0
libtpu: 0.0.40
codegen_flags: <defaults>
</compile_context>

<pallas_src>
import math
import functools

import jax
import jax.numpy as jnp
from jax import lax
from jax.experimental import pallas as pl
from jax.experimental.pallas import tpu as pltpu

N_MELS = 128
TARGET_DIM = 2
BN_EPS = 1e-5
SLAB = 128  # lane-dense output slab width (>= TARGET_DIM + L)


# -----------------------------------------------------------------------------
# Positional encoding (parameter-like setup, plain JAX glue)
# -----------------------------------------------------------------------------
def positional_encoding(L, D):
    pos = jnp.arange(L, dtype=jnp.float32)[:, None]
    div = jnp.exp(jnp.arange(0, D, 2, dtype=jnp.float32) * (-math.log(10000.0) / D))
    pe = jnp.zeros((L, D), dtype=jnp.float32)
    pe = pe.at[:, 0::2].set(jnp.sin(pos * div))
    pe = pe.at[:, 1::2].set(jnp.cos(pos * div))
    return pe


# -----------------------------------------------------------------------------
# Fused kernel: conv blocks (all L chunks batched) + temporal max-pool +
# attention MLP + masked softmax + weighted sum + regression head.
# One program per batch element; lengths arrive via scalar prefetch (SMEM).
# -----------------------------------------------------------------------------
def fused_kernel(lens_ref, xcol_ref, w1c_ref, s1_ref, b1_ref,
                 w2_ref, s2_ref, b2_ref, w3_ref, s3_ref, b3_ref,
                 pe_ref, wa1_ref, ba1_ref, wa2_ref, ba2_ref, wa3_ref, ba3_ref,
                 wr1_ref, br1_ref, wr2_ref, br2_ref,
                 out_ref, y1_scr, t2_scr, y2_scr, t3_scr, h_scr,
                 *, L, H1, H2, H3):
    b = pl.program_id(0)
    slab = out_ref.shape[-1]

    # ---- conv block 1: im2col'ed input -> single K=3*N_MELS matmul over all
    #      L chunks at once; fold BN + bias; ReLU.
    y1_scr[...] = jnp.maximum(
        jnp.dot(xcol_ref[...], w1c_ref[...], preferred_element_type=jnp.float32)
        * s1_ref[...] + b1_ref[...], 0.0)                        # (L*H1, dim)

    # ---- conv block 2: per-tap full-height matmuls (M = L*H1), then stride-2
    #      selection on the narrow result only.
    y1 = y1_scr[...]
    for kh in range(4):
        t2_scr[pl.ds(kh * L * H1, L * H1), :] = jnp.dot(
            y1, w2_ref[kh], preferred_element_type=jnp.float32)
    for c in range(L):
        acc = t2_scr[pl.ds(c * H1, H2, stride=2), :]
        for kh in range(1, 4):
            acc = acc + t2_scr[pl.ds(kh * (L * H1) + c * H1 + kh, H2, stride=2), :]
        y2_scr[pl.ds(c * H2, H2), :] = jnp.maximum(
            acc * s2_ref[...] + b2_ref[...], 0.0)                # (H2, 2*dim)

    # ---- conv block 3 + temporal max-pool (torch.max over remaining time).
    y2 = y2_scr[...]
    for kh in range(4):
        t3_scr[pl.ds(kh * L * H2, L * H2), :] = jnp.dot(
            y2, w3_ref[kh], preferred_element_type=jnp.float32)
    for c in range(L):
        acc = t3_scr[pl.ds(c * H2, H3, stride=2), :]
        for kh in range(1, 4):
            acc = acc + t3_scr[pl.ds(kh * (L * H2) + c * H2 + kh, H3, stride=2), :]
        y3 = jnp.maximum(acc * s3_ref[...] + b3_ref[...], 0.0)   # (H3, D)
        h_scr[pl.ds(c, 1), :] = jnp.max(y3, axis=0, keepdims=True)

    # ---- attention MLP (Dropout = identity in eval mode) ----
    h = h_scr[...]                                               # (L, D)
    z = h + pe_ref[...]
    a1 = jnp.maximum(jnp.dot(z, wa1_ref[...], preferred_element_type=jnp.float32)
                     + ba1_ref[...], 0.0)
    a2 = jnp.tanh(jnp.dot(a1, wa2_ref[...], preferred_element_type=jnp.float32)
                  + ba2_ref[...])
    logit = jnp.dot(a2, wa3_ref[...], preferred_element_type=jnp.float32) + ba3_ref[...]

    # mask padded chunks, softmax over L (sublane axis); EUP exp + approx recip.
    # NOTE: lengths[b] == 0 gives all -inf -> NaN, matching the PyTorch module.
    pos = lax.broadcasted_iota(jnp.int32, (L, 1), 0)
    logit = jnp.where(pos >= lens_ref[b], -jnp.inf, logit)
    m = jnp.max(logit, axis=0, keepdims=True)
    e = jnp.exp(logit - m)
    alpha = e * pl.reciprocal(jnp.sum(e, axis=0, keepdims=True), approx=True)  # (L,1)

    # weighted sum of chunk features (bmm) + regression head (padded to N=slab)
    wf = jnp.sum(alpha * h, axis=0, keepdims=True)               # (1, D)
    r1 = jnp.maximum(jnp.dot(wf, wr1_ref[...], preferred_element_type=jnp.float32)
                     + br1_ref[...], 0.0)                        # (1, 128)
    o = jnp.dot(r1, wr2_ref[...], preferred_element_type=jnp.float32) + br2_ref[...]
    # numerically stable sigmoid: exp(-|x|) on EUP + approx reciprocal
    eo = jnp.exp(-jnp.abs(o))
    sig = jnp.where(o >= 0.0, 1.0, eo) * pl.reciprocal(1.0 + eo, approx=True)  # (1, slab)

    # place alpha (L,1) into lanes [TARGET_DIM, TARGET_DIM+L) of a (1, slab) row
    rr = lax.broadcasted_iota(jnp.int32, (L, slab), 0)
    cc = lax.broadcasted_iota(jnp.int32, (L, slab), 1)
    alpha_slab = jnp.sum(jnp.where(cc == rr + TARGET_DIM, alpha, 0.0),
                         axis=0, keepdims=True)                  # (1, slab)

    lane = lax.broadcasted_iota(jnp.int32, (1, slab), 1)
    out_ref[...] = jnp.where(lane < TARGET_DIM, sig, alpha_slab)  # one 128-lane store


# -----------------------------------------------------------------------------
# Wrapper
# -----------------------------------------------------------------------------
def music_highlighter_forward(x, lengths, p, dim):
    B, L, T, M = x.shape
    D = 4 * dim
    H1 = (T - 3) // 2 + 1
    H2 = (H1 - 4) // 2 + 1
    H3 = (H2 - 4) // 2 + 1
    assert TARGET_DIM + L <= SLAB

    # im2col for conv1 (wrapper-side layout plumbing): gather the 3 stride-2
    # taps along lanes so the kernel does one contiguous K=3*N_MELS matmul.
    xcol = jnp.concatenate(
        [x[:, :, kh: kh + 2 * H1 - 1: 2, :] for kh in range(3)], axis=-1)
    xcol = xcol.reshape(B, L * H1, 3 * M)

    # Fold conv bias + eval-mode BatchNorm into per-channel scale/shift.
    def fold(gamma, beta, mean, var, cbias):
        s = gamma * lax.rsqrt(var + BN_EPS)
        return s[None, :], (beta + (cbias - mean) * s)[None, :]

    s1, b1 = fold(p['g1'], p['bt1'], p['m1'], p['v1'], p['cb1'])
    s2, b2 = fold(p['g2'], p['bt2'], p['m2'], p['v2'], p['cb2'])
    s3, b3 = fold(p['g3'], p['bt3'], p['m3'], p['v3'], p['cb3'])
    w1c = jnp.transpose(p['w1'][:, 0, :, :], (1, 2, 0)).reshape(3 * M, dim)  # (3M, dim)
    w2r = jnp.transpose(p['w2'][:, :, :, 0], (2, 1, 0))                      # (4, dim, 2dim)
    w3r = jnp.transpose(p['w3'][:, :, :, 0], (2, 1, 0))                      # (4, 2dim, D)
    pe = positional_encoding(L, D)

    # pad the final Linear to SLAB output lanes so the kernel writes one
    # lane-dense (1, SLAB) row [pred | alpha | zeros] per batch element.
    wr2p = jnp.zeros((128, SLAB), jnp.float32).at[:, :TARGET_DIM].set(p['wr2'])
    br2p = jnp.zeros((1, SLAB), jnp.float32).at[0, :TARGET_DIM].set(p['br2'])

    out = pl.pallas_call(
        functools.partial(fused_kernel, L=L, H1=H1, H2=H2, H3=H3),
        out_shape=jax.ShapeDtypeStruct((B, 1, SLAB), jnp.float32),
        grid_spec=pltpu.PrefetchScalarGridSpec(
            num_scalar_prefetch=1,
            grid=(B,),
            in_specs=[
                pl.BlockSpec((None, L * H1, 3 * M), lambda b, lens: (b, 0, 0)),
                pl.BlockSpec((3 * M, dim), lambda b, lens: (0, 0)),
                pl.BlockSpec((1, dim), lambda b, lens: (0, 0)),
                pl.BlockSpec((1, dim), lambda b, lens: (0, 0)),
                pl.BlockSpec((4, dim, 2 * dim), lambda b, lens: (0, 0, 0)),
                pl.BlockSpec((1, 2 * dim), lambda b, lens: (0, 0)),
                pl.BlockSpec((1, 2 * dim), lambda b, lens: (0, 0)),
                pl.BlockSpec((4, 2 * dim, D), lambda b, lens: (0, 0, 0)),
                pl.BlockSpec((1, D), lambda b, lens: (0, 0)),
                pl.BlockSpec((1, D), lambda b, lens: (0, 0)),
                pl.BlockSpec((L, D), lambda b, lens: (0, 0)),
                pl.BlockSpec((D, D), lambda b, lens: (0, 0)),
                pl.BlockSpec((1, D), lambda b, lens: (0, 0)),
                pl.BlockSpec((D, D), lambda b, lens: (0, 0)),
                pl.BlockSpec((1, D), lambda b, lens: (0, 0)),
                pl.BlockSpec((D, 1), lambda b, lens: (0, 0)),
                pl.BlockSpec((1, 1), lambda b, lens: (0, 0)),
                pl.BlockSpec((D, 128), lambda b, lens: (0, 0)),
                pl.BlockSpec((1, 128), lambda b, lens: (0, 0)),
                pl.BlockSpec((128, SLAB), lambda b, lens: (0, 0)),
                pl.BlockSpec((1, SLAB), lambda b, lens: (0, 0)),
            ],
            out_specs=pl.BlockSpec((None, 1, SLAB), lambda b, lens: (b, 0, 0)),
            scratch_shapes=[
                pltpu.VMEM((L * H1, dim), jnp.float32),          # y1
                pltpu.VMEM((4 * L * H1, 2 * dim), jnp.float32),  # conv2 per-tap
                pltpu.VMEM((L * H2, 2 * dim), jnp.float32),      # y2
                pltpu.VMEM((4 * L * H2, D), jnp.float32),        # conv3 per-tap
                pltpu.VMEM((L, D), jnp.float32),                 # chunk features
            ],
        ),
        compiler_params=pltpu.CompilerParams(dimension_semantics=("parallel",)),
    )(lengths, xcol, w1c, s1, b1, w2r, s2, b2, w3r, s3, b3, pe,
      p['wa1'], p['ba1'][None, :], p['wa2'], p['ba2'][None, :],
      p['wa3'], p['ba3'].reshape(1, 1),
      p['wr1'], p['br1'][None, :], wr2p, br2p)

    slab = out[:, 0, :]
    return slab[:, :TARGET_DIM], slab[:, TARGET_DIM:TARGET_DIM + L]


# -----------------------------------------------------------------------------
# Deterministic synthetic parameters (shapes from MusicHighlighter.__init__)
# -----------------------------------------------------------------------------
def init_params(key, dim):
    D = 4 * dim
    ks = iter(jax.random.split(key, 32))

    def nrm(shape, scale=0.1):
        return scale * jax.random.normal(next(ks), shape, jnp.float32)

    p = {}
    p['w1'], p['cb1'] = nrm((dim, 1, 3, N_MELS)), nrm((dim,))
    p['g1'], p['bt1'] = 1.0 + nrm((dim,)), nrm((dim,))
    p['m1'], p['v1'] = nrm((dim,)), 0.5 + jnp.abs(nrm((dim,)))
    p['w2'], p['cb2'] = nrm((2 * dim, dim, 4, 1)), nrm((2 * dim,))
    p['g2'], p['bt2'] = 1.0 + nrm((2 * dim,)), nrm((2 * dim,))
    p['m2'], p['v2'] = nrm((2 * dim,)), 0.5 + jnp.abs(nrm((2 * dim,)))
    p['w3'], p['cb3'] = nrm((4 * dim, 2 * dim, 4, 1)), nrm((4 * dim,))
    p['g3'], p['bt3'] = 1.0 + nrm((4 * dim,)), nrm((4 * dim,))
    p['m3'], p['v3'] = nrm((4 * dim,)), 0.5 + jnp.abs(nrm((4 * dim,)))
    p['wa1'], p['ba1'] = nrm((D, D)), nrm((D,))
    p['wa2'], p['ba2'] = nrm((D, D)), nrm((D,))
    p['wa3'], p['ba3'] = nrm((D, 1)), nrm((1,))
    p['wr1'], p['br1'] = nrm((D, 128)), nrm((128,))
    p['wr2'], p['br2'] = nrm((128, TARGET_DIM)), nrm((TARGET_DIM,))
    return p


# -----------------------------------------------------------------------------
# Plain-JAX reference (mirrors the PyTorch eval-mode forward)
# -----------------------------------------------------------------------------
def reference_forward(x, lengths, p, dim):
    B, L, T, M = x.shape
    D = 4 * dim
    xi = x.reshape(B * L, 1, T, M)

    def conv_bn_relu(inp, W, cb, g, bt, mean, var):
        y = lax.conv_general_dilated(inp, W, window_strides=(2, 1), padding='VALID',
                                     dimension_numbers=('NCHW', 'OIHW', 'NCHW'))
        y = y + cb[None, :, None, None]
        y = ((y - mean[None, :, None, None])
             * (g * lax.rsqrt(var + BN_EPS))[None, :, None, None]
             + bt[None, :, None, None])
        return jnp.maximum(y, 0.0)

    y = conv_bn_relu(xi, p['w1'], p['cb1'], p['g1'], p['bt1'], p['m1'], p['v1'])
    y = conv_bn_relu(y, p['w2'], p['cb2'], p['g2'], p['bt2'], p['m2'], p['v2'])
    y = conv_bn_relu(y, p['w3'], p['cb3'], p['g3'], p['bt3'], p['m3'], p['v3'])
    feat = jnp.max(y[:, :, :, 0], axis=2)
    h = feat.reshape(B, L, D)

    pe = positional_encoding(L, D)[None]
    z = (h + pe).reshape(B * L, D)
    a1 = jnp.maximum(z @ p['wa1'] + p['ba1'], 0.0)
    a2 = jnp.tanh(a1 @ p['wa2'] + p['ba2'])
    logits = (a2 @ p['wa3'] + p['ba3']).reshape(B, L)
    mask = jnp.arange(L)[None, :] >= lengths[:, None]
    logits = jnp.where(mask, -jnp.inf, logits)
    alpha = jax.nn.softmax(logits, axis=1)
    wf = jnp.einsum('bl,bld->bd', alpha, h)
    r1 = jnp.maximum(wf @ p['wr1'] + p['br1'], 0.0)
    pred = jax.nn.sigmoid(r1 @ p['wr2'] + p['br2'])
    return pred, alpha


if __name__ == "__main__":
    dim = 8                      # feat_dim = 32
    B, L, T, M = 2, 4, 35, N_MELS
    key = jax.random.PRNGKey(0)
    kx, kp = jax.random.split(key)
    x = jax.random.normal(kx, (B, L, T, M), jnp.float32)
    lengths = jnp.array([4, 2], dtype=jnp.int32)
    params = init_params(kp, dim)

    pred, alpha = music_highlighter_forward(x, lengths, params, dim)
    (pred, alpha) = jax.block_until_ready((pred, alpha))

    pred_ref, alpha_ref = reference_forward(x, lengths, params, dim)
    assert pred.shape == (B, TARGET_DIM) and alpha.shape == (B, L)
    assert bool(jnp.all(jnp.isfinite(pred))) and bool(jnp.all(jnp.isfinite(alpha)))
    assert bool(jnp.allclose(pred, pred_ref, atol=1e-2, rtol=1e-2))
    assert bool(jnp.allclose(alpha, alpha_ref, atol=1e-2, rtol=1e-2))
    print("KERNEL_OK")
</pallas_src>

<mosaic_0001>
module attributes {stable_mosaic.version = 11 : i64} {
  func.func @fused_kernel(%arg0: i32, %arg1: memref<2xi32, #tpu.memory_space<smem>>, %arg2: memref<1x68x384xf32, #tpu.memory_space<vmem>>, %arg3: memref<384x8xf32, #tpu.memory_space<vmem>>, %arg4: memref<1x8xf32, #tpu.memory_space<vmem>>, %arg5: memref<1x8xf32, #tpu.memory_space<vmem>>, %arg6: memref<4x8x16xf32, #tpu.memory_space<vmem>>, %arg7: memref<1x16xf32, #tpu.memory_space<vmem>>, %arg8: memref<1x16xf32, #tpu.memory_space<vmem>>, %arg9: memref<4x16x32xf32, #tpu.memory_space<vmem>>, %arg10: memref<1x32xf32, #tpu.memory_space<vmem>>, %arg11: memref<1x32xf32, #tpu.memory_space<vmem>>, %arg12: memref<4x32xf32, #tpu.memory_space<vmem>>, %arg13: memref<32x32xf32, #tpu.memory_space<vmem>>, %arg14: memref<1x32xf32, #tpu.memory_space<vmem>>, %arg15: memref<32x32xf32, #tpu.memory_space<vmem>>, %arg16: memref<1x32xf32, #tpu.memory_space<vmem>>, %arg17: memref<32x1xf32, #tpu.memory_space<vmem>>, %arg18: memref<1x1xf32, #tpu.memory_space<vmem>>, %arg19: memref<32x128xf32, #tpu.memory_space<vmem>>, %arg20: memref<1x128xf32, #tpu.memory_space<vmem>>, %arg21: memref<128x128xf32, #tpu.memory_space<vmem>>, %arg22: memref<1x128xf32, #tpu.memory_space<vmem>>, %arg23: memref<1x1x128xf32, #tpu.memory_space<vmem>>, %arg24: memref<68x8xf32, #tpu.memory_space<vmem>>, %arg25: memref<272x16xf32, #tpu.memory_space<vmem>>, %arg26: memref<28x16xf32, #tpu.memory_space<vmem>>, %arg27: memref<112x32xf32, #tpu.memory_space<vmem>>, %arg28: memref<4x32xf32, #tpu.memory_space<vmem>>) attributes {dimension_semantics = [#tpu.dimension_semantics<parallel>], iteration_bounds = array<i64: 2>, scalar_prefetch = 1 : i64, scratch_operands = 5 : i64, tpu.core_type = #tpu.core_type<tc>, window_params = [{transform_indices = @transform_0, window_bounds = array<i64: 1, 68, 384>}, {pipeline_mode = #tpu.pipeline_mode<synchronous>, transform_indices = @transform_1, window_bounds = array<i64: 384, 8>}, {pipeline_mode = #tpu.pipeline_mode<synchronous>, transform_indices = @transform_2, window_bounds = array<i64: 1, 8>}, {pipeline_mode = #tpu.pipeline_mode<synchronous>, transform_indices = @transform_3, window_bounds = array<i64: 1, 8>}, {pipeline_mode = #tpu.pipeline_mode<synchronous>, transform_indices = @transform_4, window_bounds = array<i64: 4, 8, 16>}, {pipeline_mode = #tpu.pipeline_mode<synchronous>, transform_indices = @transform_5, window_bounds = array<i64: 1, 16>}, {pipeline_mode = #tpu.pipeline_mode<synchronous>, transform_indices = @transform_6, window_bounds = array<i64: 1, 16>}, {pipeline_mode = #tpu.pipeline_mode<synchronous>, transform_indices = @transform_7, window_bounds = array<i64: 4, 16, 32>}, {pipeline_mode = #tpu.pipeline_mode<synchronous>, transform_indices = @transform_8, window_bounds = array<i64: 1, 32>}, {pipeline_mode = #tpu.pipeline_mode<synchronous>, transform_indices = @transform_9, window_bounds = array<i64: 1, 32>}, {pipeline_mode = #tpu.pipeline_mode<synchronous>, transform_indices = @transform_10, window_bounds = array<i64: 4, 32>}, {pipeline_mode = #tpu.pipeline_mode<synchronous>, transform_indices = @transform_11, window_bounds = array<i64: 32, 32>}, {pipeline_mode = #tpu.pipeline_mode<synchronous>, transform_indices = @transform_12, window_bounds = array<i64: 1, 32>}, {pipeline_mode = #tpu.pipeline_mode<synchronous>, transform_indices = @transform_13, window_bounds = array<i64: 32, 32>}, {pipeline_mode = #tpu.pipeline_mode<synchronous>, transform_indices = @transform_14, window_bounds = array<i64: 1, 32>}, {pipeline_mode = #tpu.pipeline_mode<synchronous>, transform_indices = @transform_15, window_bounds = array<i64: 32, 1>}, {pipeline_mode = #tpu.pipeline_mode<synchronous>, transform_indices = @transform_16, window_bounds = array<i64: 1, 1>}, {pipeline_mode = #tpu.pipeline_mode<synchronous>, transform_indices = @transform_17, window_bounds = array<i64: 32, 128>}, {pipeline_mode = #tpu.pipeline_mode<synchronous>, transform_indices = @transform_18, window_bounds = array<i64: 1, 128>}, {pipeline_mode = #tpu.pipeline_mode<synchronous>, transform_indices = @transform_19, window_bounds = array<i64: 128, 128>}, {pipeline_mode = #tpu.pipeline_mode<synchronous>, transform_indices = @transform_20, window_bounds = array<i64: 1, 128>}, {transform_indices = @transform_21, window_bounds = array<i64: 1, 1, 128>}]} {
    %c0 = arith.constant 0 : index
    %c0_0 = arith.constant 0 : index
    %c0_1 = arith.constant 0 : index
    %0 = vector.load %arg2[%c0, %c0_0, %c0_1] : memref<1x68x384xf32, #tpu.memory_space<vmem>>, vector<1x68x384xf32>
    %1 = vector.shape_cast %0 : vector<1x68x384xf32> to vector<68x384xf32>
    %c0_2 = arith.constant 0 : index
    %c0_3 = arith.constant 0 : index
    %2 = vector.load %arg3[%c0_2, %c0_3] : memref<384x8xf32, #tpu.memory_space<vmem>>, vector<384x8xf32>
    %cst = arith.constant dense<0.000000e+00> : vector<68x8xf32>
    %3 = tpu.matmul %1, %2, %cst {dimension_numbers = #tpu.dot_dimension_numbers<[1], [0], [0], [1], [0, 0, 1, 1], [], []>} : vector<68x384xf32>, vector<384x8xf32>, vector<68x8xf32> -> vector<68x8xf32>
    %c0_4 = arith.constant 0 : index
    %c0_5 = arith.constant 0 : index
    %4 = vector.load %arg4[%c0_4, %c0_5] : memref<1x8xf32, #tpu.memory_space<vmem>>, vector<1x8xf32>
    %5 = vector.broadcast %4 : vector<1x8xf32> to vector<68x8xf32>
    %6 = arith.mulf %3, %5 : vector<68x8xf32>
    %c0_6 = arith.constant 0 : index
    %c0_7 = arith.constant 0 : index
    %7 = vector.load %arg5[%c0_6, %c0_7] : memref<1x8xf32, #tpu.memory_space<vmem>>, vector<1x8xf32>
    %8 = vector.broadcast %7 : vector<1x8xf32> to vector<68x8xf32>
    %9 = arith.addf %6, %8 : vector<68x8xf32>
    %cst_8 = arith.constant 0.000000e+00 : f32
    %10 = vector.broadcast %cst_8 : f32 to vector<68x8xf32>
    %11 = arith.maximumf %9, %10 : vector<68x8xf32>
    %c0_9 = arith.constant 0 : index
    %c0_10 = arith.constant 0 : index
    %12 = vector.load %arg24[%c0_9, %c0_10] : memref<68x8xf32, #tpu.memory_space<vmem>>, vector<68x8xf32>
    tpu.vector_store %arg24[%c0_9, %c0_10], %11 {strides = array<i32>} : memref<68x8xf32, #tpu.memory_space<vmem>>, vector<68x8xf32>,
    %c0_11 = arith.constant 0 : index
    %c0_12 = arith.constant 0 : index
    %13 = vector.load %arg24[%c0_11, %c0_12] : memref<68x8xf32, #tpu.memory_space<vmem>>, vector<68x8xf32>
    %c0_13 = arith.constant 0 : index
    %c0_14 = arith.constant 0 : index
    %c0_15 = arith.constant 0 : index
    %14 = vector.load %arg6[%c0_13, %c0_14, %c0_15] : memref<4x8x16xf32, #tpu.memory_space<vmem>>, vector<1x8x16xf32>
    %15 = vector.shape_cast %14 : vector<1x8x16xf32> to vector<8x16xf32>
    %cst_16 = arith.constant dense<0.000000e+00> : vector<68x16xf32>
    %16 = tpu.matmul %13, %15, %cst_16 {dimension_numbers = #tpu.dot_dimension_numbers<[1], [0], [0], [1], [0, 0, 1, 1], [], []>} : vector<68x8xf32>, vector<8x16xf32>, vector<68x16xf32> -> vector<68x16xf32>
    %c0_17 = arith.constant 0 : index
    %c0_18 = arith.constant 0 : index
    %17 = vector.load %arg25[%c0_17, %c0_18] : memref<272x16xf32, #tpu.memory_space<vmem>>, vector<68x16xf32>
    tpu.vector_store %arg25[%c0_17, %c0_18], %16 {strides = array<i32>} : memref<272x16xf32, #tpu.memory_space<vmem>>, vector<68x16xf32>,
    %c1 = arith.constant 1 : index
    %c0_19 = arith.constant 0 : index
    %c0_20 = arith.constant 0 : index
    %18 = vector.load %arg6[%c1, %c0_19, %c0_20] : memref<4x8x16xf32, #tpu.memory_space<vmem>>, vector<1x8x16xf32>
    %19 = vector.shape_cast %18 : vector<1x8x16xf32> to vector<8x16xf32>
    %cst_21 = arith.constant dense<0.000000e+00> : vector<68x16xf32>
    %20 = tpu.matmul %13, %19, %cst_21 {dimension_numbers = #tpu.dot_dimension_numbers<[1], [0], [0], [1], [0, 0, 1, 1], [], []>} : vector<68x8xf32>, vector<8x16xf32>, vector<68x16xf32> -> vector<68x16xf32>
    %c68 = arith.constant 68 : index
    %c0_22 = arith.constant 0 : index
    %21 = vector.load %arg25[%c68, %c0_22] : memref<272x16xf32, #tpu.memory_space<vmem>>, vector<68x16xf32>
    tpu.vector_store %arg25[%c68, %c0_22], %20 {strides = array<i32>} : memref<272x16xf32, #tpu.memory_space<vmem>>, vector<68x16xf32>,
    %c2 = arith.constant 2 : index
    %c0_23 = arith.constant 0 : index
    %c0_24 = arith.constant 0 : index
    %22 = vector.load %arg6[%c2, %c0_23, %c0_24] : memref<4x8x16xf32, #tpu.memory_space<vmem>>, vector<1x8x16xf32>
    %23 = vector.shape_cast %22 : vector<1x8x16xf32> to vector<8x16xf32>
    %cst_25 = arith.constant dense<0.000000e+00> : vector<68x16xf32>
    %24 = tpu.matmul %13, %23, %cst_25 {dimension_numbers = #tpu.dot_dimension_numbers<[1], [0], [0], [1], [0, 0, 1, 1], [], []>} : vector<68x8xf32>, vector<8x16xf32>, vector<68x16xf32> -> vector<68x16xf32>
    %c136 = arith.constant 136 : index
    %c0_26 = arith.constant 0 : index
    %25 = vector.load %arg25[%c136, %c0_26] : memref<272x16xf32, #tpu.memory_space<vmem>>, vector<68x16xf32>
    tpu.vector_store %arg25[%c136, %c0_26], %24 {strides = array<i32>} : memref<272x16xf32, #tpu.memory_space<vmem>>, vector<68x16xf32>,
    %c3 = arith.constant 3 : index
    %c0_27 = arith.constant 0 : index
    %c0_28 = arith.constant 0 : index
    %26 = vector.load %arg6[%c3, %c0_27, %c0_28] : memref<4x8x16xf32, #tpu.memory_space<vmem>>, vector<1x8x16xf32>
    %27 = vector.shape_cast %26 : vector<1x8x16xf32> to vector<8x16xf32>
    %cst_29 = arith.constant dense<0.000000e+00> : vector<68x16xf32>
    %28 = tpu.matmul %13, %27, %cst_29 {dimension_numbers = #tpu.dot_dimension_numbers<[1], [0], [0], [1], [0, 0, 1, 1], [], []>} : vector<68x8xf32>, vector<8x16xf32>, vector<68x16xf32> -> vector<68x16xf32>
    %c204 = arith.constant 204 : index
    %c0_30 = arith.constant 0 : index
    %29 = vector.load %arg25[%c204, %c0_30] : memref<272x16xf32, #tpu.memory_space<vmem>>, vector<68x16xf32>
    tpu.vector_store %arg25[%c204, %c0_30], %28 {strides = array<i32>} : memref<272x16xf32, #tpu.memory_space<vmem>>, vector<68x16xf32>,
    %c0_31 = arith.constant 0 : index
    %c0_32 = arith.constant 0 : index
    %30 = tpu.strided_load %arg25[%c0_31, %c0_32] {strides = array<i32: 2, 1>} : memref<272x16xf32, #tpu.memory_space<vmem>>, vector<7x16xf32>
    %c69 = arith.constant 69 : index
    %c0_33 = arith.constant 0 : index
    %31 = tpu.strided_load %arg25[%c69, %c0_33] {strides = array<i32: 2, 1>} : memref<272x16xf32, #tpu.memory_space<vmem>>, vector<7x16xf32>
    %32 = arith.addf %30, %31 : vector<7x16xf32>
    %c138 = arith.constant 138 : index
    %c0_34 = arith.constant 0 : index
    %33 = tpu.strided_load %arg25[%c138, %c0_34] {strides = array<i32: 2, 1>} : memref<272x16xf32, #tpu.memory_space<vmem>>, vector<7x16xf32>
    %34 = arith.addf %32, %33 : vector<7x16xf32>
    %c207 = arith.constant 207 : index
    %c0_35 = arith.constant 0 : index
    %35 = tpu.strided_load %arg25[%c207, %c0_35] {strides = array<i32: 2, 1>} : memref<272x16xf32, #tpu.memory_space<vmem>>, vector<7x16xf32>
    %36 = arith.addf %34, %35 : vector<7x16xf32>
    %c0_36 = arith.constant 0 : index
    %c0_37 = arith.constant 0 : index
    %37 = vector.load %arg7[%c0_36, %c0_37] : memref<1x16xf32, #tpu.memory_space<vmem>>, vector<1x16xf32>
    %38 = vector.broadcast %37 : vector<1x16xf32> to vector<7x16xf32>
    %39 = arith.mulf %36, %38 : vector<7x16xf32>
    %c0_38 = arith.constant 0 : index
    %c0_39 = arith.constant 0 : index
    %40 = vector.load %arg8[%c0_38, %c0_39] : memref<1x16xf32, #tpu.memory_space<vmem>>, vector<1x16xf32>
    %41 = vector.broadcast %40 : vector<1x16xf32> to vector<7x16xf32>
    %42 = arith.addf %39, %41 : vector<7x16xf32>
    %cst_40 = arith.constant 0.000000e+00 : f32
    %43 = vector.broadcast %cst_40 : f32 to vector<7x16xf32>
    %44 = arith.maximumf %42, %43 : vector<7x16xf32>
    %c0_41 = arith.constant 0 : index
    %c0_42 = arith.constant 0 : index
    %45 = vector.load %arg26[%c0_41, %c0_42] : memref<28x16xf32, #tpu.memory_space<vmem>>, vector<7x16xf32>
    tpu.vector_store %arg26[%c0_41, %c0_42], %44 {strides = array<i32>} : memref<28x16xf32, #tpu.memory_space<vmem>>, vector<7x16xf32>,
    %c17 = arith.constant 17 : index
    %c0_43 = arith.constant 0 : index
    %46 = tpu.strided_load %arg25[%c17, %c0_43] {strides = array<i32: 2, 1>} : memref<272x16xf32, #tpu.memory_space<vmem>>, vector<7x16xf32>
    %c86 = arith.constant 86 : index
    %c0_44 = arith.constant 0 : index
    %47 = tpu.strided_load %arg25[%c86, %c0_44] {strides = array<i32: 2, 1>} : memref<272x16xf32, #tpu.memory_space<vmem>>, vector<7x16xf32>
    %48 = arith.addf %46, %47 : vector<7x16xf32>
    %c155 = arith.constant 155 : index
    %c0_45 = arith.constant 0 : index
    %49 = tpu.strided_load %arg25[%c155, %c0_45] {strides = array<i32: 2, 1>} : memref<272x16xf32, #tpu.memory_space<vmem>>, vector<7x16xf32>
    %50 = arith.addf %48, %49 : vector<7x16xf32>
    %c224 = arith.constant 224 : index
    %c0_46 = arith.constant 0 : index
    %51 = tpu.strided_load %arg25[%c224, %c0_46] {strides = array<i32: 2, 1>} : memref<272x16xf32, #tpu.memory_space<vmem>>, vector<7x16xf32>
    %52 = arith.addf %50, %51 : vector<7x16xf32>
    %c0_47 = arith.constant 0 : index
    %c0_48 = arith.constant 0 : index
    %53 = vector.load %arg7[%c0_47, %c0_48] : memref<1x16xf32, #tpu.memory_space<vmem>>, vector<1x16xf32>
    %54 = vector.broadcast %53 : vector<1x16xf32> to vector<7x16xf32>
    %55 = arith.mulf %52, %54 : vector<7x16xf32>
    %c0_49 = arith.constant 0 : index
    %c0_50 = arith.constant 0 : index
    %56 = vector.load %arg8[%c0_49, %c0_50] : memref<1x16xf32, #tpu.memory_space<vmem>>, vector<1x16xf32>
    %57 = vector.broadcast %56 : vector<1x16xf32> to vector<7x16xf32>
    %58 = arith.addf %55, %57 : vector<7x16xf32>
    %cst_51 = arith.constant 0.000000e+00 : f32
    %59 = vector.broadcast %cst_51 : f32 to vector<7x16xf32>
    %60 = arith.maximumf %58, %59 : vector<7x16xf32>
    %c7 = arith.constant 7 : index
    %c0_52 = arith.constant 0 : index
    %61 = vector.load %arg26[%c7, %c0_52] : memref<28x16xf32, #tpu.memory_space<vmem>>, vector<7x16xf32>
    tpu.vector_store %arg26[%c7, %c0_52], %60 {strides = array<i32>} : memref<28x16xf32, #tpu.memory_space<vmem>>, vector<7x16xf32>,
    %c34 = arith.constant 34 : index
    %c0_53 = arith.constant 0 : index
    %62 = tpu.strided_load %arg25[%c34, %c0_53] {strides = array<i32: 2, 1>} : memref<272x16xf32, #tpu.memory_space<vmem>>, vector<7x16xf32>
    %c103 = arith.constant 103 : index
    %c0_54 = arith.constant 0 : index
    %63 = tpu.strided_load %arg25[%c103, %c0_54] {strides = array<i32: 2, 1>} : memref<272x16xf32, #tpu.memory_space<vmem>>, vector<7x16xf32>
    %64 = arith.addf %62, %63 : vector<7x16xf32>
    %c172 = arith.constant 172 : index
    %c0_55 = arith.constant 0 : index
    %65 = tpu.strided_load %arg25[%c172, %c0_55] {strides = array<i32: 2, 1>} : memref<272x16xf32, #tpu.memory_space<vmem>>, vector<7x16xf32>
    %66 = arith.addf %64, %65 : vector<7x16xf32>
    %c241 = arith.constant 241 : index
    %c0_56 = arith.constant 0 : index
    %67 = tpu.strided_load %arg25[%c241, %c0_56] {strides = array<i32: 2, 1>} : memref<272x16xf32, #tpu.memory_space<vmem>>, vector<7x16xf32>
    %68 = arith.addf %66, %67 : vector<7x16xf32>
    %c0_57 = arith.constant 0 : index
    %c0_58 = arith.constant 0 : index
    %69 = vector.load %arg7[%c0_57, %c0_58] : memref<1x16xf32, #tpu.memory_space<vmem>>, vector<1x16xf32>
    %70 = vector.broadcast %69 : vector<1x16xf32> to vector<7x16xf32>
    %71 = arith.mulf %68, %70 : vector<7x16xf32>
    %c0_59 = arith.constant 0 : index
    %c0_60 = arith.constant 0 : index
    %72 = vector.load %arg8[%c0_59, %c0_60] : memref<1x16xf32, #tpu.memory_space<vmem>>, vector<1x16xf32>
    %73 = vector.broadcast %72 : vector<1x16xf32> to vector<7x16xf32>
    %74 = arith.addf %71, %73 : vector<7x16xf32>
    %cst_61 = arith.constant 0.000000e+00 : f32
    %75 = vector.broadcast %cst_61 : f32 to vector<7x16xf32>
    %76 = arith.maximumf %74, %75 : vector<7x16xf32>
    %c14 = arith.constant 14 : index
    %c0_62 = arith.constant 0 : index
    %77 = vector.load %arg26[%c14, %c0_62] : memref<28x16xf32, #tpu.memory_space<vmem>>, vector<7x16xf32>
    tpu.vector_store %arg26[%c14, %c0_62], %76 {strides = array<i32>} : memref<28x16xf32, #tpu.memory_space<vmem>>, vector<7x16xf32>,
    %c51 = arith.constant 51 : index
    %c0_63 = arith.constant 0 : index
    %78 = tpu.strided_load %arg25[%c51, %c0_63] {strides = array<i32: 2, 1>} : memref<272x16xf32, #tpu.memory_space<vmem>>, vector<7x16xf32>
    %c120 = arith.constant 120 : index
    %c0_64 = arith.constant 0 : index
    %79 = tpu.strided_load %arg25[%c120, %c0_64] {strides = array<i32: 2, 1>} : memref<272x16xf32, #tpu.memory_space<vmem>>, vector<7x16xf32>
    %80 = arith.addf %78, %79 : vector<7x16xf32>
    %c189 = arith.constant 189 : index
    %c0_65 = arith.constant 0 : index
    %81 = tpu.strided_load %arg25[%c189, %c0_65] {strides = array<i32: 2, 1>} : memref<272x16xf32, #tpu.memory_space<vmem>>, vector<7x16xf32>
    %82 = arith.addf %80, %81 : vector<7x16xf32>
    %c258 = arith.constant 258 : index
    %c0_66 = arith.constant 0 : index
    %83 = tpu.strided_load %arg25[%c258, %c0_66] {strides = array<i32: 2, 1>} : memref<272x16xf32, #tpu.memory_space<vmem>>, vector<7x16xf32>
    %84 = arith.addf %82, %83 : vector<7x16xf32>
    %c0_67 = arith.constant 0 : index
    %c0_68 = arith.constant 0 : index
    %85 = vector.load %arg7[%c0_67, %c0_68] : memref<1x16xf32, #tpu.memory_space<vmem>>, vector<1x16xf32>
    %86 = vector.broadcast %85 : vector<1x16xf32> to vector<7x16xf32>
    %87 = arith.mulf %84, %86 : vector<7x16xf32>
    %c0_69 = arith.constant 0 : index
    %c0_70 = arith.constant 0 : index
    %88 = vector.load %arg8[%c0_69, %c0_70] : memref<1x16xf32, #tpu.memory_space<vmem>>, vector<1x16xf32>
    %89 = vector.broadcast %88 : vector<1x16xf32> to vector<7x16xf32>
    %90 = arith.addf %87, %89 : vector<7x16xf32>
    %cst_71 = arith.constant 0.000000e+00 : f32
    %91 = vector.broadcast %cst_71 : f32 to vector<7x16xf32>
    %92 = arith.maximumf %90, %91 : vector<7x16xf32>
    %c21 = arith.constant 21 : index
    %c0_72 = arith.constant 0 : index
    %93 = vector.load %arg26[%c21, %c0_72] : memref<28x16xf32, #tpu.memory_space<vmem>>, vector<7x16xf32>
    tpu.vector_store %arg26[%c21, %c0_72], %92 {strides = array<i32>} : memref<28x16xf32, #tpu.memory_space<vmem>>, vector<7x16xf32>,
    %c0_73 = arith.constant 0 : index
    %c0_74 = arith.constant 0 : index
    %94 = vector.load %arg26[%c0_73, %c0_74] : memref<28x16xf32, #tpu.memory_space<vmem>>, vector<28x16xf32>
    %c0_75 = arith.constant 0 : index
    %c0_76 = arith.constant 0 : index
    %c0_77 = arith.constant 0 : index
    %95 = vector.load %arg9[%c0_75, %c0_76, %c0_77] : memref<4x16x32xf32, #tpu.memory_space<vmem>>, vector<1x16x32xf32>
    %96 = vector.shape_cast %95 : vector<1x16x32xf32> to vector<16x32xf32>
    %cst_78 = arith.constant dense<0.000000e+00> : vector<28x32xf32>
    %97 = tpu.matmul %94, %96, %cst_78 {dimension_numbers = #tpu.dot_dimension_numbers<[1], [0], [0], [1], [0, 0, 1, 1], [], []>} : vector<28x16xf32>, vector<16x32xf32>, vector<28x32xf32> -> vector<28x32xf32>
    %c0_79 = arith.constant 0 : index
    %c0_80 = arith.constant 0 : index
    %98 = vector.load %arg27[%c0_79, %c0_80] : memref<112x32xf32, #tpu.memory_space<vmem>>, vector<28x32xf32>
    tpu.vector_store %arg27[%c0_79, %c0_80], %97 {strides = array<i32>} : memref<112x32xf32, #tpu.memory_space<vmem>>, vector<28x32xf32>,
    %c1_81 = arith.constant 1 : index
    %c0_82 = arith.constant 0 : index
    %c0_83 = arith.constant 0 : index
    %99 = vector.load %arg9[%c1_81, %c0_82, %c0_83] : memref<4x16x32xf32, #tpu.memory_space<vmem>>, vector<1x16x32xf32>
    %100 = vector.shape_cast %99 : vector<1x16x32xf32> to vector<16x32xf32>
    %cst_84 = arith.constant dense<0.000000e+00> : vector<28x32xf32>
    %101 = tpu.matmul %94, %100, %cst_84 {dimension_numbers = #tpu.dot_dimension_numbers<[1], [0], [0], [1], [0, 0, 1, 1], [], []>} : vector<28x16xf32>, vector<16x32xf32>, vector<28x32xf32> -> vector<28x32xf32>
    %c28 = arith.constant 28 : index
    %c0_85 = arith.constant 0 : index
    %102 = vector.load %arg27[%c28, %c0_85] : memref<112x32xf32, #tpu.memory_space<vmem>>, vector<28x32xf32>
    tpu.vector_store %arg27[%c28, %c0_85], %101 {strides = array<i32>} : memref<112x32xf32, #tpu.memory_space<vmem>>, vector<28x32xf32>,
    %c2_86 = arith.constant 2 : index
    %c0_87 = arith.constant 0 : index
    %c0_88 = arith.constant 0 : index
    %103 = vector.load %arg9[%c2_86, %c0_87, %c0_88] : memref<4x16x32xf32, #tpu.memory_space<vmem>>, vector<1x16x32xf32>
    %104 = vector.shape_cast %103 : vector<1x16x32xf32> to vector<16x32xf32>
    %cst_89 = arith.constant dense<0.000000e+00> : vector<28x32xf32>
    %105 = tpu.matmul %94, %104, %cst_89 {dimension_numbers = #tpu.dot_dimension_numbers<[1], [0], [0], [1], [0, 0, 1, 1], [], []>} : vector<28x16xf32>, vector<16x32xf32>, vector<28x32xf32> -> vector<28x32xf32>
    %c56 = arith.constant 56 : index
    %c0_90 = arith.constant 0 : index
    %106 = vector.load %arg27[%c56, %c0_90] : memref<112x32xf32, #tpu.memory_space<vmem>>, vector<28x32xf32>
    tpu.vector_store %arg27[%c56, %c0_90], %105 {strides = array<i32>} : memref<112x32xf32, #tpu.memory_space<vmem>>, vector<28x32xf32>,
    %c3_91 = arith.constant 3 : index
    %c0_92 = arith.constant 0 : index
    %c0_93 = arith.constant 0 : index
    %107 = vector.load %arg9[%c3_91, %c0_92, %c0_93] : memref<4x16x32xf32, #tpu.memory_space<vmem>>, vector<1x16x32xf32>
    %108 = vector.shape_cast %107 : vector<1x16x32xf32> to vector<16x32xf32>
    %cst_94 = arith.constant dense<0.000000e+00> : vector<28x32xf32>
    %109 = tpu.matmul %94, %108, %cst_94 {dimension_numbers = #tpu.dot_dimension_numbers<[1], [0], [0], [1], [0, 0, 1, 1], [], []>} : vector<28x16xf32>, vector<16x32xf32>, vector<28x32xf32> -> vector<28x32xf32>
    %c84 = arith.constant 84 : index
    %c0_95 = arith.constant 0 : index
    %110 = vector.load %arg27[%c84, %c0_95] : memref<112x32xf32, #tpu.memory_space<vmem>>, vector<28x32xf32>
    tpu.vector_store %arg27[%c84, %c0_95], %109 {strides = array<i32>} : memref<112x32xf32, #tpu.memory_space<vmem>>, vector<28x32xf32>,
    %c0_96 = arith.constant 0 : index
    %c0_97 = arith.constant 0 : index
    %111 = tpu.strided_load %arg27[%c0_96, %c0_97] {strides = array<i32: 2, 1>} : memref<112x32xf32, #tpu.memory_space<vmem>>, vector<2x32xf32>
    %c29 = arith.constant 29 : index
    %c0_98 = arith.constant 0 : index
    %112 = tpu.strided_load %arg27[%c29, %c0_98] {strides = array<i32: 2, 1>} : memref<112x32xf32, #tpu.memory_space<vmem>>, vector<2x32xf32>
    %113 = arith.addf %111, %112 : vector<2x32xf32>
    %c58 = arith.constant 58 : index
    %c0_99 = arith.constant 0 : index
    %114 = tpu.strided_load %arg27[%c58, %c0_99] {strides = array<i32: 2, 1>} : memref<112x32xf32, #tpu.memory_space<vmem>>, vector<2x32xf32>
    %115 = arith.addf %113, %114 : vector<2x32xf32>
    %c87 = arith.constant 87 : index
    %c0_100 = arith.constant 0 : index
    %116 = tpu.strided_load %arg27[%c87, %c0_100] {strides = array<i32: 2, 1>} : memref<112x32xf32, #tpu.memory_space<vmem>>, vector<2x32xf32>
    %117 = arith.addf %115, %116 : vector<2x32xf32>
    %c0_101 = arith.constant 0 : index
    %c0_102 = arith.constant 0 : index
    %118 = vector.load %arg10[%c0_101, %c0_102] : memref<1x32xf32, #tpu.memory_space<vmem>>, vector<1x32xf32>
    %119 = vector.broadcast %118 : vector<1x32xf32> to vector<2x32xf32>
    %120 = arith.mulf %117, %119 : vector<2x32xf32>
    %c0_103 = arith.constant 0 : index
    %c0_104 = arith.constant 0 : index
    %121 = vector.load %arg11[%c0_103, %c0_104] : memref<1x32xf32, #tpu.memory_space<vmem>>, vector<1x32xf32>
    %122 = vector.broadcast %121 : vector<1x32xf32> to vector<2x32xf32>
    %123 = arith.addf %120, %122 : vector<2x32xf32>
    %cst_105 = arith.constant 0.000000e+00 : f32
    %124 = vector.broadcast %cst_105 : f32 to vector<2x32xf32>
    %125 = arith.maximumf %123, %124 : vector<2x32xf32>
    %cst_106 = arith.constant dense<0xFF800000> : vector<32xf32>
    %126 = vector.multi_reduction <maximumf>, %125, %cst_106 [0] : vector<2x32xf32> to vector<32xf32>
    %127 = vector.shape_cast %126 : vector<32xf32> to vector<1x32xf32>
    %c0_107 = arith.constant 0 : index
    %c0_108 = arith.constant 0 : index
    %128 = vector.load %arg28[%c0_107, %c0_108] : memref<4x32xf32, #tpu.memory_space<vmem>>, vector<1x32xf32>
    tpu.vector_store %arg28[%c0_107, %c0_108], %127 {strides = array<i32>} : memref<4x32xf32, #tpu.memory_space<vmem>>, vector<1x32xf32>,
    %c7_109 = arith.constant 7 : index
    %c0_110 = arith.constant 0 : index
    %129 = tpu.strided_load %arg27[%c7_109, %c0_110] {strides = array<i32: 2, 1>} : memref<112x32xf32, #tpu.memory_space<vmem>>, vector<2x32xf32>
    %c36 = arith.constant 36 : index
    %c0_111 = arith.constant 0 : index
    %130 = tpu.strided_load %arg27[%c36, %c0_111] {strides = array<i32: 2, 1>} : memref<112x32xf32, #tpu.memory_space<vmem>>, vector<2x32xf32>
    %131 = arith.addf %129, %130 : vector<2x32xf32>
    %c65 = arith.constant 65 : index
    %c0_112 = arith.constant 0 : index
    %132 = tpu.strided_load %arg27[%c65, %c0_112] {strides = array<i32: 2, 1>} : memref<112x32xf32, #tpu.memory_space<vmem>>, vector<2x32xf32>
    %133 = arith.addf %131, %132 : vector<2x32xf32>
    %c94 = arith.constant 94 : index
    %c0_113 = arith.constant 0 : index
    %134 = tpu.strided_load %arg27[%c94, %c0_113] {strides = array<i32: 2, 1>} : memref<112x32xf32, #tpu.memory_space<vmem>>, vector<2x32xf32>
    %135 = arith.addf %133, %134 : vector<2x32xf32>
    %c0_114 = arith.constant 0 : index
    %c0_115 = arith.constant 0 : index
    %136 = vector.load %arg10[%c0_114, %c0_115] : memref<1x32xf32, #tpu.memory_space<vmem>>, vector<1x32xf32>
    %137 = vector.broadcast %136 : vector<1x32xf32> to vector<2x32xf32>
    %138 = arith.mulf %135, %137 : vector<2x32xf32>
    %c0_116 = arith.constant 0 : index
    %c0_117 = arith.constant 0 : index
    %139 = vector.load %arg11[%c0_116, %c0_117] : memref<1x32xf32, #tpu.memory_space<vmem>>, vector<1x32xf32>
    %140 = vector.broadcast %139 : vector<1x32xf32> to vector<2x32xf32>
    %141 = arith.addf %138, %140 : vector<2x32xf32>
    %cst_118 = arith.constant 0.000000e+00 : f32
    %142 = vector.broadcast %cst_118 : f32 to vector<2x32xf32>
    %143 = arith.maximumf %141, %142 : vector<2x32xf32>
    %cst_119 = arith.constant dense<0xFF800000> : vector<32xf32>
    %144 = vector.multi_reduction <maximumf>, %143, %cst_119 [0] : vector<2x32xf32> to vector<32xf32>
    %145 = vector.shape_cast %144 : vector<32xf32> to vector<1x32xf32>
    %c1_120 = arith.constant 1 : index
    %c0_121 = arith.constant 0 : index
    %146 = vector.load %arg28[%c1_120, %c0_121] : memref<4x32xf32, #tpu.memory_space<vmem>>, vector<1x32xf32>
    tpu.vector_store %arg28[%c1_120, %c0_121], %145 {strides = array<i32>} : memref<4x32xf32, #tpu.memory_space<vmem>>, vector<1x32xf32>,
    %c14_122 = arith.constant 14 : index
    %c0_123 = arith.constant 0 : index
    %147 = tpu.strided_load %arg27[%c14_122, %c0_123] {strides = array<i32: 2, 1>} : memref<112x32xf32, #tpu.memory_space<vmem>>, vector<2x32xf32>
    %c43 = arith.constant 43 : index
    %c0_124 = arith.constant 0 : index
    %148 = tpu.strided_load %arg27[%c43, %c0_124] {strides = array<i32: 2, 1>} : memref<112x32xf32, #tpu.memory_space<vmem>>, vector<2x32xf32>
    %149 = arith.addf %147, %148 : vector<2x32xf32>
    %c72 = arith.constant 72 : index
    %c0_125 = arith.constant 0 : index
    %150 = tpu.strided_load %arg27[%c72, %c0_125] {strides = array<i32: 2, 1>} : memref<112x32xf32, #tpu.memory_space<vmem>>, vector<2x32xf32>
    %151 = arith.addf %149, %150 : vector<2x32xf32>
    %c101 = arith.constant 101 : index
    %c0_126 = arith.constant 0 : index
    %152 = tpu.strided_load %arg27[%c101, %c0_126] {strides = array<i32: 2, 1>} : memref<112x32xf32, #tpu.memory_space<vmem>>, vector<2x32xf32>
    %153 = arith.addf %151, %152 : vector<2x32xf32>
    %c0_127 = arith.constant 0 : index
    %c0_128 = arith.constant 0 : index
    %154 = vector.load %arg10[%c0_127, %c0_128] : memref<1x32xf32, #tpu.memory_space<vmem>>, vector<1x32xf32>
    %155 = vector.broadcast %154 : vector<1x32xf32> to vector<2x32xf32>
    %156 = arith.mulf %153, %155 : vector<2x32xf32>
    %c0_129 = arith.constant 0 : index
    %c0_130 = arith.constant 0 : index
    %157 = vector.load %arg11[%c0_129, %c0_130] : memref<1x32xf32, #tpu.memory_space<vmem>>, vector<1x32xf32>
    %158 = vector.broadcast %157 : vector<1x32xf32> to vector<2x32xf32>
    %159 = arith.addf %156, %158 : vector<2x32xf32>
    %cst_131 = arith.constant 0.000000e+00 : f32
    %160 = vector.broadcast %cst_131 : f32 to vector<2x32xf32>
    %161 = arith.maximumf %159, %160 : vector<2x32xf32>
    %cst_132 = arith.constant dense<0xFF800000> : vector<32xf32>
    %162 = vector.multi_reduction <maximumf>, %161, %cst_132 [0] : vector<2x32xf32> to vector<32xf32>
    %163 = vector.shape_cast %162 : vector<32xf32> to vector<1x32xf32>
    %c2_133 = arith.constant 2 : index
    %c0_134 = arith.constant 0 : index
    %164 = vector.load %arg28[%c2_133, %c0_134] : memref<4x32xf32, #tpu.memory_space<vmem>>, vector<1x32xf32>
    tpu.vector_store %arg28[%c2_133, %c0_134], %163 {strides = array<i32>} : memref<4x32xf32, #tpu.memory_space<vmem>>, vector<1x32xf32>,
    %c21_135 = arith.constant 21 : index
    %c0_136 = arith.constant 0 : index
    %165 = tpu.strided_load %arg27[%c21_135, %c0_136] {strides = array<i32: 2, 1>} : memref<112x32xf32, #tpu.memory_space<vmem>>, vector<2x32xf32>
    %c50 = arith.constant 50 : index
    %c0_137 = arith.constant 0 : index
    %166 = tpu.strided_load %arg27[%c50, %c0_137] {strides = array<i32: 2, 1>} : memref<112x32xf32, #tpu.memory_space<vmem>>, vector<2x32xf32>
    %167 = arith.addf %165, %166 : vector<2x32xf32>
    %c79 = arith.constant 79 : index
    %c0_138 = arith.constant 0 : index
    %168 = tpu.strided_load %arg27[%c79, %c0_138] {strides = array<i32: 2, 1>} : memref<112x32xf32, #tpu.memory_space<vmem>>, vector<2x32xf32>
    %169 = arith.addf %167, %168 : vector<2x32xf32>
    %c108 = arith.constant 108 : index
    %c0_139 = arith.constant 0 : index
    %170 = tpu.strided_load %arg27[%c108, %c0_139] {strides = array<i32: 2, 1>} : memref<112x32xf32, #tpu.memory_space<vmem>>, vector<2x32xf32>
    %171 = arith.addf %169, %170 : vector<2x32xf32>
    %c0_140 = arith.constant 0 : index
    %c0_141 = arith.constant 0 : index
    %172 = vector.load %arg10[%c0_140, %c0_141] : memref<1x32xf32, #tpu.memory_space<vmem>>, vector<1x32xf32>
    %173 = vector.broadcast %172 : vector<1x32xf32> to vector<2x32xf32>
    %174 = arith.mulf %171, %173 : vector<2x32xf32>
    %c0_142 = arith.constant 0 : index
    %c0_143 = arith.constant 0 : index
    %175 = vector.load %arg11[%c0_142, %c0_143] : memref<1x32xf32, #tpu.memory_space<vmem>>, vector<1x32xf32>
    %176 = vector.broadcast %175 : vector<1x32xf32> to vector<2x32xf32>
    %177 = arith.addf %174, %176 : vector<2x32xf32>
    %cst_144 = arith.constant 0.000000e+00 : f32
    %178 = vector.broadcast %cst_144 : f32 to vector<2x32xf32>
    %179 = arith.maximumf %177, %178 : vector<2x32xf32>
    %cst_145 = arith.constant dense<0xFF800000> : vector<32xf32>
    %180 = vector.multi_reduction <maximumf>, %179, %cst_145 [0] : vector<2x32xf32> to vector<32xf32>
    %181 = vector.shape_cast %180 : vector<32xf32> to vector<1x32xf32>
    %c3_146 = arith.constant 3 : index
    %c0_147 = arith.constant 0 : index
    %182 = vector.load %arg28[%c3_146, %c0_147] : memref<4x32xf32, #tpu.memory_space<vmem>>, vector<1x32xf32>
    tpu.vector_store %arg28[%c3_146, %c0_147], %181 {strides = array<i32>} : memref<4x32xf32, #tpu.memory_space<vmem>>, vector<1x32xf32>,
    %c0_148 = arith.constant 0 : index
    %c0_149 = arith.constant 0 : index
    %183 = vector.load %arg28[%c0_148, %c0_149] : memref<4x32xf32, #tpu.memory_space<vmem>>, vector<4x32xf32>
    %c0_150 = arith.constant 0 : index
    %c0_151 = arith.constant 0 : index
    %184 = vector.load %arg12[%c0_150, %c0_151] : memref<4x32xf32, #tpu.memory_space<vmem>>, vector<4x32xf32>
    %185 = arith.addf %183, %184 : vector<4x32xf32>
    %c0_152 = arith.constant 0 : index
    %c0_153 = arith.constant 0 : index
    %186 = vector.load %arg13[%c0_152, %c0_153] : memref<32x32xf32, #tpu.memory_space<vmem>>, vector<32x32xf32>
    %cst_154 = arith.constant dense<0.000000e+00> : vector<4x32xf32>
    %187 = tpu.matmul %185, %186, %cst_154 {dimension_numbers = #tpu.dot_dimension_numbers<[1], [0], [0], [1], [0, 0, 1, 1], [], []>} : vector<4x32xf32>, vector<32x32xf32>, vector<4x32xf32> -> vector<4x32xf32>
    %c0_155 = arith.constant 0 : index
    %c0_156 = arith.constant 0 : index
    %188 = vector.load %arg14[%c0_155, %c0_156] : memref<1x32xf32, #tpu.memory_space<vmem>>, vector<1x32xf32>
    %189 = vector.broadcast %188 : vector<1x32xf32> to vector<4x32xf32>
    %190 = arith.addf %187, %189 : vector<4x32xf32>
    %cst_157 = arith.constant 0.000000e+00 : f32
    %191 = vector.broadcast %cst_157 : f32 to vector<4x32xf32>
    %192 = arith.maximumf %190, %191 : vector<4x32xf32>
    %c0_158 = arith.constant 0 : index
    %c0_159 = arith.constant 0 : index
    %193 = vector.load %arg15[%c0_158, %c0_159] : memref<32x32xf32, #tpu.memory_space<vmem>>, vector<32x32xf32>
    %cst_160 = arith.constant dense<0.000000e+00> : vector<4x32xf32>
    %194 = tpu.matmul %192, %193, %cst_160 {dimension_numbers = #tpu.dot_dimension_numbers<[1], [0], [0], [1], [0, 0, 1, 1], [], []>} : vector<4x32xf32>, vector<32x32xf32>, vector<4x32xf32> -> vector<4x32xf32>
    %c0_161 = arith.constant 0 : index
    %c0_162 = arith.constant 0 : index
    %195 = vector.load %arg16[%c0_161, %c0_162] : memref<1x32xf32, #tpu.memory_space<vmem>>, vector<1x32xf32>
    %196 = vector.broadcast %195 : vector<1x32xf32> to vector<4x32xf32>
    %197 = arith.addf %194, %196 : vector<4x32xf32>
    %198 = math.tanh %197 : vector<4x32xf32>
    %c0_163 = arith.constant 0 : index
    %c0_164 = arith.constant 0 : index
    %199 = vector.load %arg17[%c0_163, %c0_164] : memref<32x1xf32, #tpu.memory_space<vmem>>, vector<32x1xf32>
    %cst_165 = arith.constant dense<0.000000e+00> : vector<4x1xf32>
    %200 = tpu.matmul %198, %199, %cst_165 {dimension_numbers = #tpu.dot_dimension_numbers<[1], [0], [0], [1], [0, 0, 1, 1], [], []>} : vector<4x32xf32>, vector<32x1xf32>, vector<4x1xf32> -> vector<4x1xf32>
    %c0_166 = arith.constant 0 : index
    %c0_167 = arith.constant 0 : index
    %201 = vector.load %arg18[%c0_166, %c0_167] : memref<1x1xf32, #tpu.memory_space<vmem>>, vector<1x1xf32>
    %202 = vector.broadcast %201 : vector<1x1xf32> to vector<4x1xf32>
    %203 = arith.addf %200, %202 : vector<4x1xf32>
    %204 = tpu.iota {dimensions = array<i32: 0>} : vector<4x1xi32>
    %205 = arith.index_cast %arg0 : i32 to index
    %206 = memref.load %arg1[%205] : memref<2xi32, #tpu.memory_space<smem>>
    %207 = vector.broadcast %206 : i32 to vector<4x1xi32>
    %208 = arith.cmpi sge, %204, %207 : vector<4x1xi32>
    %cst_168 = arith.constant 0xFF800000 : f32
    %209 = vector.broadcast %cst_168 : f32 to vector<4x1xf32>
    %210 = arith.select %208, %209, %203 : vector<4x1xi1>, vector<4x1xf32>
    %cst_169 = arith.constant dense<0xFF800000> : vector<1xf32>
    %211 = vector.multi_reduction <maximumf>, %210, %cst_169 [0] : vector<4x1xf32> to vector<1xf32>
    %212 = vector.shape_cast %211 : vector<1xf32> to vector<1x1xf32>
    %213 = vector.broadcast %212 : vector<1x1xf32> to vector<4x1xf32>
    %214 = arith.subf %210, %213 : vector<4x1xf32>
    %215 = math.exp %214 : vector<4x1xf32>
    %cst_170 = arith.constant dense<0.000000e+00> : vector<1xf32>
    %216 = vector.multi_reduction <add>, %215, %cst_170 [0] : vector<4x1xf32> to vector<1xf32>
    %217 = vector.shape_cast %216 : vector<1xf32> to vector<1x1xf32>
    %218 = tpu.reciprocal %217 {approx = true} : vector<1x1xf32> -> vector<1x1xf32>
    %219 = vector.broadcast %218 : vector<1x1xf32> to vector<4x1xf32>
    %220 = arith.mulf %215, %219 : vector<4x1xf32>
    %221 = vector.broadcast %220 : vector<4x1xf32> to vector<4x32xf32>
    %222 = arith.mulf %221, %183 : vector<4x32xf32>
    %cst_171 = arith.constant dense<0.000000e+00> : vector<32xf32>
    %223 = vector.multi_reduction <add>, %222, %cst_171 [0] : vector<4x32xf32> to vector<32xf32>
    %224 = vector.shape_cast %223 : vector<32xf32> to vector<1x32xf32>
    %c0_172 = arith.constant 0 : index
    %c0_173 = arith.constant 0 : index
    %225 = vector.load %arg19[%c0_172, %c0_173] : memref<32x128xf32, #tpu.memory_space<vmem>>, vector<32x128xf32>
    %cst_174 = arith.constant dense<0.000000e+00> : vector<1x128xf32>
    %226 = tpu.matmul %224, %225, %cst_174 {dimension_numbers = #tpu.dot_dimension_numbers<[1], [0], [0], [1], [0, 0, 1, 1], [], []>} : vector<1x32xf32>, vector<32x128xf32>, vector<1x128xf32> -> vector<1x128xf32>
    %c0_175 = arith.constant 0 : index
    %c0_176 = arith.constant 0 : index
    %227 = vector.load %arg20[%c0_175, %c0_176] : memref<1x128xf32, #tpu.memory_space<vmem>>, vector<1x128xf32>
    %228 = arith.addf %226, %227 : vector<1x128xf32>
    %cst_177 = arith.constant 0.000000e+00 : f32
    %229 = vector.broadcast %cst_177 : f32 to vector<1x128xf32>
    %230 = arith.maximumf %228, %229 : vector<1x128xf32>
    %c0_178 = arith.constant 0 : index
    %c0_179 = arith.constant 0 : index
    %231 = vector.load %arg21[%c0_178, %c0_179] : memref<128x128xf32, #tpu.memory_space<vmem>>, vector<128x128xf32>
    %cst_180 = arith.constant dense<0.000000e+00> : vector<1x128xf32>
    %232 = tpu.matmul %230, %231, %cst_180 {dimension_numbers = #tpu.dot_dimension_numbers<[1], [0], [0], [1], [0, 0, 1, 1], [], []>} : vector<1x128xf32>, vector<128x128xf32>, vector<1x128xf32> -> vector<1x128xf32>
    %c0_181 = arith.constant 0 : index
    %c0_182 = arith.constant 0 : index
    %233 = vector.load %arg22[%c0_181, %c0_182] : memref<1x128xf32, #tpu.memory_space<vmem>>, vector<1x128xf32>
    %234 = arith.addf %232, %233 : vector<1x128xf32>
    %235 = math.absf %234 : vector<1x128xf32>
    %cst_183 = arith.constant 0.000000e+00 : f32
    %236 = vector.broadcast %cst_183 : f32 to vector<1x128xf32>
    %237 = arith.subf %236, %235 : vector<1x128xf32>
    %238 = math.exp %237 : vector<1x128xf32>
    %cst_184 = arith.constant 0.000000e+00 : f32
    %239 = vector.broadcast %cst_184 : f32 to vector<1x128xf32>
    %240 = arith.cmpf oge, %234, %239 : vector<1x128xf32>
    %cst_185 = arith.constant 1.000000e+00 : f32
    %241 = vector.broadcast %cst_185 : f32 to vector<1x128xf32>
    %242 = arith.select %240, %241, %238 : vector<1x128xi1>, vector<1x128xf32>
    %cst_186 = arith.constant 1.000000e+00 : f32
    %243 = vector.broadcast %cst_186 : f32 to vector<1x128xf32>
    %244 = arith.addf %243, %238 : vector<1x128xf32>
    %245 = tpu.reciprocal %244 {approx = true} : vector<1x128xf32> -> vector<1x128xf32>
    %246 = arith.mulf %242, %245 : vector<1x128xf32>
    %247 = tpu.iota {dimensions = array<i32: 0>} : vector<4x128xi32>
    %248 = tpu.iota {dimensions = array<i32: 1>} : vector<4x128xi32>
    %c2_i32 = arith.constant 2 : i32
    %249 = vector.broadcast %c2_i32 : i32 to vector<4x128xi32>
    %250 = arith.addi %247, %249 : vector<4x128xi32>
    %251 = arith.cmpi eq, %248, %250 : vector<4x128xi32>
    %cst_187 = arith.constant 0.000000e+00 : f32
    %252 = vector.shape_cast %220 : vector<4x1xf32> to vector<4x1xf32>
    %253 = vector.broadcast %252 : vector<4x1xf32> to vector<4x128xf32>
    %254 = vector.broadcast %cst_187 : f32 to vector<4x128xf32>
    %255 = arith.select %251, %253, %254 : vector<4x128xi1>, vector<4x128xf32>
    %cst_188 = arith.constant dense<0.000000e+00> : vector<128xf32>
    %256 = vector.multi_reduction <add>, %255, %cst_188 [0] : vector<4x128xf32> to vector<128xf32>
    %257 = vector.shape_cast %256 : vector<128xf32> to vector<1x128xf32>
    %258 = tpu.iota {dimensions = array<i32: 1>} : vector<1x128xi32>
    %c2_i32_189 = arith.constant 2 : i32
    %259 = vector.broadcast %c2_i32_189 : i32 to vector<1x128xi32>
    %260 = arith.cmpi slt, %258, %259 : vector<1x128xi32>
    %261 = arith.select %260, %246, %257 : vector<1x128xi1>, vector<1x128xf32>
    %c0_190 = arith.constant 0 : index
    %c0_191 = arith.constant 0 : index
    %c0_192 = arith.constant 0 : index
    %262 = vector.load %arg23[%c0_190, %c0_191, %c0_192] : memref<1x1x128xf32, #tpu.memory_space<vmem>>, vector<1x1x128xf32>
    %263 = vector.shape_cast %262 : vector<1x1x128xf32> to vector<1x128xf32>
    %264 = vector.shape_cast %261 : vector<1x128xf32> to vector<1x1x128xf32>
    tpu.vector_store %arg23[%c0_190, %c0_191, %c0_192], %264 {strides = array<i32>} : memref<1x1x128xf32, #tpu.memory_space<vmem>>, vector<1x1x128xf32>,
    return
  }
  func.func @transform_0(%arg0: i32, %arg1: memref<2xi32, #tpu.memory_space<smem>>) -> (i32, i32, i32) {
    %c0_i32 = arith.constant 0 : i32
    %c0_i32_0 = arith.constant 0 : i32
    %c0_i32_1 = arith.constant 0 : i32
    return %arg0, %c0_i32, %c0_i32_0 : i32, i32, i32
  }
  func.func @transform_1(%arg0: i32, %arg1: memref<2xi32, #tpu.memory_space<smem>>) -> (i32, i32) {
    %c0_i32 = arith.constant 0 : i32
    %c0_i32_0 = arith.constant 0 : i32
    %c0_i32_1 = arith.constant 0 : i32
    return %c0_i32, %c0_i32_0 : i32, i32
  }
  func.func @transform_2(%arg0: i32, %arg1: memref<2xi32, #tpu.memory_space<smem>>) -> (i32, i32) {
    %c0_i32 = arith.constant 0 : i32
    %c0_i32_0 = arith.constant 0 : i32
    %c0_i32_1 = arith.constant 0 : i32
    return %c0_i32, %c0_i32_0 : i32, i32
  }
  func.func @transform_3(%arg0: i32, %arg1: memref<2xi32, #tpu.memory_space<smem>>) -> (i32, i32) {
    %c0_i32 = arith.constant 0 : i32
    %c0_i32_0 = arith.constant 0 : i32
    %c0_i32_1 = arith.constant 0 : i32
    return %c0_i32, %c0_i32_0 : i32, i32
  }
  func.func @transform_4(%arg0: i32, %arg1: memref<2xi32, #tpu.memory_space<smem>>) -> (i32, i32, i32) {
    %c0_i32 = arith.constant 0 : i32
    %c0_i32_0 = arith.constant 0 : i32
    %c0_i32_1 = arith.constant 0 : i32
    %c0_i32_2 = arith.constant 0 : i32
    return %c0_i32, %c0_i32_0, %c0_i32_1 : i32, i32, i32
  }
  func.func @transform_5(%arg0: i32, %arg1: memref<2xi32, #tpu.memory_space<smem>>) -> (i32, i32) {
    %c0_i32 = arith.constant 0 : i32
    %c0_i32_0 = arith.constant 0 : i32
    %c0_i32_1 = arith.constant 0 : i32
    return %c0_i32, %c0_i32_0 : i32, i32
  }
  func.func @transform_6(%arg0: i32, %arg1: memref<2xi32, #tpu.memory_space<smem>>) -> (i32, i32) {
    %c0_i32 = arith.constant 0 : i32
    %c0_i32_0 = arith.constant 0 : i32
    %c0_i32_1 = arith.constant 0 : i32
    return %c0_i32, %c0_i32_0 : i32, i32
  }
  func.func @transform_7(%arg0: i32, %arg1: memref<2xi32, #tpu.memory_space<smem>>) -> (i32, i32, i32) {
    %c0_i32 = arith.constant 0 : i32
    %c0_i32_0 = arith.constant 0 : i32
    %c0_i32_1 = arith.constant 0 : i32
    %c0_i32_2 = arith.constant 0 : i32
    return %c0_i32, %c0_i32_0, %c0_i32_1 : i32, i32, i32
  }
  func.func @transform_8(%arg0: i32, %arg1: memref<2xi32, #tpu.memory_space<smem>>) -> (i32, i32) {
    %c0_i32 = arith.constant 0 : i32
    %c0_i32_0 = arith.constant 0 : i32
    %c0_i32_1 = arith.constant 0 : i32
    return %c0_i32, %c0_i32_0 : i32, i32
  }
  func.func @transform_9(%arg0: i32, %arg1: memref<2xi32, #tpu.memory_space<smem>>) -> (i32, i32) {
    %c0_i32 = arith.constant 0 : i32
    %c0_i32_0 = arith.constant 0 : i32
    %c0_i32_1 = arith.constant 0 : i32
    return %c0_i32, %c0_i32_0 : i32, i32
  }
  func.func @transform_10(%arg0: i32, %arg1: memref<2xi32, #tpu.memory_space<smem>>) -> (i32, i32) {
    %c0_i32 = arith.constant 0 : i32
    %c0_i32_0 = arith.constant 0 : i32
    %c0_i32_1 = arith.constant 0 : i32
    return %c0_i32, %c0_i32_0 : i32, i32
  }
  func.func @transform_11(%arg0: i32, %arg1: memref<2xi32, #tpu.memory_space<smem>>) -> (i32, i32) {
    %c0_i32 = arith.constant 0 : i32
    %c0_i32_0 = arith.constant 0 : i32
    %c0_i32_1 = arith.constant 0 : i32
    return %c0_i32, %c0_i32_0 : i32, i32
  }
  func.func @transform_12(%arg0: i32, %arg1: memref<2xi32, #tpu.memory_space<smem>>) -> (i32, i32) {
    %c0_i32 = arith.constant 0 : i32
    %c0_i32_0 = arith.constant 0 : i32
    %c0_i32_1 = arith.constant 0 : i32
    return %c0_i32, %c0_i32_0 : i32, i32
  }
  func.func @transform_13(%arg0: i32, %arg1: memref<2xi32, #tpu.memory_space<smem>>) -> (i32, i32) {
    %c0_i32 = arith.constant 0 : i32
    %c0_i32_0 = arith.constant 0 : i32
    %c0_i32_1 = arith.constant 0 : i32
    return %c0_i32, %c0_i32_0 : i32, i32
  }
  func.func @transform_14(%arg0: i32, %arg1: memref<2xi32, #tpu.memory_space<smem>>) -> (i32, i32) {
    %c0_i32 = arith.constant 0 : i32
    %c0_i32_0 = arith.constant 0 : i32
    %c0_i32_1 = arith.constant 0 : i32
    return %c0_i32, %c0_i32_0 : i32, i32
  }
  func.func @transform_15(%arg0: i32, %arg1: memref<2xi32, #tpu.memory_space<smem>>) -> (i32, i32) {
    %c0_i32 = arith.constant 0 : i32
    %c0_i32_0 = arith.constant 0 : i32
    %c0_i32_1 = arith.constant 0 : i32
    return %c0_i32, %c0_i32_0 : i32, i32
  }
  func.func @transform_16(%arg0: i32, %arg1: memref<2xi32, #tpu.memory_space<smem>>) -> (i32, i32) {
    %c0_i32 = arith.constant 0 : i32
    %c0_i32_0 = arith.constant 0 : i32
    %c0_i32_1 = arith.constant 0 : i32
    return %c0_i32, %c0_i32_0 : i32, i32
  }
  func.func @transform_17(%arg0: i32, %arg1: memref<2xi32, #tpu.memory_space<smem>>) -> (i32, i32) {
    %c0_i32 = arith.constant 0 : i32
    %c0_i32_0 = arith.constant 0 : i32
    %c0_i32_1 = arith.constant 0 : i32
    return %c0_i32, %c0_i32_0 : i32, i32
  }
  func.func @transform_18(%arg0: i32, %arg1: memref<2xi32, #tpu.memory_space<smem>>) -> (i32, i32) {
    %c0_i32 = arith.constant 0 : i32
    %c0_i32_0 = arith.constant 0 : i32
    %c0_i32_1 = arith.constant 0 : i32
    return %c0_i32, %c0_i32_0 : i32, i32
  }
  func.func @transform_19(%arg0: i32, %arg1: memref<2xi32, #tpu.memory_space<smem>>) -> (i32, i32) {
    %c0_i32 = arith.constant 0 : i32
    %c0_i32_0 = arith.constant 0 : i32
    %c0_i32_1 = arith.constant 0 : i32
    return %c0_i32, %c0_i32_0 : i32, i32
  }
  func.func @transform_20(%arg0: i32, %arg1: memref<2xi32, #tpu.memory_space<smem>>) -> (i32, i32) {
    %c0_i32 = arith.constant 0 : i32
    %c0_i32_0 = arith.constant 0 : i32
    %c0_i32_1 = arith.constant 0 : i32
    return %c0_i32, %c0_i32_0 : i32, i32
  }
  func.func @transform_21(%arg0: i32, %arg1: memref<2xi32, #tpu.memory_space<smem>>) -> (i32, i32, i32) {
    %c0_i32 = arith.constant 0 : i32
    %c0_i32_0 = arith.constant 0 : i32
    %c0_i32_1 = arith.constant 0 : i32
    return %arg0, %c0_i32, %c0_i32_0 : i32, i32, i32
  }
}

</mosaic_0001>

<llo_original>
// kernel: tpu_custom_call.1
$region0: #{tpu_custom_call.1}
  #allocation0 [shape = 'u32[]', space=smem, size = 0x4, offset = 0x4, fixed_abs, tag = 'smem constant byte address 0x4 - core index']
  #allocation1 [shape = 'u32[144,128]{1,0:T(1,128)}', space=vmem, size = 0x12000, scoped, tag = 'internal scratch']
  #allocation2 [shape = 'f32[68,8]{1,0:T(8,128)}', space=vmem, size = 0x9000, scoped, tag = 'scratch operand']
  #allocation3 [shape = 'f32[272,16]{1,0:T(8,128)}', space=vmem, size = 0x22000, scoped, tag = 'scratch operand']
  #allocation4 [shape = 'f32[28,16]{1,0:T(8,128)}', space=vmem, size = 0x4000, scoped, tag = 'scratch operand']
  #allocation5 [shape = 'f32[112,32]{1,0:T(8,128)}', space=vmem, size = 0xe000, scoped, tag = 'scratch operand']
  #allocation6 [shape = 'f32[4,32]{1,0:T(4,128)}', space=vmem, size = 0x800, scoped, tag = 'scratch operand']
  #allocation7 [shape = 's32[1]{0}', space=sflag, size = 0x4, scoped, tag = 'scoped memory for tpu_custom_call.1']
  #allocation8 [shape = 'u8[512]{0}', space=smem, size = 0x200, scoped, tag = 'prefetched SMEM operand 0']
  #allocation9 [shape = 'f32[1,1]{1,0:T(1,128)S(1)}', space=vmem, size = 0x200, scoped, tag = 'scoped memory for tpu_custom_call.1']
  %s0 = inlined_call_operand.vmem [shape: s32[2], index: 0, kind: input, shape index: {}]
  %s1 = inlined_call_operand.vmem [shape: f32[2,68,384], index: 1, kind: input, shape index: {}]
  %s2 = inlined_call_operand.vmem [shape: f32[384,8], index: 2, kind: input, shape index: {}]
  %s3 = inlined_call_operand.vmem [shape: f32[1,8], index: 3, kind: input, shape index: {}]
  %s4 = inlined_call_operand.vmem [shape: f32[1,8], index: 4, kind: input, shape index: {}]
  %s5 = inlined_call_operand.vmem [shape: f32[4,8,16], index: 5, kind: input, shape index: {}]
  %s6 = inlined_call_operand.vmem [shape: f32[1,16], index: 6, kind: input, shape index: {}]
  %s7 = inlined_call_operand.vmem [shape: f32[1,16], index: 7, kind: input, shape index: {}]
  %s8 = inlined_call_operand.vmem [shape: f32[4,16,32], index: 8, kind: input, shape index: {}]
  %s9 = inlined_call_operand.vmem [shape: f32[1,32], index: 9, kind: input, shape index: {}]
  %s10 = inlined_call_operand.vmem [shape: f32[1,32], index: 10, kind: input, shape index: {}]
  %s11 = inlined_call_operand.vmem [shape: f32[4,32], index: 11, kind: input, shape index: {}]
  %s12 = inlined_call_operand.vmem [shape: f32[32,32], index: 12, kind: input, shape index: {}]
  %s13 = inlined_call_operand.vmem [shape: f32[1,32], index: 13, kind: input, shape index: {}]
  %s14 = inlined_call_operand.vmem [shape: f32[32,32], index: 14, kind: input, shape index: {}]
  %s15 = inlined_call_operand.vmem [shape: f32[1,32], index: 15, kind: input, shape index: {}]
  %s16 = inlined_call_operand.vmem [shape: f32[32,1], index: 16, kind: input, shape index: {}]
  %s17 = inlined_call_operand.<no memory space> [shape: f32[1,1], index: 17, kind: input, shape index: {}]
  %s18 = inlined_call_operand.vmem [shape: f32[32,128], index: 18, kind: input, shape index: {}]
  %s19 = inlined_call_operand.vmem [shape: f32[1,128], index: 19, kind: input, shape index: {}]
  %s20 = inlined_call_operand.vmem [shape: f32[128,128], index: 20, kind: input, shape index: {}]
  %s21 = inlined_call_operand.vmem [shape: f32[1,128], index: 21, kind: input, shape index: {}]
  %s22 = inlined_call_operand.hbm [shape: f32[2,1,128], index: 22, kind: output, shape index: {}]
  %s23 = sld [smem:[#allocation0]]
  $region117: #{tpu_custom_call.1} parent=0
    _
  %s25 = ssub.s32 1, %s23
  %s26 = scalar_select 0, %s25, %s23
  %s27 = sshll.u32 %s0, 4
  %s28 = int_to_ptr.vmem [resolvable:$true] %s27
  %30 = dma.vmem_to_smem %s28, 16, [#allocation8], [#allocation7]
  %v31 = vstv %s17
  %32 = vst [vmem:[#allocation9] sm:$0x1] %v31
  %33 = dma.done [#allocation7], 16
  %34 = sfence
  $region1: #{tpu_custom_call.1} parent=0
    #allocation10 [shape = 'u8[1024]{0}', space=vmem, size = 0x400, scoped, tag = 'output window, operand 0']
    #allocation11 [shape = 's32[2]{0}', space=sflag, size = 0x8, scoped, tag = 'scoped memory for tpu_custom_call.1']
    %35 = vsyncpa [#allocation11], 0
    %s36 = scalar_lea.sflag [#allocation11], 1
    %37 = vsyncpa %s36, 0
    loop: start=0, step=1, limit=4
    $region2: #{tpu_custom_call.1} parent=1 // loop_pre_header
      _
    $region3: #{tpu_custom_call.1} parent=1 // loop_header
      %s39 = sphi 0, %s43
      %p40 = scmp.ge.s32.totalorder %s39, 4
      %s49 = sphi 0, %s51
      %s52 = sphi 0, %s49
      %s53 = sphi 0, %s52
      %s69 = sphi 0, %s53
      %s73 = sphi 0, %s73
      %s75 = sphi 0, %s73
      %s76 = sphi 0, %s75
      %s90 = sphi 0, %s76
      %s94 = sphi 0, %s94
      %s96 = sphi 0, %s94
      %s97 = sphi 0, %s96
      %s111 = sphi 0, %s97
      %s115 = sphi 0, %s115
      %s117 = sphi 0, %s115
      %s118 = sphi 0, %s117
      %s132 = sphi 0, %s118
      %s136 = sphi 0, %s136
      %s138 = sphi 0, %s136
      %s139 = sphi 0, %s138
      %s153 = sphi 0, %s139
      %s157 = sphi 0, %s157
      %s159 = sphi 0, %s157
      %s160 = sphi 0, %s159
      %s174 = sphi 0, %s160
      %s178 = sphi 0, %s178
      %s180 = sphi 0, %s178
      %s181 = sphi 0, %s180
      %s195 = sphi 0, %s181
      %s199 = sphi 0, %s199
      %s201 = sphi 0, %s199
      %s202 = sphi 0, %s201
      %s216 = sphi 0, %s202
      %s220 = sphi 0, %s220
      %s222 = sphi 0, %s220
      %s223 = sphi 0, %s222
      %s237 = sphi 0, %s223
      %s241 = sphi 0, %s241
      %s243 = sphi 0, %s241
      %s244 = sphi 0, %s243
      %s258 = sphi 0, %s244
      %s262 = sphi 0, %s262
      %s264 = sphi 0, %s262
      %s265 = sphi 0, %s264
      %s279 = sphi 0, %s265
      %s283 = sphi 0, %s283
      %s285 = sphi 0, %s283
      %s286 = sphi 0, %s285
      %s300 = sphi 0, %s286
      %s304 = sphi 0, %s304
      %s306 = sphi 0, %s304
      %s307 = sphi 0, %s306
      %s321 = sphi 0, %s307
      %s325 = sphi 0, %s325
      %s327 = sphi 0, %s325
      %s328 = sphi 0, %s327
      %s342 = sphi 0, %s328
      %s346 = sphi 0, %s346
      %s348 = sphi 0, %s346
      %s349 = sphi 0, %s348
      %s363 = sphi 0, %s349
      %s367 = sphi 0, %s367
      %s369 = sphi 0, %s367
      %s370 = sphi 0, %s369
      %s384 = sphi 0, %s370
      %s388 = sphi 0, %s388
      %s390 = sphi 0, %s388
      %s391 = sphi 0, %s390
      %s405 = sphi 0, %s391
      %s409 = sphi 0, %s409
      %s411 = sphi 0, %s409
      %s412 = sphi 0, %s411
      %s426 = sphi 0, %s412
      %s430 = sphi 0, %s430
      %s432 = sphi 0, %s430
      %s433 = sphi 0, %s432
      %s447 = sphi 0, %s433
      %s451 = sphi 0, %s451
      %s453 = sphi 0, %s451
      %s454 = sphi 0, %s453
      %s468 = sphi 0, %s454
      %s472 = sphi 0, %s472
      %s474 = sphi 0, %s472
      %s475 = sphi 0, %s474
      %s489 = sphi 0, %s475
      %s495 = sphi 0, %s497
      %s498 = sphi 0, %s495
      %s499 = sphi 0, %s498
      %s515 = sphi 0, %s499
    $region4: #{tpu_custom_call.1} parent=1 // loop_header_branch
      %42 = sbr.rel (%p40) target = $region8
    $region5: #{tpu_custom_call.1} parent=1 // loop_body
      %s44 = ssub.s32 %s39, 1
      %s45 = ssub.s32 %s39, 2
      %s46 = sadd.s32 %s39, 1
      %s47 = ssub.s32 %s39, %s46
      %p48 = scmp.eq.s32.totalorder %s47, 0
      %s50 = sadd.s32 %s49, 1
      %s51 = scalar_select %p48, %s49, %s50
      %p54 = pneg %p48
      %p55 = scmp.eq.s32.totalorder %s39, 1
      %p56 = por %p54, %p55
      %p57 = scmp.ne.s32.totalorder %s49, %s52
      %p58 = scmp.eq.s32.totalorder %s39, 0
      %p59 = por %p57, %p58
      %p60 = scmp.ne.s32.totalorder %s49, %s52
      %p61 = scmp.eq.s32.totalorder %s44, 1
      %p62 = por %p60, %p61
      %p63 = scmp.ne.s32.totalorder %s52, %s53
      %p64 = scmp.eq.s32.totalorder %s44, 0
      %p65 = por %p63, %p64
      %p66 = scmp.ne.s32.totalorder %s52, %s53
      %p67 = scmp.eq.s32.totalorder %s45, 1
      %p68 = por %p66, %p67
      %p70 = scmp.ne.s32.totalorder %s53, %s69
      %p71 = scmp.eq.s32.totalorder %s45, 0
      %p72 = por %p70, %p71
      %s74 = sadd.s32 %s73, 1
      %p77 = scmp.eq.s32.totalorder %s39, 1
      %p78 = scmp.ne.s32.totalorder %s73, %s75
      %p79 = scmp.eq.s32.totalorder %s39, 0
      %p80 = por %p78, %p79
      %p81 = scmp.ne.s32.totalorder %s73, %s75
      %p82 = scmp.eq.s32.totalorder %s44, 1
      %p83 = por %p81, %p82
      %p84 = scmp.ne.s32.totalorder %s75, %s76
      %p85 = scmp.eq.s32.totalorder %s44, 0
      %p86 = por %p84, %p85
      %p87 = scmp.ne.s32.totalorder %s75, %s76
      %p88 = scmp.eq.s32.totalorder %s45, 1
      %p89 = por %p87, %p88
      %p91 = scmp.ne.s32.totalorder %s76, %s90
      %p92 = scmp.eq.s32.totalorder %s45, 0
      %p93 = por %p91, %p92
      %s95 = sadd.s32 %s94, 1
      %p98 = scmp.eq.s32.totalorder %s39, 1
      %p99 = scmp.ne.s32.totalorder %s94, %s96
      %p100 = scmp.eq.s32.totalorder %s39, 0
      %p101 = por %p99, %p100
      %p102 = scmp.ne.s32.totalorder %s94, %s96
      %p103 = scmp.eq.s32.totalorder %s44, 1
      %p104 = por %p102, %p103
      %p105 = scmp.ne.s32.totalorder %s96, %s97
      %p106 = scmp.eq.s32.totalorder %s44, 0
      %p107 = por %p105, %p106
      %p108 = scmp.ne.s32.totalorder %s96, %s97
      %p109 = scmp.eq.s32.totalorder %s45, 1
      %p110 = por %p108, %p109
      %p112 = scmp.ne.s32.totalorder %s97, %s111
      %p113 = scmp.eq.s32.totalorder %s45, 0
      %p114 = por %p112, %p113
      %s116 = sadd.s32 %s115, 1
      %p119 = scmp.eq.s32.totalorder %s39, 1
      %p120 = scmp.ne.s32.totalorder %s115, %s117
      %p121 = scmp.eq.s32.totalorder %s39, 0
      %p122 = por %p120, %p121
      %p123 = scmp.ne.s32.totalorder %s115, %s117
      %p124 = scmp.eq.s32.totalorder %s44, 1
      %p125 = por %p123, %p124
      %p126 = scmp.ne.s32.totalorder %s117, %s118
      %p127 = scmp.eq.s32.totalorder %s44, 0
      %p128 = por %p126, %p127
      %p129 = scmp.ne.s32.totalorder %s117, %s118
      %p130 = scmp.eq.s32.totalorder %s45, 1
      %p131 = por %p129, %p130
      %p133 = scmp.ne.s32.totalorder %s118, %s132
      %p134 = scmp.eq.s32.totalorder %s45, 0
      %p135 = por %p133, %p134
      %s137 = sadd.s32 %s136, 1
      %p140 = scmp.eq.s32.totalorder %s39, 1
      %p141 = scmp.ne.s32.totalorder %s136, %s138
      %p142 = scmp.eq.s32.totalorder %s39, 0
      %p143 = por %p141, %p142
      %p144 = scmp.ne.s32.totalorder %s136, %s138
      %p145 = scmp.eq.s32.totalorder %s44, 1
      %p146 = por %p144, %p145
      %p147 = scmp.ne.s32.totalorder %s138, %s139
      %p148 = scmp.eq.s32.totalorder %s44, 0
      %p149 = por %p147, %p148
      %p150 = scmp.ne.s32.totalorder %s138, %s139
      %p151 = scmp.eq.s32.totalorder %s45, 1
      %p152 = por %p150, %p151
      %p154 = scmp.ne.s32.totalorder %s139, %s153
      %p155 = scmp.eq.s32.totalorder %s45, 0
      %p156 = por %p154, %p155
      %s158 = sadd.s32 %s157, 1
      %p161 = scmp.eq.s32.totalorder %s39, 1
      %p162 = scmp.ne.s32.totalorder %s157, %s159
      %p163 = scmp.eq.s32.totalorder %s39, 0
      %p164 = por %p162, %p163
      %p165 = scmp.ne.s32.totalorder %s157, %s159
      %p166 = scmp.eq.s32.totalorder %s44, 1
      %p167 = por %p165, %p166
      %p168 = scmp.ne.s32.totalorder %s159, %s160
      %p169 = scmp.eq.s32.totalorder %s44, 0
      %p170 = por %p168, %p169
      %p171 = scmp.ne.s32.totalorder %s159, %s160
      %p172 = scmp.eq.s32.totalorder %s45, 1
      %p173 = por %p171, %p172
      %p175 = scmp.ne.s32.totalorder %s160, %s174
      %p176 = scmp.eq.s32.totalorder %s45, 0
      %p177 = por %p175, %p176
      %s179 = sadd.s32 %s178, 1
      %p182 = scmp.eq.s32.totalorder %s39, 1
      %p183 = scmp.ne.s32.totalorder %s178, %s180
      %p184 = scmp.eq.s32.totalorder %s39, 0
      %p185 = por %p183, %p184
      %p186 = scmp.ne.s32.totalorder %s178, %s180
      %p187 = scmp.eq.s32.totalorder %s44, 1
      %p188 = por %p186, %p187
      %p189 = scmp.ne.s32.totalorder %s180, %s181
      %p190 = scmp.eq.s32.totalorder %s44, 0
      %p191 = por %p189, %p190
      %p192 = scmp.ne.s32.totalorder %s180, %s181
      %p193 = scmp.eq.s32.totalorder %s45, 1
      %p194 = por %p192, %p193
      %p196 = scmp.ne.s32.totalorder %s181, %s195
      %p197 = scmp.eq.s32.totalorder %s45, 0
      %p198 = por %p196, %p197
      %s200 = sadd.s32 %s199, 1
      %p203 = scmp.eq.s32.totalorder %s39, 1
      %p204 = scmp.ne.s32.totalorder %s199, %s201
      %p205 = scmp.eq.s32.totalorder %s39, 0
      %p206 = por %p204, %p205
      %p207 = scmp.ne.s32.totalorder %s199, %s201
      %p208 = scmp.eq.s32.totalorder %s44, 1
      %p209 = por %p207, %p208
      %p210 = scmp.ne.s32.totalorder %s201, %s202
      %p211 = scmp.eq.s32.totalorder %s44, 0
      %p212 = por %p210, %p211
      %p213 = scmp.ne.s32.totalorder %s201, %s202
      %p214 = scmp.eq.s32.totalorder %s45, 1
      %p215 = por %p213, %p214
      %p217 = scmp.ne.s32.totalorder %s202, %s216
      %p218 = scmp.eq.s32.totalorder %s45, 0
      %p219 = por %p217, %p218
      %s221 = sadd.s32 %s220, 1
      %p224 = scmp.eq.s32.totalorder %s39, 1
      %p225 = scmp.ne.s32.totalorder %s220, %s222
      %p226 = scmp.eq.s32.totalorder %s39, 0
      %p227 = por %p225, %p226
      %p228 = scmp.ne.s32.totalorder %s220, %s222
      %p229 = scmp.eq.s32.totalorder %s44, 1
      %p230 = por %p228, %p229
      %p231 = scmp.ne.s32.totalorder %s222, %s223
      %p232 = scmp.eq.s32.totalorder %s44, 0
      %p233 = por %p231, %p232
      %p234 = scmp.ne.s32.totalorder %s222, %s223
      %p235 = scmp.eq.s32.totalorder %s45, 1
      %p236 = por %p234, %p235
      %p238 = scmp.ne.s32.totalorder %s223, %s237
      %p239 = scmp.eq.s32.totalorder %s45, 0
      %p240 = por %p238, %p239
      %s242 = sadd.s32 %s241, 1
      %p245 = scmp.eq.s32.totalorder %s39, 1
      %p246 = scmp.ne.s32.totalorder %s241, %s243
      %p247 = scmp.eq.s32.totalorder %s39, 0
      %p248 = por %p246, %p247
      %p249 = scmp.ne.s32.totalorder %s241, %s243
      %p250 = scmp.eq.s32.totalorder %s44, 1
      %p251 = por %p249, %p250
      %p252 = scmp.ne.s32.totalorder %s243, %s244
      %p253 = scmp.eq.s32.totalorder %s44, 0
      %p254 = por %p252, %p253
      %p255 = scmp.ne.s32.totalorder %s243, %s244
      %p256 = scmp.eq.s32.totalorder %s45, 1
      %p257 = por %p255, %p256
      %p259 = scmp.ne.s32.totalorder %s244, %s258
      %p260 = scmp.eq.s32.totalorder %s45, 0
      %p261 = por %p259, %p260
      %s263 = sadd.s32 %s262, 1
      %p266 = scmp.eq.s32.totalorder %s39, 1
      %p267 = scmp.ne.s32.totalorder %s262, %s264
      %p268 = scmp.eq.s32.totalorder %s39, 0
      %p269 = por %p267, %p268
      %p270 = scmp.ne.s32.totalorder %s262, %s264
      %p271 = scmp.eq.s32.totalorder %s44, 1
      %p272 = por %p270, %p271
      %p273 = scmp.ne.s32.totalorder %s264, %s265
      %p274 = scmp.eq.s32.totalorder %s44, 0
      %p275 = por %p273, %p274
      %p276 = scmp.ne.s32.totalorder %s264, %s265
      %p277 = scmp.eq.s32.totalorder %s45, 1
      %p278 = por %p276, %p277
      %p280 = scmp.ne.s32.totalorder %s265, %s279
      %p281 = scmp.eq.s32.totalorder %s45, 0
      %p282 = por %p280, %p281
      %s284 = sadd.s32 %s283, 1
      %p287 = scmp.eq.s32.totalorder %s39, 1
      %p288 = scmp.ne.s32.totalorder %s283, %s285
      %p289 = scmp.eq.s32.totalorder %s39, 0
      %p290 = por %p288, %p289
      %p291 = scmp.ne.s32.totalorder %s283, %s285
      %p292 = scmp.eq.s32.totalorder %s44, 1
      %p293 = por %p291, %p292
      %p294 = scmp.ne.s32.totalorder %s285, %s286
      %p295 = scmp.eq.s32.totalorder %s44, 0
      %p296 = por %p294, %p295
      %p297 = scmp.ne.s32.totalorder %s285, %s286
      %p298 = scmp.eq.s32.totalorder %s45, 1
      %p299 = por %p297, %p298
      %p301 = scmp.ne.s32.totalorder %s286, %s300
      %p302 = scmp.eq.s32.totalorder %s45, 0
      %p303 = por %p301, %p302
      %s305 = sadd.s32 %s304, 1
      %p308 = scmp.eq.s32.totalorder %s39, 1
      %p309 = scmp.ne.s32.totalorder %s304, %s306
      %p310 = scmp.eq.s32.totalorder %s39, 0
      %p311 = por %p309, %p310
      %p312 = scmp.ne.s32.totalorder %s304, %s306
      %p313 = scmp.eq.s32.totalorder %s44, 1
      %p314 = por %p312, %p313
      %p315 = scmp.ne.s32.totalorder %s306, %s307
      %p316 = scmp.eq.s32.totalorder %s44, 0
      %p317 = por %p315, %p316
      %p318 = scmp.ne.s32.totalorder %s306, %s307
      %p319 = scmp.eq.s32.totalorder %s45, 1
      %p320 = por %p318, %p319
      %p322 = scmp.ne.s32.totalorder %s307, %s321
      %p323 = scmp.eq.s32.totalorder %s45, 0
      %p324 = por %p322, %p323
      %s326 = sadd.s32 %s325, 1
      %p329 = scmp.eq.s32.totalorder %s39, 1
      %p330 = scmp.ne.s32.totalorder %s325, %s327
      %p331 = scmp.eq.s32.totalorder %s39, 0
      %p332 = por %p330, %p331
      %p333 = scmp.ne.s32.totalorder %s325, %s327
      %p334 = scmp.eq.s32.totalorder %s44, 1
      %p335 = por %p333, %p334
      %p336 = scmp.ne.s32.totalorder %s327, %s328
      %p337 = scmp.eq.s32.totalorder %s44, 0
      %p338 = por %p336, %p337
      %p339 = scmp.ne.s32.totalorder %s327, %s328
      %p340 = scmp.eq.s32.totalorder %s45, 1
      %p341 = por %p339, %p340
      %p343 = scmp.ne.s32.totalorder %s328, %s342
      %p344 = scmp.eq.s32.totalorder %s45, 0
      %p345 = por %p343, %p344
      %s347 = sadd.s32 %s346, 1
      %p350 = scmp.eq.s32.totalorder %s39, 1
      %p351 = scmp.ne.s32.totalorder %s346, %s348
      %p352 = scmp.eq.s32.totalorder %s39, 0
      %p353 = por %p351, %p352
      %p354 = scmp.ne.s32.totalorder %s346, %s348
      %p355 = scmp.eq.s32.totalorder %s44, 1
      %p356 = por %p354, %p355
      %p357 = scmp.ne.s32.totalorder %s348, %s349
      %p358 = scmp.eq.s32.totalorder %s44, 0
      %p359 = por %p357, %p358
      %p360 = scmp.ne.s32.totalorder %s348, %s349
      %p361 = scmp.eq.s32.totalorder %s45, 1
      %p362 = por %p360, %p361
      %p364 = scmp.ne.s32.totalorder %s349, %s363
      %p365 = scmp.eq.s32.totalorder %s45, 0
      %p366 = por %p364, %p365
      %s368 = sadd.s32 %s367, 1
      %p371 = scmp.eq.s32.totalorder %s39, 1
      %p372 = scmp.ne.s32.totalorder %s367, %s369
      %p373 = scmp.eq.s32.totalorder %s39, 0
      %p374 = por %p372, %p373
      %p375 = scmp.ne.s32.totalorder %s367, %s369
      %p376 = scmp.eq.s32.totalorder %s44, 1
      %p377 = por %p375, %p376
      %p378 = scmp.ne.s32.totalorder %s369, %s370
      %p379 = scmp.eq.s32.totalorder %s44, 0
      %p380 = por %p378, %p379
      %p381 = scmp.ne.s32.totalorder %s369, %s370
      %p382 = scmp.eq.s32.totalorder %s45, 1
      %p383 = por %p381, %p382
      %p385 = scmp.ne.s32.totalorder %s370, %s384
      %p386 = scmp.eq.s32.totalorder %s45, 0
      %p387 = por %p385, %p386
      %s389 = sadd.s32 %s388, 1
      %p392 = scmp.eq.s32.totalorder %s39, 1
      %p393 = scmp.ne.s32.totalorder %s388, %s390
      %p394 = scmp.eq.s32.totalorder %s39, 0
      %p395 = por %p393, %p394
      %p396 = scmp.ne.s32.totalorder %s388, %s390
      %p397 = scmp.eq.s32.totalorder %s44, 1
      %p398 = por %p396, %p397
      %p399 = scmp.ne.s32.totalorder %s390, %s391
      %p400 = scmp.eq.s32.totalorder %s44, 0
      %p401 = por %p399, %p400
      %p402 = scmp.ne.s32.totalorder %s390, %s391
      %p403 = scmp.eq.s32.totalorder %s45, 1
      %p404 = por %p402, %p403
      %p406 = scmp.ne.s32.totalorder %s391, %s405
      %p407 = scmp.eq.s32.totalorder %s45, 0
      %p408 = por %p406, %p407
      %s410 = sadd.s32 %s409, 1
      %p413 = scmp.eq.s32.totalorder %s39, 1
      %p414 = scmp.ne.s32.totalorder %s409, %s411
      %p415 = scmp.eq.s32.totalorder %s39, 0
      %p416 = por %p414, %p415
      %p417 = scmp.ne.s32.totalorder %s409, %s411
      %p418 = scmp.eq.s32.totalorder %s44, 1
      %p419 = por %p417, %p418
      %p420 = scmp.ne.s32.totalorder %s411, %s412
      %p421 = scmp.eq.s32.totalorder %s44, 0
      %p422 = por %p420, %p421
      %p423 = scmp.ne.s32.totalorder %s411, %s412
      %p424 = scmp.eq.s32.totalorder %s45, 1
      %p425 = por %p423, %p424
      %p427 = scmp.ne.s32.totalorder %s412, %s426
      %p428 = scmp.eq.s32.totalorder %s45, 0
      %p429 = por %p427, %p428
      %s431 = sadd.s32 %s430, 1
      %p434 = scmp.eq.s32.totalorder %s39, 1
      %p435 = scmp.ne.s32.totalorder %s430, %s432
      %p436 = scmp.eq.s32.totalorder %s39, 0
      %p437 = por %p435, %p436
      %p438 = scmp.ne.s32.totalorder %s430, %s432
      %p439 = scmp.eq.s32.totalorder %s44, 1
      %p440 = por %p438, %p439
      %p441 = scmp.ne.s32.totalorder %s432, %s433
      %p442 = scmp.eq.s32.totalorder %s44, 0
      %p443 = por %p441, %p442
      %p444 = scmp.ne.s32.totalorder %s432, %s433
      %p445 = scmp.eq.s32.totalorder %s45, 1
      %p446 = por %p444, %p445
      %p448 = scmp.ne.s32.totalorder %s433, %s447
      %p449 = scmp.eq.s32.totalorder %s45, 0
      %p450 = por %p448, %p449
      %s452 = sadd.s32 %s451, 1
      %p455 = scmp.eq.s32.totalorder %s39, 1
      %p456 = scmp.ne.s32.totalorder %s451, %s453
      %p457 = scmp.eq.s32.totalorder %s39, 0
      %p458 = por %p456, %p457
      %p459 = scmp.ne.s32.totalorder %s451, %s453
      %p460 = scmp.eq.s32.totalorder %s44, 1
      %p461 = por %p459, %p460
      %p462 = scmp.ne.s32.totalorder %s453, %s454
      %p463 = scmp.eq.s32.totalorder %s44, 0
      %p464 = por %p462, %p463
      %p465 = scmp.ne.s32.totalorder %s453, %s454
      %p466 = scmp.eq.s32.totalorder %s45, 1
      %p467 = por %p465, %p466
      %p469 = scmp.ne.s32.totalorder %s454, %s468
      %p470 = scmp.eq.s32.totalorder %s45, 0
      %p471 = por %p469, %p470
      %s473 = sadd.s32 %s472, 1
      %p476 = scmp.eq.s32.totalorder %s39, 1
      %p477 = scmp.ne.s32.totalorder %s472, %s474
      %p478 = scmp.eq.s32.totalorder %s39, 0
      %p479 = por %p477, %p478
      %p480 = scmp.ne.s32.totalorder %s472, %s474
      %p481 = scmp.eq.s32.totalorder %s44, 1
      %p482 = por %p480, %p481
      %p483 = scmp.ne.s32.totalorder %s474, %s475
      %p484 = scmp.eq.s32.totalorder %s44, 0
      %p485 = por %p483, %p484
      %p486 = scmp.ne.s32.totalorder %s474, %s475
      %p487 = scmp.eq.s32.totalorder %s45, 1
      %p488 = por %p486, %p487
      %p490 = scmp.ne.s32.totalorder %s475, %s489
      %p491 = scmp.eq.s32.totalorder %s45, 0
      %p492 = por %p490, %p491
      %s493 = ssub.s32 %s39, %s46
      %p494 = scmp.eq.s32.totalorder %s493, 0
      %s496 = sadd.s32 %s495, 1
      %s497 = scalar_select %p494, %s495, %s496
      %p500 = pneg %p494
      %p501 = scmp.eq.s32.totalorder %s39, 1
      %p502 = por %p500, %p501
      %p503 = scmp.ne.s32.totalorder %s495, %s498
      %p504 = scmp.eq.s32.totalorder %s39, 0
      %p505 = por %p503, %p504
      %p506 = scmp.ne.s32.totalorder %s495, %s498
      %p507 = scmp.eq.s32.totalorder %s44, 1
      %p508 = por %p506, %p507
      %p509 = scmp.ne.s32.totalorder %s498, %s499
      %p510 = scmp.eq.s32.totalorder %s44, 0
      %p511 = por %p509, %p510
      %p512 = scmp.ne.s32.totalorder %s498, %s499
      %p513 = scmp.eq.s32.totalorder %s45, 1
      %p514 = por %p512, %p513
      %p516 = scmp.ne.s32.totalorder %s499, %s515
      %p517 = scmp.eq.s32.totalorder %s45, 0
      %p518 = por %p516, %p517
      %p519 = scmp.le.s32.totalorder 1, %s39
      %p520 = scmp.lt.s32.totalorder %s39, 3
      %p521 = pnand %p519, %p520
      %p522 = pneg %p521
      // Predicated region
      $region9: #{tpu_custom_call.1} parent=5 // pred_check
        _
      $region10: #{tpu_custom_call.1} parent=5 // pred_check_branch
        %524 = sbr.rel (%p521) target = $region12
      $region11: #{tpu_custom_call.1} parent=5 // pred_region
        %s525 = ssub.s32 %s39, 1
        // Predicated region
        $region13: #{tpu_custom_call.1} parent=11 // pred_check
          %p526 = pneg %p86
        $region14: #{tpu_custom_call.1} parent=11 // pred_check_branch
          %528 = sbr.rel (%p526) target = $region16
        $region15: #{tpu_custom_call.1} parent=11 // pred_region
          _
        $region16: #{tpu_custom_call.1} parent=11 // pred_fallthru
          _
        // Predicated region
        $region17: #{tpu_custom_call.1} parent=11 // pred_check
          %p529 = pneg %p107
        $region18: #{tpu_custom_call.1} parent=11 // pred_check_branch
          %531 = sbr.rel (%p529) target = $region20
        $region19: #{tpu_custom_call.1} parent=11 // pred_region
          _
        $region20: #{tpu_custom_call.1} parent=11 // pred_fallthru
          _
        // Predicated region
        $region21: #{tpu_custom_call.1} parent=11 // pred_check
          %p532 = pneg %p128
        $region22: #{tpu_custom_call.1} parent=11 // pred_check_branch
          %534 = sbr.rel (%p532) target = $region24
        $region23: #{tpu_custom_call.1} parent=11 // pred_region
          _
        $region24: #{tpu_custom_call.1} parent=11 // pred_fallthru
          _
        // Predicated region
        $region25: #{tpu_custom_call.1} parent=11 // pred_check
          %p535 = pneg %p149
        $region26: #{tpu_custom_call.1} parent=11 // pred_check_branch
          %537 = sbr.rel (%p535) target = $region28
        $region27: #{tpu_custom_call.1} parent=11 // pred_region
          _
        $region28: #{tpu_custom_call.1} parent=11 // pred_fallthru
          _
        // Predicated region
        $region29: #{tpu_custom_call.1} parent=11 // pred_check
          %p538 = pneg %p170
        $region30: #{tpu_custom_call.1} parent=11 // pred_check_branch
          %540 = sbr.rel (%p538) target = $region32
        $region31: #{tpu_custom_call.1} parent=11 // pred_region
          _
        $region32: #{tpu_custom_call.1} parent=11 // pred_fallthru
          _
        // Predicated region
        $region33: #{tpu_custom_call.1} parent=11 // pred_check
          %p541 = pneg %p191
        $region34: #{tpu_custom_call.1} parent=11 // pred_check_branch
          %543 = sbr.rel (%p541) target = $region36
        $region35: #{tpu_custom_call.1} parent=11 // pred_region
          _
        $region36: #{tpu_custom_call.1} parent=11 // pred_fallthru
          _
        // Predicated region
        $region37: #{tpu_custom_call.1} parent=11 // pred_check
          %p544 = pneg %p212
        $region38: #{tpu_custom_call.1} parent=11 // pred_check_branch
          %546 = sbr.rel (%p544) target = $region40
        $region39: #{tpu_custom_call.1} parent=11 // pred_region
          _
        $region40: #{tpu_custom_call.1} parent=11 // pred_fallthru
          _
        // Predicated region
        $region41: #{tpu_custom_call.1} parent=11 // pred_check
          %p547 = pneg %p233
        $region42: #{tpu_custom_call.1} parent=11 // pred_check_branch
          %549 = sbr.rel (%p547) target = $region44
        $region43: #{tpu_custom_call.1} parent=11 // pred_region
          _
        $region44: #{tpu_custom_call.1} parent=11 // pred_fallthru
          _
        // Predicated region
        $region45: #{tpu_custom_call.1} parent=11 // pred_check
          %p550 = pneg %p254
        $region46: #{tpu_custom_call.1} parent=11 // pred_check_branch
          %552 = sbr.rel (%p550) target = $region48
        $region47: #{tpu_custom_call.1} parent=11 // pred_region
          _
        $region48: #{tpu_custom_call.1} parent=11 // pred_fallthru
          _
        // Predicated region
        $region49: #{tpu_custom_call.1} parent=11 // pred_check
          %p553 = pneg %p275
        $region50: #{tpu_custom_call.1} parent=11 // pred_check_branch
          %555 = sbr.rel (%p553) target = $region52
        $region51: #{tpu_custom_call.1} parent=11 // pred_region
          _
        $region52: #{tpu_custom_call.1} parent=11 // pred_fallthru
          _
        // Predicated region
        $region53: #{tpu_custom_call.1} parent=11 // pred_check
          %p556 = pneg %p296
        $region54: #{tpu_custom_call.1} parent=11 // pred_check_branch
          %558 = sbr.rel (%p556) target = $region56
        $region55: #{tpu_custom_call.1} parent=11 // pred_region
          _
        $region56: #{tpu_custom_call.1} parent=11 // pred_fallthru
          _
        // Predicated region
        $region57: #{tpu_custom_call.1} parent=11 // pred_check
          %p559 = pneg %p317
        $region58: #{tpu_custom_call.1} parent=11 // pred_check_branch
          %561 = sbr.rel (%p559) target = $region60
        $region59: #{tpu_custom_call.1} parent=11 // pred_region
          _
        $region60: #{tpu_custom_call.1} parent=11 // pred_fallthru
          _
        // Predicated region
        $region61: #{tpu_custom_call.1} parent=11 // pred_check
          %p562 = pneg %p338
        $region62: #{tpu_custom_call.1} parent=11 // pred_check_branch
          %564 = sbr.rel (%p562) target = $region64
        $region63: #{tpu_custom_call.1} parent=11 // pred_region
          _
        $region64: #{tpu_custom_call.1} parent=11 // pred_fallthru
          _
        // Predicated region
        $region65: #{tpu_custom_call.1} parent=11 // pred_check
          %p565 = pneg %p359
        $region66: #{tpu_custom_call.1} parent=11 // pred_check_branch
          %567 = sbr.rel (%p565) target = $region68
        $region67: #{tpu_custom_call.1} parent=11 // pred_region
          _
        $region68: #{tpu_custom_call.1} parent=11 // pred_fallthru
          _
        // Predicated region
        $region69: #{tpu_custom_call.1} parent=11 // pred_check
          %p568 = pneg %p380
        $region70: #{tpu_custom_call.1} parent=11 // pred_check_branch
          %570 = sbr.rel (%p568) target = $region72
        $region71: #{tpu_custom_call.1} parent=11 // pred_region
          _
        $region72: #{tpu_custom_call.1} parent=11 // pred_fallthru
          _
        // Predicated region
        $region73: #{tpu_custom_call.1} parent=11 // pred_check
          %p571 = pneg %p401
        $region74: #{tpu_custom_call.1} parent=11 // pred_check_branch
          %573 = sbr.rel (%p571) target = $region76
        $region75: #{tpu_custom_call.1} parent=11 // pred_region
          _
        $region76: #{tpu_custom_call.1} parent=11 // pred_fallthru
          _
        // Predicated region
        $region77: #{tpu_custom_call.1} parent=11 // pred_check
          %p574 = pneg %p422
        $region78: #{tpu_custom_call.1} parent=11 // pred_check_branch
          %576 = sbr.rel (%p574) target = $region80
        $region79: #{tpu_custom_call.1} parent=11 // pred_region
          _
        $region80: #{tpu_custom_call.1} parent=11 // pred_fallthru
          _
        // Predicated region
        $region81: #{tpu_custom_call.1} parent=11 // pred_check
          %p577 = pneg %p443
        $region82: #{tpu_custom_call.1} parent=11 // pred_check_branch
          %579 = sbr.rel (%p577) target = $region84
        $region83: #{tpu_custom_call.1} parent=11 // pred_region
          _
        $region84: #{tpu_custom_call.1} parent=11 // pred_fallthru
          _
        // Predicated region
        $region85: #{tpu_custom_call.1} parent=11 // pred_check
          %p580 = pneg %p464
        $region86: #{tpu_custom_call.1} parent=11 // pred_check_branch
          %582 = sbr.rel (%p580) target = $region88
        $region87: #{tpu_custom_call.1} parent=11 // pred_region
          _
        $region88: #{tpu_custom_call.1} parent=11 // pred_fallthru
          _
        // Predicated region
        $region89: #{tpu_custom_call.1} parent=11 // pred_check
          %p583 = pneg %p485
        $region90: #{tpu_custom_call.1} parent=11 // pred_check_branch
          %585 = sbr.rel (%p583) target = $region92
        $region91: #{tpu_custom_call.1} parent=11 // pred_region
          _
        $region92: #{tpu_custom_call.1} parent=11 // pred_fallthru
          _
      $region12: #{tpu_custom_call.1} parent=5 // pred_fallthru
        _
      %p586 = scmp.lt.s32.totalorder %s39, 2
      // Predicated region
      $region93: #{tpu_custom_call.1} parent=5 // pred_check
        %p587 = pneg %p586
      $region94: #{tpu_custom_call.1} parent=5 // pred_check_branch
        %589 = sbr.rel (%p587) target = $region96
      $region95: #{tpu_custom_call.1} parent=5 // pred_region
        // Predicated region
        $region97: #{tpu_custom_call.1} parent=95 // pred_check
          %p590 = pneg %p59
        $region98: #{tpu_custom_call.1} parent=95 // pred_check_branch
          %592 = sbr.rel (%p590) target = $region100
        $region99: #{tpu_custom_call.1} parent=95 // pred_region
          %p593 = scmp.lt.s32.totalorder %s39, 1
          %s594 = scalar_select %p593, %s39, 1
          %s595 = smul.addr %s594, 27
          %s596 = smul.addr %s595, 8
          %s597 = scalar_lea.vmem %s1, %s596
        $region100: #{tpu_custom_call.1} parent=95 // pred_fallthru
          _
      $region96: #{tpu_custom_call.1} parent=5 // pred_fallthru
        _
      %p598 = scmp.le.s32.totalorder 1, %s39
      %p599 = scmp.lt.s32.totalorder %s39, 3
      %p600 = pnand %p598, %p599
      %p601 = pneg %p600
      // Predicated region
      $region101: #{tpu_custom_call.1} parent=5 // pred_check
        _
      $region102: #{tpu_custom_call.1} parent=5 // pred_check_branch
        %603 = sbr.rel (%p600) target = $region104
      $region103: #{tpu_custom_call.1} parent=5 // pred_region
        %s604 = ssub.s32 %s39, 1
        %p605 = scmp.lt.s32.totalorder %s44, 1
        %s606 = scalar_select %p605, %s44, 1
        %s607 = smul.addr %s606, 27
        %s608 = smul.addr %s607, 8
        %s609 = scalar_lea.vmem %s1, %s608
        %p610 = pneg %p65
        %p611 = pneg %p62
        %p612 = pneg %p86
        %p613 = pneg %p83
        %p614 = pneg %p107
        %p615 = pneg %p104
        %p616 = pneg %p128
        %p617 = pneg %p125
        %p618 = pneg %p149
        %p619 = pneg %p146
        %p620 = pneg %p170
        %p621 = pneg %p167
        %p622 = pneg %p191
        %p623 = pneg %p188
        %p624 = pneg %p212
        %p625 = pneg %p209
        %p626 = pneg %p233
        %p627 = pneg %p230
        %p628 = pneg %p254
        %p629 = pneg %p251
        %p630 = pneg %p275
        %p631 = pneg %p272
        %p632 = pneg %p296
        %p633 = pneg %p293
        %p634 = pneg %p317
        %p635 = pneg %p314
        %p636 = pneg %p338
        %p637 = pneg %p335
        %p638 = pneg %p359
        %p639 = pneg %p356
        %p640 = pneg %p380
        %p641 = pneg %p377
        %p642 = pneg %p401
        %p643 = pneg %p398
        %p644 = pneg %p422
        %p645 = pneg %p419
        %p646 = pneg %p443
        %p647 = pneg %p440
        %p648 = pneg %p464
        %p649 = pneg %p461
        %p650 = pneg %p485
        %p651 = pneg %p482
        %p652 = pneg %p511
        %p653 = pneg %p508
        %s654 = sand.u32 %s498, 1
        %s655 = scalar_lea.sflag [#allocation11], %s654
        %s656 = sand.u32 %s498, 1
        %s657 = scalar_lea.vmem [#allocation10], %s656
        %p658 = scmp.lt.s32.totalorder %s44, 1
        %s659 = scalar_select %p658, %s44, 1
        %s660 = smul.addr %s659, 27
        %s661 = smul.addr %s660, 8
        %s662 = scalar_lea.vmem %s1, %s661
        %v663 = vld [vmem:[%s662] sm:$0xff]
        %v664 = vld [vmem:[%s662 + $0x8] sm:$0xff]
        %v665 = vld [vmem:[%s662 + $0x10] sm:$0xff]
        %v666 = vld [vmem:[%s662 + $0x18] sm:$0xff]
        %v667 = vld [vmem:[%s662 + $0x20] sm:$0xff]
        %v668 = vld [vmem:[%s662 + $0x28] sm:$0xff]
        %v669 = vld [vmem:[%s662 + $0x30] sm:$0xff]
        %v670 = vld [vmem:[%s662 + $0x38] sm:$0xff]
        %v671 = vld [vmem:[%s662 + $0x40] sm:$0xff]
        %v672 = vld [vmem:[%s662 + $0x48] sm:$0xff]
        %v673 = vld [vmem:[%s662 + $0x50] sm:$0xff]
        %v674 = vld [vmem:[%s662 + $0x58] sm:$0xff]
        %v675 = vld [vmem:[%s662 + $0x60] sm:$0xff]
        %v676 = vld [vmem:[%s662 + $0x68] sm:$0xff]
        %v677 = vld [vmem:[%s662 + $0x70] sm:$0xff]
        %v678 = vld [vmem:[%s662 + $0x78] sm:$0xff]
        %v679 = vld [vmem:[%s662 + $0x80] sm:$0xff]
        %v680 = vld [vmem:[%s662 + $0x88] sm:$0xff]
        %v681 = vld [vmem:[%s662 + $0x90] sm:$0xff]
        %v682 = vld [vmem:[%s662 + $0x98] sm:$0xff]
        %v683 = vld [vmem:[%s662 + $0xa0] sm:$0xff]
        %v684 = vld [vmem:[%s662 + $0xa8] sm:$0xff]
        %v685 = vld [vmem:[%s662 + $0xb0] sm:$0xff]
        %v686 = vld [vmem:[%s662 + $0xb8] sm:$0xff]
        %v687 = vld [vmem:[%s662 + $0xc0] sm:$0xf]
        %v688 = vld [vmem:[%s662 + $0xc8] sm:$0xf]
        %v689 = vld [vmem:[%s662 + $0xd0] sm:$0xf]
        %v690 = vld [vmem:[%s2] sm:$0xff]
        %v691 = vld [vmem:[%s2 + $0x8] sm:$0xff]
        %v692 = vld [vmem:[%s2 + $0x10] sm:$0xff]
        %v693 = vld [vmem:[%s2 + $0x18] sm:$0xff]
        %v694 = vld [vmem:[%s2 + $0x20] sm:$0xff]
        %v695 = vld [vmem:[%s2 + $0x28] sm:$0xff]
        %v696 = vld [vmem:[%s2 + $0x30] sm:$0xff]
        %v697 = vld [vmem:[%s2 + $0x38] sm:$0xff]
        %v698 = vld [vmem:[%s2 + $0x40] sm:$0xff]
        %v699 = vld [vmem:[%s2 + $0x48] sm:$0xff]
        %v700 = vld [vmem:[%s2 + $0x50] sm:$0xff]
        %v701 = vld [vmem:[%s2 + $0x58] sm:$0xff]
        %v702 = vld [vmem:[%s2 + $0x60] sm:$0xff]
        %v703 = vld [vmem:[%s2 + $0x68] sm:$0xff]
        %v704 = vld [vmem:[%s2 + $0x70] sm:$0xff]
        %v705 = vld [vmem:[%s2 + $0x78] sm:$0xff]
        %v706 = vld [vmem:[%s2 + $0x80] sm:$0xff]
        %v707 = vld [vmem:[%s2 + $0x88] sm:$0xff]
        %v708 = vld [vmem:[%s2 + $0x90] sm:$0xff]
        %v709 = vld [vmem:[%s2 + $0x98] sm:$0xff]
        %v710 = vld [vmem:[%s2 + $0xa0] sm:$0xff]
        %v711 = vld [vmem:[%s2 + $0xa8] sm:$0xff]
        %v712 = vld [vmem:[%s2 + $0xb0] sm:$0xff]
        %v713 = vld [vmem:[%s2 + $0xb8] sm:$0xff]
        %v714 = vld [vmem:[%s2 + $0xc0] sm:$0xff]
        %v715 = vld [vmem:[%s2 + $0xc8] sm:$0xff]
        %v716 = vld [vmem:[%s2 + $0xd0] sm:$0xff]
        %v717 = vld [vmem:[%s2 + $0xd8] sm:$0xff]
        %v718 = vld [vmem:[%s2 + $0xe0] sm:$0xff]
        %v719 = vld [vmem:[%s2 + $0xe8] sm:$0xff]
        %v720 = vld [vmem:[%s2 + $0xf0] sm:$0xff]
        %v721 = vld [vmem:[%s2 + $0xf8] sm:$0xff]
        %v722 = vld [vmem:[%s2 + $0x100] sm:$0xff]
        %v723 = vld [vmem:[%s2 + $0x108] sm:$0xff]
        %v724 = vld [vmem:[%s2 + $0x110] sm:$0xff]
        %v725 = vld [vmem:[%s2 + $0x118] sm:$0xff]
        %v726 = vld [vmem:[%s2 + $0x120] sm:$0xff]
        %v727 = vld [vmem:[%s2 + $0x128] sm:$0xff]
        %v728 = vld [vmem:[%s2 + $0x130] sm:$0xff]
        %v729 = vld [vmem:[%s2 + $0x138] sm:$0xff]
        %v730 = vld [vmem:[%s2 + $0x140] sm:$0xff]
        %v731 = vld [vmem:[%s2 + $0x148] sm:$0xff]
        %v732 = vld [vmem:[%s2 + $0x150] sm:$0xff]
        %v733 = vld [vmem:[%s2 + $0x158] sm:$0xff]
        %v734 = vld [vmem:[%s2 + $0x160] sm:$0xff]
        %v735 = vld [vmem:[%s2 + $0x168] sm:$0xff]
        %v736 = vld [vmem:[%s2 + $0x170] sm:$0xff]
        %v737 = vld [vmem:[%s2 + $0x178] sm:$0xff]
        %738 = vmatprep.subr.mxu0 0.0
        %739 = vmatpush1.msra.mxu0 %v705
        %740 = vmatprep.subr.mxu0 0.0
        %741 = vmatpush1.msra.mxu0 %v704
        %742 = vmatprep.subr.mxu0 0.0
        %743 = vmatpush1.msra.mxu0 %v703
        %744 = vmatprep.subr.mxu0 0.0
        %745 = vmatpush1.msra.mxu0 %v702
        %746 = vmatprep.subr.mxu0 0.0
        %747 = vmatpush1.msra.mxu0 %v701
        %748 = vmatprep.subr.mxu0 0.0
        %749 = vmatpush1.msra.mxu0 %v700
        %750 = vmatprep.subr.mxu0 0.0
        %751 = vmatpush1.msra.mxu0 %v699
        %752 = vmatprep.subr.mxu0 0.0
        %753 = vmatpush1.msra.mxu0 %v698
        %754 = vmatprep.subr.mxu0 0.0
        %755 = vmatpush1.msra.mxu0 %v697
        %756 = vmatprep.subr.mxu0 0.0
        %757 = vmatpush1.msra.mxu0 %v696
        %758 = vmatprep.subr.mxu0 0.0
        %759 = vmatpush1.msra.mxu0 %v695
        %760 = vmatprep.subr.mxu0 0.0
        %761 = vmatpush1.msra.mxu0 %v694
        %762 = vmatprep.subr.mxu0 0.0
        %763 = vmatpush1.msra.mxu0 %v693
        %764 = vmatprep.subr.mxu0 0.0
        %765 = vmatpush1.msra.mxu0 %v692
        %766 = vmatprep.subr.mxu0 0.0
        %767 = vmatpush1.msra.mxu0 %v691
        %768 = vmatprep.subr.mxu0 0.0
        %769 = vmatpush1.msra.mxu0 %v690
        %770 = vmatprep.subr.mxu0 0.0
        %771 = vmatpush2.msra.mxu0 %v721
        %772 = vmatprep.subr.mxu0 0.0
        %773 = vmatpush2.msra.mxu0 %v720
        %774 = vmatprep.subr.mxu0 0.0
        %775 = vmatpush2.msra.mxu0 %v719
        %776 = vmatprep.subr.mxu0 0.0
        %777 = vmatpush2.msra.mxu0 %v718
        %778 = vmatprep.subr.mxu0 0.0
        %779 = vmatpush2.msra.mxu0 %v717
        %780 = vmatprep.subr.mxu0 0.0
        %781 = vmatpush2.msra.mxu0 %v716
        %782 = vmatprep.subr.mxu0 0.0
        %783 = vmatpush2.msra.mxu0 %v715
        %784 = vmatprep.subr.mxu0 0.0
        %785 = vmatpush2.msra.mxu0 %v714
        %786 = vmatprep.subr.mxu0 0.0
        %787 = vmatpush2.msra.mxu0 %v713
        %788 = vmatprep.subr.mxu0 0.0
        %789 = vmatpush2.msra.mxu0 %v712
        %790 = vmatprep.subr.mxu0 0.0
        %791 = vmatpush2.msra.mxu0 %v711
        %792 = vmatprep.subr.mxu0 0.0
        %793 = vmatpush2.msra.mxu0 %v710
        %794 = vmatprep.subr.mxu0 0.0
        %795 = vmatpush2.msra.mxu0 %v709
        %796 = vmatprep.subr.mxu0 0.0
        %797 = vmatpush2.msra.mxu0 %v708
        %798 = vmatprep.subr.mxu0 0.0
        %799 = vmatpush2.msra.mxu0 %v707
        %800 = vmatprep.subr.mxu0 0.0
        %801 = vmatpush2.msra.mxu0 %v706
        %802 = vmatprep.mubr.f32.mxu0 %v664
        %803 = vmatmul.mubr.f32.gmra.mxu0 %v663
        %v804 = vpop.f32.mrf.mxu0
        %v805 = vadd.f32 0.0, %v804
        %v806 = vpop.f32.mrf.mxu0
        %807 = vmatprep.mubr.f32.mxu0 %v667
        %808 = vmatmul.mubr.f32.gmra.mxu0 %v666
        %v809 = vpop.f32.mrf.mxu0
        %v810 = vadd.f32 0.0, %v809
        %v811 = vpop.f32.mrf.mxu0
        %812 = vmatprep.mubr.f32.mxu0 %v670
        %813 = vmatmul.mubr.f32.gmra.mxu0 %v669
        %v814 = vpop.f32.mrf.mxu0
        %v815 = vadd.f32 0.0, %v814
        %v816 = vpop.f32.mrf.mxu0
        %817 = vmatprep.mubr.f32.mxu0 %v673
        %818 = vmatmul.mubr.f32.gmra.mxu0 %v672
        %v819 = vpop.f32.mrf.mxu0
        %v820 = vadd.f32 0.0, %v819
        %v821 = vpop.f32.mrf.mxu0
        %822 = vmatprep.mubr.f32.mxu0 %v676
        %823 = vmatmul.mubr.f32.gmra.mxu0 %v675
        %v824 = vpop.f32.mrf.mxu0
        %v825 = vadd.f32 0.0, %v824
        %v826 = vpop.f32.mrf.mxu0
        %827 = vmatprep.mubr.f32.mxu0 %v679
        %828 = vmatmul.mubr.f32.gmra.mxu0 %v678
        %v829 = vpop.f32.mrf.mxu0
        %v830 = vadd.f32 0.0, %v829
        %v831 = vpop.f32.mrf.mxu0
        %832 = vmatprep.mubr.f32.mxu0 %v682
        %833 = vmatmul.mubr.f32.gmra.mxu0 %v681
        %v834 = vpop.f32.mrf.mxu0
        %v835 = vadd.f32 0.0, %v834
        %v836 = vpop.f32.mrf.mxu0
        %837 = vmatprep.mubr.f32.mxu0 %v685
        %838 = vmatmul.mubr.f32.gmra.mxu0 %v684
        %v839 = vpop.f32.mrf.mxu0
        %v840 = vadd.f32 0.0, %v839
        %v841 = vpop.f32.mrf.mxu0
        %842 = vmatprep.mubr.f32.mxu0 %v688
        %843 = vmatmul.mubr.f32.gmra.mxu0 %v687
        %v844 = vpop.f32.mrf.mxu0
        %v845 = vadd.f32 0.0, %v844
        %v846 = vpop.f32.mrf.mxu0
        %847 = vdwg.mxu0
        %848 = vmatprep.subr.mxu0 0.0
        %849 = vmatpush1.msra.mxu0 %v737
        %850 = vmatprep.subr.mxu0 0.0
        %851 = vmatpush1.msra.mxu0 %v736
        %852 = vmatprep.subr.mxu0 0.0
        %853 = vmatpush1.msra.mxu0 %v735
        %854 = vmatprep.subr.mxu0 0.0
        %855 = vmatpush1.msra.mxu0 %v734
        %856 = vmatprep.subr.mxu0 0.0
        %857 = vmatpush1.msra.mxu0 %v733
        %858 = vmatprep.subr.mxu0 0.0
        %859 = vmatpush1.msra.mxu0 %v732
        %860 = vmatprep.subr.mxu0 0.0
        %861 = vmatpush1.msra.mxu0 %v731
        %862 = vmatprep.subr.mxu0 0.0
        %863 = vmatpush1.msra.mxu0 %v730
        %864 = vmatprep.subr.mxu0 0.0
        %865 = vmatpush1.msra.mxu0 %v729
        %866 = vmatprep.subr.mxu0 0.0
        %867 = vmatpush1.msra.mxu0 %v728
        %868 = vmatprep.subr.mxu0 0.0
        %869 = vmatpush1.msra.mxu0 %v727
        %870 = vmatprep.subr.mxu0 0.0
        %871 = vmatpush1.msra.mxu0 %v726
        %872 = vmatprep.subr.mxu0 0.0
        %873 = vmatpush1.msra.mxu0 %v725
        %874 = vmatprep.subr.mxu0 0.0
        %875 = vmatpush1.msra.mxu0 %v724
        %876 = vmatprep.subr.mxu0 0.0
        %877 = vmatpush1.msra.mxu0 %v723
        %878 = vmatprep.subr.mxu0 0.0
        %879 = vmatpush1.msra.mxu0 %v722
        %880 = vmatprep.subr.mxu0 0.0
        %881 = vmatpush2.msra.mxu0 0.0
        %882 = vmatprep.subr.mxu0 0.0
        %883 = vmatpush2.msra.mxu0 0.0
        %884 = vmatprep.subr.mxu0 0.0
        %885 = vmatpush2.msra.mxu0 0.0
        %886 = vmatprep.subr.mxu0 0.0
        %887 = vmatpush2.msra.mxu0 0.0
        %888 = vmatprep.subr.mxu0 0.0
        %889 = vmatpush2.msra.mxu0 0.0
        %890 = vmatprep.subr.mxu0 0.0
        %891 = vmatpush2.msra.mxu0 0.0
        %892 = vmatprep.subr.mxu0 0.0
        %893 = vmatpush2.msra.mxu0 0.0
        %894 = vmatprep.subr.mxu0 0.0
        %895 = vmatpush2.msra.mxu0 0.0
        %896 = vmatprep.subr.mxu0 0.0
        %897 = vmatpush2.msra.mxu0 0.0
        %898 = vmatprep.subr.mxu0 0.0
        %899 = vmatpush2.msra.mxu0 0.0
        %900 = vmatprep.subr.mxu0 0.0
        %901 = vmatpush2.msra.mxu0 0.0
        %902 = vmatprep.subr.mxu0 0.0
        %903 = vmatpush2.msra.mxu0 0.0
        %904 = vmatprep.subr.mxu0 0.0
        %905 = vmatpush2.msra.mxu0 0.0
        %906 = vmatprep.subr.mxu0 0.0
        %907 = vmatpush2.msra.mxu0 0.0
        %908 = vmatprep.subr.mxu0 0.0
        %909 = vmatpush2.msra.mxu0 0.0
        %910 = vmatprep.subr.mxu0 0.0
        %911 = vmatpush2.msra.mxu0 0.0
        %912 = vmatprep.mubr.f32.mxu0 0.0
        %913 = vmatmul.mubr.f32.gmra.mxu0 %v665
        %v914 = vpop.f32.mrf.mxu0
        %v915 = vadd.f32 %v805, %v914
        %v916 = vpop.f32.mrf.mxu0
        %917 = vmatprep.mubr.f32.mxu0 0.0
        %918 = vmatmul.mubr.f32.gmra.mxu0 %v668
        %v919 = vpop.f32.mrf.mxu0
        %v920 = vadd.f32 %v810, %v919
        %v921 = vpop.f32.mrf.mxu0
        %922 = vmatprep.mubr.f32.mxu0 0.0
        %923 = vmatmul.mubr.f32.gmra.mxu0 %v671
        %v924 = vpop.f32.mrf.mxu0
        %v925 = vadd.f32 %v815, %v924
        %v926 = vpop.f32.mrf.mxu0
        %927 = vmatprep.mubr.f32.mxu0 0.0
        %928 = vmatmul.mubr.f32.gmra.mxu0 %v674
        %v929 = vpop.f32.mrf.mxu0
        %v930 = vadd.f32 %v820, %v929
        %v931 = vpop.f32.mrf.mxu0
        %932 = vmatprep.mubr.f32.mxu0 0.0
        %933 = vmatmul.mubr.f32.gmra.mxu0 %v677
        %v934 = vpop.f32.mrf.mxu0
        %v935 = vadd.f32 %v825, %v934
        %v936 = vpop.f32.mrf.mxu0
        %937 = vmatprep.mubr.f32.mxu0 0.0
        %938 = vmatmul.mubr.f32.gmra.mxu0 %v680
        %v939 = vpop.f32.mrf.mxu0
        %v940 = vadd.f32 %v830, %v939
        %v941 = vpop.f32.mrf.mxu0
        %942 = vmatprep.mubr.f32.mxu0 0.0
        %943 = vmatmul.mubr.f32.gmra.mxu0 %v683
        %v944 = vpop.f32.mrf.mxu0
        %v945 = vadd.f32 %v835, %v944
        %v946 = vpop.f32.mrf.mxu0
        %947 = vmatprep.mubr.f32.mxu0 0.0
        %948 = vmatmul.mubr.f32.gmra.mxu0 %v686
        %v949 = vpop.f32.mrf.mxu0
        %v950 = vadd.f32 %v840, %v949
        %v951 = vpop.f32.mrf.mxu0
        %952 = vmatprep.mubr.f32.mxu0 0.0
        %953 = vmatmul.mubr.f32.gmra.mxu0 %v689
        %v954 = vpop.f32.mrf.mxu0
        %v955 = vadd.f32 %v845, %v954
        %v956 = vpop.f32.mrf.mxu0
        %957 = vdwg.mxu0
        %v958 = vld [vmem:[%s3] sm:$0x1]
        %v960 = vlaneseq
        %v961 = vshrl.u32 %v960, 7
        %v962 = vsub.s32 0, %v961
        %v963 = vrot.slane %v958, %v962
        %v965 = vmul.f32 %v915, %v963
        %v966 = vmul.f32 %v920, %v963
        %v967 = vmul.f32 %v925, %v963
        %v968 = vmul.f32 %v930, %v963
        %v969 = vmul.f32 %v935, %v963
        %v970 = vmul.f32 %v940, %v963
        %v971 = vmul.f32 %v945, %v963
        %v972 = vmul.f32 %v950, %v963
        %v973 = vmul.f32 %v955, %v963
        %v974 = vld [vmem:[%s4] sm:$0x1]
        %v976 = vlaneseq
        %v977 = vshrl.u32 %v976, 7
        %v978 = vsub.s32 0, %v977
        %v979 = vrot.slane %v974, %v978
        %v981 = vadd.f32 %v965, %v979
        %v982 = vadd.f32 %v966, %v979
        %v983 = vadd.f32 %v967, %v979
        %v984 = vadd.f32 %v968, %v979
        %v985 = vadd.f32 %v969, %v979
        %v986 = vadd.f32 %v970, %v979
        %v987 = vadd.f32 %v971, %v979
        %v988 = vadd.f32 %v972, %v979
        %v989 = vadd.f32 %v973, %v979
        %v990 = vmax.f32 %v981, 0.0
        %v991 = vmax.f32 %v982, 0.0
        %v992 = vmax.f32 %v983, 0.0
        %v993 = vmax.f32 %v984, 0.0
        %v994 = vmax.f32 %v985, 0.0
        %v995 = vmax.f32 %v986, 0.0
        %v996 = vmax.f32 %v987, 0.0
        %v997 = vmax.f32 %v988, 0.0
        %v998 = vmax.f32 %v989, 0.0
        %vm999 = vcmask 64512
        %1000 = vst.msk [vmem:[#allocation2] sm:$0xff] %vm999, %v990
        %1001 = vst.msk [vmem:[#allocation2 + $0x8] sm:$0xff] %vm999, %v991
        %1002 = vst.msk [vmem:[#allocation2 + $0x10] sm:$0xff] %vm999, %v992
        %1003 = vst.msk [vmem:[#allocation2 + $0x18] sm:$0xff] %vm999, %v993
        %1004 = vst.msk [vmem:[#allocation2 + $0x20] sm:$0xff] %vm999, %v994
        %1005 = vst.msk [vmem:[#allocation2 + $0x28] sm:$0xff] %vm999, %v995
        %1006 = vst.msk [vmem:[#allocation2 + $0x30] sm:$0xff] %vm999, %v996
        %1007 = vst.msk [vmem:[#allocation2 + $0x38] sm:$0xff] %vm999, %v997
        %vm1008 = vcmask 60416
        %1009 = vst.msk [vmem:[#allocation2 + $0x40] sm:$0xf] %vm1008, %v998
        %v1010 = vld [vmem:[#allocation2] sm:$0xff]
        %v1011 = vld [vmem:[#allocation2 + $0x8] sm:$0xff]
        %v1012 = vld [vmem:[#allocation2 + $0x10] sm:$0xff]
        %v1013 = vld [vmem:[#allocation2 + $0x18] sm:$0xff]
        %v1014 = vld [vmem:[#allocation2 + $0x20] sm:$0xff]
        %v1015 = vld [vmem:[#allocation2 + $0x28] sm:$0xff]
        %v1016 = vld [vmem:[#allocation2 + $0x30] sm:$0xff]
        %v1017 = vld [vmem:[#allocation2 + $0x38] sm:$0xff]
        %v1018 = vld [vmem:[#allocation2 + $0x40] sm:$0xf]
        %v1019 = vld [vmem:[%s5] sm:$0xff]
        %v1021 = vsel %vm999, %v1010, 0
        %v1024 = vsel %vm999, %v1011, 0
        %v1027 = vsel %vm999, %v1012, 0
        %v1030 = vsel %vm999, %v1013, 0
        %v1033 = vsel %vm999, %v1014, 0
        %v1036 = vsel %vm999, %v1015, 0
        %v1039 = vsel %vm999, %v1016, 0
        %v1042 = vsel %vm999, %v1017, 0
        %v1045 = vsel %vm999, %v1018, 0
        %1047 = vmatprep.subr.mxu0 0.0
        %1048 = vmatpush1.msra.mxu0 0.0
        %1049 = vmatprep.subr.mxu0 0.0
        %1050 = vmatpush1.msra.mxu0 0.0
        %1051 = vmatprep.subr.mxu0 0.0
        %1052 = vmatpush1.msra.mxu0 0.0
        %1053 = vmatprep.subr.mxu0 0.0
        %1054 = vmatpush1.msra.mxu0 0.0
        %1055 = vmatprep.subr.mxu0 0.0
        %1056 = vmatpush1.msra.mxu0 0.0
        %1057 = vmatprep.subr.mxu0 0.0
        %1058 = vmatpush1.msra.mxu0 0.0
        %1059 = vmatprep.subr.mxu0 0.0
        %1060 = vmatpush1.msra.mxu0 0.0
        %1061 = vmatprep.subr.mxu0 0.0
        %1062 = vmatpush1.msra.mxu0 0.0
        %1063 = vmatprep.subr.mxu0 0.0
        %1064 = vmatpush1.msra.mxu0 0.0
        %1065 = vmatprep.subr.mxu0 0.0
        %1066 = vmatpush1.msra.mxu0 0.0
        %1067 = vmatprep.subr.mxu0 0.0
        %1068 = vmatpush1.msra.mxu0 0.0
        %1069 = vmatprep.subr.mxu0 0.0
        %1070 = vmatpush1.msra.mxu0 0.0
        %1071 = vmatprep.subr.mxu0 0.0
        %1072 = vmatpush1.msra.mxu0 0.0
        %1073 = vmatprep.subr.mxu0 0.0
        %1074 = vmatpush1.msra.mxu0 0.0
        %1075 = vmatprep.subr.mxu0 0.0
        %1076 = vmatpush1.msra.mxu0 0.0
        %1077 = vmatprep.subr.mxu0 0.0
        %1078 = vmatpush1.msra.mxu0 %v1019
        %1079 = vmatprep.subr.mxu0 0.0
        %1080 = vmatpush2.msra.mxu0 0.0
        %1081 = vmatprep.subr.mxu0 0.0
        %1082 = vmatpush2.msra.mxu0 0.0
        %1083 = vmatprep.subr.mxu0 0.0
        %1084 = vmatpush2.msra.mxu0 0.0
        %1085 = vmatprep.subr.mxu0 0.0
        %1086 = vmatpush2.msra.mxu0 0.0
        %1087 = vmatprep.subr.mxu0 0.0
        %1088 = vmatpush2.msra.mxu0 0.0
        %1089 = vmatprep.subr.mxu0 0.0
        %1090 = vmatpush2.msra.mxu0 0.0
        %1091 = vmatprep.subr.mxu0 0.0
        %1092 = vmatpush2.msra.mxu0 0.0
        %1093 = vmatprep.subr.mxu0 0.0
        %1094 = vmatpush2.msra.mxu0 0.0
        %1095 = vmatprep.subr.mxu0 0.0
        %1096 = vmatpush2.msra.mxu0 0.0
        %1097 = vmatprep.subr.mxu0 0.0
        %1098 = vmatpush2.msra.mxu0 0.0
        %1099 = vmatprep.subr.mxu0 0.0
        %1100 = vmatpush2.msra.mxu0 0.0
        %1101 = vmatprep.subr.mxu0 0.0
        %1102 = vmatpush2.msra.mxu0 0.0
        %1103 = vmatprep.subr.mxu0 0.0
        %1104 = vmatpush2.msra.mxu0 0.0
        %1105 = vmatprep.subr.mxu0 0.0
        %1106 = vmatpush2.msra.mxu0 0.0
        %1107 = vmatprep.subr.mxu0 0.0
        %1108 = vmatpush2.msra.mxu0 0.0
        %1109 = vmatprep.subr.mxu0 0.0
        %1110 = vmatpush2.msra.mxu0 0.0
        %1111 = vmatprep.mubr.f32.mxu0 0.0
        %1112 = vmatmul.mubr.f32.gmra.mxu0 %v1021
        %v1113 = vpop.f32.mrf.mxu0
        %v1114 = vadd.f32 0.0, %v1113
        %v1115 = vpop.f32.mrf.mxu0
        %1116 = vmatprep.mubr.f32.mxu0 0.0
        %1117 = vmatmul.mubr.f32.gmra.mxu0 %v1024
        %v1118 = vpop.f32.mrf.mxu0
        %v1119 = vadd.f32 0.0, %v1118
        %v1120 = vpop.f32.mrf.mxu0
        %1121 = vmatprep.mubr.f32.mxu0 0.0
        %1122 = vmatmul.mubr.f32.gmra.mxu0 %v1027
        %v1123 = vpop.f32.mrf.mxu0
        %v1124 = vadd.f32 0.0, %v1123
        %v1125 = vpop.f32.mrf.mxu0
        %1126 = vmatprep.mubr.f32.mxu0 0.0
        %1127 = vmatmul.mubr.f32.gmra.mxu0 %v1030
        %v1128 = vpop.f32.mrf.mxu0
        %v1129 = vadd.f32 0.0, %v1128
        %v1130 = vpop.f32.mrf.mxu0
        %1131 = vmatprep.mubr.f32.mxu0 0.0
        %1132 = vmatmul.mubr.f32.gmra.mxu0 %v1033
        %v1133 = vpop.f32.mrf.mxu0
        %v1134 = vadd.f32 0.0, %v1133
        %v1135 = vpop.f32.mrf.mxu0
        %1136 = vmatprep.mubr.f32.mxu0 0.0
        %1137 = vmatmul.mubr.f32.gmra.mxu0 %v1036
        %v1138 = vpop.f32.mrf.mxu0
        %v1139 = vadd.f32 0.0, %v1138
        %v1140 = vpop.f32.mrf.mxu0
        %1141 = vmatprep.mubr.f32.mxu0 0.0
        %1142 = vmatmul.mubr.f32.gmra.mxu0 %v1039
        %v1143 = vpop.f32.mrf.mxu0
        %v1144 = vadd.f32 0.0, %v1143
        %v1145 = vpop.f32.mrf.mxu0
        %1146 = vmatprep.mubr.f32.mxu0 0.0
        %1147 = vmatmul.mubr.f32.gmra.mxu0 %v1042
        %v1148 = vpop.f32.mrf.mxu0
        %v1149 = vadd.f32 0.0, %v1148
        %v1150 = vpop.f32.mrf.mxu0
        %1151 = vmatprep.mubr.f32.mxu0 0.0
        %1152 = vmatmul.mubr.f32.gmra.mxu0 %v1045
        %v1153 = vpop.f32.mrf.mxu0
        %v1154 = vadd.f32 0.0, %v1153
        %v1155 = vpop.f32.mrf.mxu0
        %1156 = vdwg.mxu0
        %vm1157 = vcmask 130048
        %1158 = vst.msk [vmem:[#allocation3] sm:$0xff] %vm1157, %v1114
        %1159 = vst.msk [vmem:[#allocation3 + $0x8] sm:$0xff] %vm1157, %v1119
        %1160 = vst.msk [vmem:[#allocation3 + $0x10] sm:$0xff] %vm1157, %v1124
        %1161 = vst.msk [vmem:[#allocation3 + $0x18] sm:$0xff] %vm1157, %v1129
        %1162 = vst.msk [vmem:[#allocation3 + $0x20] sm:$0xff] %vm1157, %v1134
        %1163 = vst.msk [vmem:[#allocation3 + $0x28] sm:$0xff] %vm1157, %v1139
        %1164 = vst.msk [vmem:[#allocation3 + $0x30] sm:$0xff] %vm1157, %v1144
        %1165 = vst.msk [vmem:[#allocation3 + $0x38] sm:$0xff] %vm1157, %v1149
        %vm1166 = vcmask 125952
        %1167 = vst.msk [vmem:[#allocation3 + $0x40] sm:$0xf] %vm1166, %v1154
        %s1168 = scalar_lea.vmem %s5, 8
        %v1169 = vld [vmem:[%s1168] sm:$0xff]
        %1170 = vmatprep.subr.mxu0 0.0
        %1171 = vmatpush1.msra.mxu0 0.0
        %1172 = vmatprep.subr.mxu0 0.0
        %1173 = vmatpush1.msra.mxu0 0.0
        %1174 = vmatprep.subr.mxu0 0.0
        %1175 = vmatpush1.msra.mxu0 0.0
        %1176 = vmatprep.subr.mxu0 0.0
        %1177 = vmatpush1.msra.mxu0 0.0
        %1178 = vmatprep.subr.mxu0 0.0
        %1179 = vmatpush1.msra.mxu0 0.0
        %1180 = vmatprep.subr.mxu0 0.0
        %1181 = vmatpush1.msra.mxu0 0.0
        %1182 = vmatprep.subr.mxu0 0.0
        %1183 = vmatpush1.msra.mxu0 0.0
        %1184 = vmatprep.subr.mxu0 0.0
        %1185 = vmatpush1.msra.mxu0 0.0
        %1186 = vmatprep.subr.mxu0 0.0
        %1187 = vmatpush1.msra.mxu0 0.0
        %1188 = vmatprep.subr.mxu0 0.0
        %1189 = vmatpush1.msra.mxu0 0.0
        %1190 = vmatprep.subr.mxu0 0.0
        %1191 = vmatpush1.msra.mxu0 0.0
        %1192 = vmatprep.subr.mxu0 0.0
        %1193 = vmatpush1.msra.mxu0 0.0
        %1194 = vmatprep.subr.mxu0 0.0
        %1195 = vmatpush1.msra.mxu0 0.0
        %1196 = vmatprep.subr.mxu0 0.0
        %1197 = vmatpush1.msra.mxu0 0.0
        %1198 = vmatprep.subr.mxu0 0.0
        %1199 = vmatpush1.msra.mxu0 0.0
        %1200 = vmatprep.subr.mxu0 0.0
        %1201 = vmatpush1.msra.mxu0 %v1169
        %1202 = vmatprep.subr.mxu0 0.0
        %1203 = vmatpush2.msra.mxu0 0.0
        %1204 = vmatprep.subr.mxu0 0.0
        %1205 = vmatpush2.msra.mxu0 0.0
        %1206 = vmatprep.subr.mxu0 0.0
        %1207 = vmatpush2.msra.mxu0 0.0
        %1208 = vmatprep.subr.mxu0 0.0
        %1209 = vmatpush2.msra.mxu0 0.0
        %1210 = vmatprep.subr.mxu0 0.0
        %1211 = vmatpush2.msra.mxu0 0.0
        %1212 = vmatprep.subr.mxu0 0.0
        %1213 = vmatpush2.msra.mxu0 0.0
        %1214 = vmatprep.subr.mxu0 0.0
        %1215 = vmatpush2.msra.mxu0 0.0
        %1216 = vmatprep.subr.mxu0 0.0
        %1217 = vmatpush2.msra.mxu0 0.0
        %1218 = vmatprep.subr.mxu0 0.0
        %1219 = vmatpush2.msra.mxu0 0.0
        %1220 = vmatprep.subr.mxu0 0.0
        %1221 = vmatpush2.msra.mxu0 0.0
        %1222 = vmatprep.subr.mxu0 0.0
        %1223 = vmatpush2.msra.mxu0 0.0
        %1224 = vmatprep.subr.mxu0 0.0
        %1225 = vmatpush2.msra.mxu0 0.0
        %1226 = vmatprep.subr.mxu0 0.0
        %1227 = vmatpush2.msra.mxu0 0.0
        %1228 = vmatprep.subr.mxu0 0.0
        %1229 = vmatpush2.msra.mxu0 0.0
        %1230 = vmatprep.subr.mxu0 0.0
        %1231 = vmatpush2.msra.mxu0 0.0
        %1232 = vmatprep.subr.mxu0 0.0
        %1233 = vmatpush2.msra.mxu0 0.0
        %1234 = vmatprep.mubr.f32.mxu0 0.0
        %1235 = vmatmul.mubr.f32.gmra.mxu0 %v1021
        %v1236 = vpop.f32.mrf.mxu0
        %v1237 = vadd.f32 0.0, %v1236
        %v1238 = vpop.f32.mrf.mxu0
        %1239 = vmatprep.mubr.f32.mxu0 0.0
        %1240 = vmatmul.mubr.f32.gmra.mxu0 %v1024
        %v1241 = vpop.f32.mrf.mxu0
        %v1242 = vadd.f32 0.0, %v1241
        %v1243 = vpop.f32.mrf.mxu0
        %1244 = vmatprep.mubr.f32.mxu0 0.0
        %1245 = vmatmul.mubr.f32.gmra.mxu0 %v1027
        %v1246 = vpop.f32.mrf.mxu0
        %v1247 = vadd.f32 0.0, %v1246
        %v1248 = vpop.f32.mrf.mxu0
        %1249 = vmatprep.mubr.f32.mxu0 0.0
        %1250 = vmatmul.mubr.f32.gmra.mxu0 %v1030
        %v1251 = vpop.f32.mrf.mxu0
        %v1252 = vadd.f32 0.0, %v1251
        %v1253 = vpop.f32.mrf.mxu0
        %1254 = vmatprep.mubr.f32.mxu0 0.0
        %1255 = vmatmul.mubr.f32.gmra.mxu0 %v1033
        %v1256 = vpop.f32.mrf.mxu0
        %v1257 = vadd.f32 0.0, %v1256
        %v1258 = vpop.f32.mrf.mxu0
        %1259 = vmatprep.mubr.f32.mxu0 0.0
        %1260 = vmatmul.mubr.f32.gmra.mxu0 %v1036
        %v1261 = vpop.f32.mrf.mxu0
        %v1262 = vadd.f32 0.0, %v1261
        %v1263 = vpop.f32.mrf.mxu0
        %1264 = vmatprep.mubr.f32.mxu0 0.0
        %1265 = vmatmul.mubr.f32.gmra.mxu0 %v1039
        %v1266 = vpop.f32.mrf.mxu0
        %v1267 = vadd.f32 0.0, %v1266
        %v1268 = vpop.f32.mrf.mxu0
        %1269 = vmatprep.mubr.f32.mxu0 0.0
        %1270 = vmatmul.mubr.f32.gmra.mxu0 %v1042
        %v1271 = vpop.f32.mrf.mxu0
        %v1272 = vadd.f32 0.0, %v1271
        %v1273 = vpop.f32.mrf.mxu0
        %1274 = vmatprep.mubr.f32.mxu0 0.0
        %1275 = vmatmul.mubr.f32.gmra.mxu0 %v1045
        %v1276 = vpop.f32.mrf.mxu0
        %v1277 = vadd.f32 0.0, %v1276
        %v1278 = vpop.f32.mrf.mxu0
        %1279 = vdwg.mxu0
        %1280 = vst.msk [vmem:[#allocation3 + $0x44] sm:$0xff] %vm1157, %v1237
        %1281 = vst.msk [vmem:[#allocation3 + $0x4c] sm:$0xff] %vm1157, %v1242
        %1282 = vst.msk [vmem:[#allocation3 + $0x54] sm:$0xff] %vm1157, %v1247
        %1283 = vst.msk [vmem:[#allocation3 + $0x5c] sm:$0xff] %vm1157, %v1252
        %1284 = vst.msk [vmem:[#allocation3 + $0x64] sm:$0xff] %vm1157, %v1257
        %1285 = vst.msk [vmem:[#allocation3 + $0x6c] sm:$0xff] %vm1157, %v1262
        %1286 = vst.msk [vmem:[#allocation3 + $0x74] sm:$0xff] %vm1157, %v1267
        %1287 = vst.msk [vmem:[#allocation3 + $0x7c] sm:$0xff] %vm1157, %v1272
        %1288 = vst.msk [vmem:[#allocation3 + $0x84] sm:$0xf] %vm1166, %v1277
        %s1289 = scalar_lea.vmem %s5, 16
        %v1290 = vld [vmem:[%s1289] sm:$0xff]
        %1291 = vmatprep.subr.mxu0 0.0
        %1292 = vmatpush1.msra.mxu0 0.0
        %1293 = vmatprep.subr.mxu0 0.0
        %1294 = vmatpush1.msra.mxu0 0.0
        %1295 = vmatprep.subr.mxu0 0.0
        %1296 = vmatpush1.msra.mxu0 0.0
        %1297 = vmatprep.subr.mxu0 0.0
        %1298 = vmatpush1.msra.mxu0 0.0
        %1299 = vmatprep.subr.mxu0 0.0
        %1300 = vmatpush1.msra.mxu0 0.0
        %1301 = vmatprep.subr.mxu0 0.0
        %1302 = vmatpush1.msra.mxu0 0.0
        %1303 = vmatprep.subr.mxu0 0.0
        %1304 = vmatpush1.msra.mxu0 0.0
        %1305 = vmatprep.subr.mxu0 0.0
        %1306 = vmatpush1.msra.mxu0 0.0
        %1307 = vmatprep.subr.mxu0 0.0
        %1308 = vmatpush1.msra.mxu0 0.0
        %1309 = vmatprep.subr.mxu0 0.0
        %1310 = vmatpush1.msra.mxu0 0.0
        %1311 = vmatprep.subr.mxu0 0.0
        %1312 = vmatpush1.msra.mxu0 0.0
        %1313 = vmatprep.subr.mxu0 0.0
        %1314 = vmatpush1.msra.mxu0 0.0
        %1315 = vmatprep.subr.mxu0 0.0
        %1316 = vmatpush1.msra.mxu0 0.0
        %1317 = vmatprep.subr.mxu0 0.0
        %1318 = vmatpush1.msra.mxu0 0.0
        %1319 = vmatprep.subr.mxu0 0.0
        %1320 = vmatpush1.msra.mxu0 0.0
        %1321 = vmatprep.subr.mxu0 0.0
        %1322 = vmatpush1.msra.mxu0 %v1290
        %1323 = vmatprep.subr.mxu0 0.0
        %1324 = vmatpush2.msra.mxu0 0.0
        %1325 = vmatprep.subr.mxu0 0.0
        %1326 = vmatpush2.msra.mxu0 0.0
        %1327 = vmatprep.subr.mxu0 0.0
        %1328 = vmatpush2.msra.mxu0 0.0
        %1329 = vmatprep.subr.mxu0 0.0
        %1330 = vmatpush2.msra.mxu0 0.0
        %1331 = vmatprep.subr.mxu0 0.0
        %1332 = vmatpush2.msra.mxu0 0.0
        %1333 = vmatprep.subr.mxu0 0.0
        %1334 = vmatpush2.msra.mxu0 0.0
        %1335 = vmatprep.subr.mxu0 0.0
        %1336 = vmatpush2.msra.mxu0 0.0
        %1337 = vmatprep.subr.mxu0 0.0
        %1338 = vmatpush2.msra.mxu0 0.0
        %1339 = vmatprep.subr.mxu0 0.0
        %1340 = vmatpush2.msra.mxu0 0.0
        %1341 = vmatprep.subr.mxu0 0.0
        %1342 = vmatpush2.msra.mxu0 0.0
        %1343 = vmatprep.subr.mxu0 0.0
        %1344 = vmatpush2.msra.mxu0 0.0
        %1345 = vmatprep.subr.mxu0 0.0
        %1346 = vmatpush2.msra.mxu0 0.0
        %1347 = vmatprep.subr.mxu0 0.0
        %1348 = vmatpush2.msra.mxu0 0.0
        %1349 = vmatprep.subr.mxu0 0.0
        %1350 = vmatpush2.msra.mxu0 0.0
        %1351 = vmatprep.subr.mxu0 0.0
        %1352 = vmatpush2.msra.mxu0 0.0
        %1353 = vmatprep.subr.mxu0 0.0
        %1354 = vmatpush2.msra.mxu0 0.0
        %1355 = vmatprep.mubr.f32.mxu0 0.0
        %1356 = vmatmul.mubr.f32.gmra.mxu0 %v1021
        %v1357 = vpop.f32.mrf.mxu0
        %v1358 = vadd.f32 0.0, %v1357
        %v1359 = vpop.f32.mrf.mxu0
        %1360 = vmatprep.mubr.f32.mxu0 0.0
        %1361 = vmatmul.mubr.f32.gmra.mxu0 %v1024
        %v1362 = vpop.f32.mrf.mxu0
        %v1363 = vadd.f32 0.0, %v1362
        %v1364 = vpop.f32.mrf.mxu0
        %1365 = vmatprep.mubr.f32.mxu0 0.0
        %1366 = vmatmul.mubr.f32.gmra.mxu0 %v1027
        %v1367 = vpop.f32.mrf.mxu0
        %v1368 = vadd.f32 0.0, %v1367
        %v1369 = vpop.f32.mrf.mxu0
        %1370 = vmatprep.mubr.f32.mxu0 0.0
        %1371 = vmatmul.mubr.f32.gmra.mxu0 %v1030
        %v1372 = vpop.f32.mrf.mxu0
        %v1373 = vadd.f32 0.0, %v1372
        %v1374 = vpop.f32.mrf.mxu0
        %1375 = vmatprep.mubr.f32.mxu0 0.0
        %1376 = vmatmul.mubr.f32.gmra.mxu0 %v1033
        %v1377 = vpop.f32.mrf.mxu0
        %v1378 = vadd.f32 0.0, %v1377
        %v1379 = vpop.f32.mrf.mxu0
        %1380 = vmatprep.mubr.f32.mxu0 0.0
        %1381 = vmatmul.mubr.f32.gmra.mxu0 %v1036
        %v1382 = vpop.f32.mrf.mxu0
        %v1383 = vadd.f32 0.0, %v1382
        %v1384 = vpop.f32.mrf.mxu0
        %1385 = vmatprep.mubr.f32.mxu0 0.0
        %1386 = vmatmul.mubr.f32.gmra.mxu0 %v1039
        %v1387 = vpop.f32.mrf.mxu0
        %v1388 = vadd.f32 0.0, %v1387
        %v1389 = vpop.f32.mrf.mxu0
        %1390 = vmatprep.mubr.f32.mxu0 0.0
        %1391 = vmatmul.mubr.f32.gmra.mxu0 %v1042
        %v1392 = vpop.f32.mrf.mxu0
        %v1393 = vadd.f32 0.0, %v1392
        %v1394 = vpop.f32.mrf.mxu0
        %1395 = vmatprep.mubr.f32.mxu0 0.0
        %1396 = vmatmul.mubr.f32.gmra.mxu0 %v1045
        %v1397 = vpop.f32.mrf.mxu0
        %v1398 = vadd.f32 0.0, %v1397
        %v1399 = vpop.f32.mrf.mxu0
        %1400 = vdwg.mxu0
        %1401 = vst.msk [vmem:[#allocation3 + $0x88] sm:$0xff] %vm1157, %v1358
        %1402 = vst.msk [vmem:[#allocation3 + $0x90] sm:$0xff] %vm1157, %v1363
        %1403 = vst.msk [vmem:[#allocation3 + $0x98] sm:$0xff] %vm1157, %v1368
        %1404 = vst.msk [vmem:[#allocation3 + $0xa0] sm:$0xff] %vm1157, %v1373
        %1405 = vst.msk [vmem:[#allocation3 + $0xa8] sm:$0xff] %vm1157, %v1378
        %1406 = vst.msk [vmem:[#allocation3 + $0xb0] sm:$0xff] %vm1157, %v1383
        %1407 = vst.msk [vmem:[#allocation3 + $0xb8] sm:$0xff] %vm1157, %v1388
        %1408 = vst.msk [vmem:[#allocation3 + $0xc0] sm:$0xff] %vm1157, %v1393
        %1409 = vst.msk [vmem:[#allocation3 + $0xc8] sm:$0xf] %vm1166, %v1398
        %s1410 = scalar_lea.vmem %s5, 24
        %v1411 = vld [vmem:[%s1410] sm:$0xff]
        %1412 = vmatprep.subr.mxu0 0.0
        %1413 = vmatpush1.msra.mxu0 0.0
        %1414 = vmatprep.subr.mxu0 0.0
        %1415 = vmatpush1.msra.mxu0 0.0
        %1416 = vmatprep.subr.mxu0 0.0
        %1417 = vmatpush1.msra.mxu0 0.0
        %1418 = vmatprep.subr.mxu0 0.0
        %1419 = vmatpush1.msra.mxu0 0.0
        %1420 = vmatprep.subr.mxu0 0.0
        %1421 = vmatpush1.msra.mxu0 0.0
        %1422 = vmatprep.subr.mxu0 0.0
        %1423 = vmatpush1.msra.mxu0 0.0
        %1424 = vmatprep.subr.mxu0 0.0
        %1425 = vmatpush1.msra.mxu0 0.0
        %1426 = vmatprep.subr.mxu0 0.0
        %1427 = vmatpush1.msra.mxu0 0.0
        %1428 = vmatprep.subr.mxu0 0.0
        %1429 = vmatpush1.msra.mxu0 0.0
        %1430 = vmatprep.subr.mxu0 0.0
        %1431 = vmatpush1.msra.mxu0 0.0
        %1432 = vmatprep.subr.mxu0 0.0
        %1433 = vmatpush1.msra.mxu0 0.0
        %1434 = vmatprep.subr.mxu0 0.0
        %1435 = vmatpush1.msra.mxu0 0.0
        %1436 = vmatprep.subr.mxu0 0.0
        %1437 = vmatpush1.msra.mxu0 0.0
        %1438 = vmatprep.subr.mxu0 0.0
        %1439 = vmatpush1.msra.mxu0 0.0
        %1440 = vmatprep.subr.mxu0 0.0
        %1441 = vmatpush1.msra.mxu0 0.0
        %1442 = vmatprep.subr.mxu0 0.0
        %1443 = vmatpush1.msra.mxu0 %v1411
        %1444 = vmatprep.subr.mxu0 0.0
        %1445 = vmatpush2.msra.mxu0 0.0
        %1446 = vmatprep.subr.mxu0 0.0
        %1447 = vmatpush2.msra.mxu0 0.0
        %1448 = vmatprep.subr.mxu0 0.0
        %1449 = vmatpush2.msra.mxu0 0.0
        %1450 = vmatprep.subr.mxu0 0.0
        %1451 = vmatpush2.msra.mxu0 0.0
        %1452 = vmatprep.subr.mxu0 0.0
        %1453 = vmatpush2.msra.mxu0 0.0
        %1454 = vmatprep.subr.mxu0 0.0
        %1455 = vmatpush2.msra.mxu0 0.0
        %1456 = vmatprep.subr.mxu0 0.0
        %1457 = vmatpush2.msra.mxu0 0.0
        %1458 = vmatprep.subr.mxu0 0.0
        %1459 = vmatpush2.msra.mxu0 0.0
        %1460 = vmatprep.subr.mxu0 0.0
        %1461 = vmatpush2.msra.mxu0 0.0
        %1462 = vmatprep.subr.mxu0 0.0
        %1463 = vmatpush2.msra.mxu0 0.0
        %1464 = vmatprep.subr.mxu0 0.0
        %1465 = vmatpush2.msra.mxu0 0.0
        %1466 = vmatprep.subr.mxu0 0.0
        %1467 = vmatpush2.msra.mxu0 0.0
        %1468 = vmatprep.subr.mxu0 0.0
        %1469 = vmatpush2.msra.mxu0 0.0
        %1470 = vmatprep.subr.mxu0 0.0
        %1471 = vmatpush2.msra.mxu0 0.0
        %1472 = vmatprep.subr.mxu0 0.0
        %1473 = vmatpush2.msra.mxu0 0.0
        %1474 = vmatprep.subr.mxu0 0.0
        %1475 = vmatpush2.msra.mxu0 0.0
        %1476 = vmatprep.mubr.f32.mxu0 0.0
        %1477 = vmatmul.mubr.f32.gmra.mxu0 %v1021
        %v1478 = vpop.f32.mrf.mxu0
        %v1479 = vadd.f32 0.0, %v1478
        %v1480 = vpop.f32.mrf.mxu0
        %1481 = vmatprep.mubr.f32.mxu0 0.0
        %1482 = vmatmul.mubr.f32.gmra.mxu0 %v1024
        %v1483 = vpop.f32.mrf.mxu0
        %v1484 = vadd.f32 0.0, %v1483
        %v1485 = vpop.f32.mrf.mxu0
        %1486 = vmatprep.mubr.f32.mxu0 0.0
        %1487 = vmatmul.mubr.f32.gmra.mxu0 %v1027
        %v1488 = vpop.f32.mrf.mxu0
        %v1489 = vadd.f32 0.0, %v1488
        %v1490 = vpop.f32.mrf.mxu0
        %1491 = vmatprep.mubr.f32.mxu0 0.0
        %1492 = vmatmul.mubr.f32.gmra.mxu0 %v1030
        %v1493 = vpop.f32.mrf.mxu0
        %v1494 = vadd.f32 0.0, %v1493
        %v1495 = vpop.f32.mrf.mxu0
        %1496 = vmatprep.mubr.f32.mxu0 0.0
        %1497 = vmatmul.mubr.f32.gmra.mxu0 %v1033
        %v1498 = vpop.f32.mrf.mxu0
        %v1499 = vadd.f32 0.0, %v1498
        %v1500 = vpop.f32.mrf.mxu0
        %1501 = vmatprep.mubr.f32.mxu0 0.0
        %1502 = vmatmul.mubr.f32.gmra.mxu0 %v1036
        %v1503 = vpop.f32.mrf.mxu0
        %v1504 = vadd.f32 0.0, %v1503
        %v1505 = vpop.f32.mrf.mxu0
        %1506 = vmatprep.mubr.f32.mxu0 0.0
        %1507 = vmatmul.mubr.f32.gmra.mxu0 %v1039
        %v1508 = vpop.f32.mrf.mxu0
        %v1509 = vadd.f32 0.0, %v1508
        %v1510 = vpop.f32.mrf.mxu0
        %1511 = vmatprep.mubr.f32.mxu0 0.0
        %1512 = vmatmul.mubr.f32.gmra.mxu0 %v1042
        %v1513 = vpop.f32.mrf.mxu0
        %v1514 = vadd.f32 0.0, %v1513
        %v1515 = vpop.f32.mrf.mxu0
        %1516 = vmatprep.mubr.f32.mxu0 0.0
        %1517 = vmatmul.mubr.f32.gmra.mxu0 %v1045
        %v1518 = vpop.f32.mrf.mxu0
        %v1519 = vadd.f32 0.0, %v1518
        %v1520 = vpop.f32.mrf.mxu0
        %1521 = vdwg.mxu0
        %1522 = vst.msk [vmem:[#allocation3 + $0xcc] sm:$0xff] %vm1157, %v1479
        %1523 = vst.msk [vmem:[#allocation3 + $0xd4] sm:$0xff] %vm1157, %v1484
        %1524 = vst.msk [vmem:[#allocation3 + $0xdc] sm:$0xff] %vm1157, %v1489
        %1525 = vst.msk [vmem:[#allocation3 + $0xe4] sm:$0xff] %vm1157, %v1494
        %1526 = vst.msk [vmem:[#allocation3 + $0xec] sm:$0xff] %vm1157, %v1499
        %1527 = vst.msk [vmem:[#allocation3 + $0xf4] sm:$0xff] %vm1157, %v1504
        %1528 = vst.msk [vmem:[#allocation3 + $0xfc] sm:$0xff] %vm1157, %v1509
        %1529 = vst.msk [vmem:[#allocation3 + $0x104] sm:$0xff] %vm1157, %v1514
        %1530 = vst.msk [vmem:[#allocation3 + $0x10c] sm:$0xf] %vm1166, %v1519
        %v1531 = vld [vmem:[#allocation3] ss:$2 sm:$0x7f]
        %s1532 = scalar_lea.vmem [#allocation3], 69
        %v1533 = vld [vmem:[%s1532] ss:$2 sm:$0x7f]
        %v1534 = vadd.f32 %v1531, %v1533
        %s1535 = scalar_lea.vmem [#allocation3], 138
        %v1536 = vld [vmem:[%s1535] ss:$2 sm:$0x7f]
        %v1537 = vadd.f32 %v1534, %v1536
        %s1538 = scalar_lea.vmem [#allocation3], 207
        %v1539 = vld [vmem:[%s1538] ss:$2 sm:$0x7f]
        %v1540 = vadd.f32 %v1537, %v1539
        %v1541 = vld [vmem:[%s6] sm:$0x1]
        %v1543 = vlaneseq
        %v1544 = vshrl.u32 %v1543, 7
        %v1545 = vsub.s32 0, %v1544
        %v1546 = vrot.slane %v1541, %v1545
        %v1548 = vmul.f32 %v1540, %v1546
        %v1549 = vld [vmem:[%s7] sm:$0x1]
        %v1551 = vlaneseq
        %v1552 = vshrl.u32 %v1551, 7
        %v1553 = vsub.s32 0, %v1552
        %v1554 = vrot.slane %v1549, %v1553
        %v1556 = vadd.f32 %v1548, %v1554
        %v1557 = vmax.f32 %v1556, 0.0
        %vm1558 = vcmask 129024
        %1559 = vst.msk [vmem:[#allocation4] sm:$0x7f] %vm1558, %v1557
        %s1560 = scalar_lea.vmem [#allocation3], 17
        %v1561 = vld [vmem:[%s1560] ss:$2 sm:$0x7f]
        %s1562 = scalar_lea.vmem [#allocation3], 86
        %v1563 = vld [vmem:[%s1562] ss:$2 sm:$0x7f]
        %v1564 = vadd.f32 %v1561, %v1563
        %s1565 = scalar_lea.vmem [#allocation3], 155
        %v1566 = vld [vmem:[%s1565] ss:$2 sm:$0x7f]
        %v1567 = vadd.f32 %v1564, %v1566
        %s1568 = scalar_lea.vmem [#allocation3], 224
        %v1569 = vld [vmem:[%s1568] ss:$2 sm:$0x7f]
        %v1570 = vadd.f32 %v1567, %v1569
        %v1571 = vld [vmem:[%s6] sm:$0x1]
        %v1573 = vlaneseq
        %v1574 = vshrl.u32 %v1573, 7
        %v1575 = vsub.s32 0, %v1574
        %v1576 = vrot.slane %v1571, %v1575
        %v1578 = vmul.f32 %v1570, %v1576
        %v1579 = vld [vmem:[%s7] sm:$0x1]
        %v1581 = vlaneseq
        %v1582 = vshrl.u32 %v1581, 7
        %v1583 = vsub.s32 0, %v1582
        %v1584 = vrot.slane %v1579, %v1583
        %v1586 = vadd.f32 %v1578, %v1584
        %v1587 = vmax.f32 %v1586, 0.0
        %1588 = vst.msk [vmem:[#allocation4 + $0x7] sm:$0x7f] %vm1558, %v1587
        %s1589 = scalar_lea.vmem [#allocation3], 34
        %v1590 = vld [vmem:[%s1589] ss:$2 sm:$0x7f]
        %s1591 = scalar_lea.vmem [#allocation3], 103
        %v1592 = vld [vmem:[%s1591] ss:$2 sm:$0x7f]
        %v1593 = vadd.f32 %v1590, %v1592
        %s1594 = scalar_lea.vmem [#allocation3], 172
        %v1595 = vld [vmem:[%s1594] ss:$2 sm:$0x7f]
        %v1596 = vadd.f32 %v1593, %v1595
        %s1597 = scalar_lea.vmem [#allocation3], 241
        %v1598 = vld [vmem:[%s1597] ss:$2 sm:$0x7f]
        %v1599 = vadd.f32 %v1596, %v1598
        %v1600 = vld [vmem:[%s6] sm:$0x1]
        %v1602 = vlaneseq
        %v1603 = vshrl.u32 %v1602, 7
        %v1604 = vsub.s32 0, %v1603
        %v1605 = vrot.slane %v1600, %v1604
        %v1607 = vmul.f32 %v1599, %v1605
        %v1608 = vld [vmem:[%s7] sm:$0x1]
        %v1610 = vlaneseq
        %v1611 = vshrl.u32 %v1610, 7
        %v1612 = vsub.s32 0, %v1611
        %v1613 = vrot.slane %v1608, %v1612
        %v1615 = vadd.f32 %v1607, %v1613
        %v1616 = vmax.f32 %v1615, 0.0
        %1617 = vst.msk [vmem:[#allocation4 + $0xe] sm:$0x7f] %vm1558, %v1616
        %s1618 = scalar_lea.vmem [#allocation3], 51
        %v1619 = vld [vmem:[%s1618] ss:$2 sm:$0x7f]
        %s1620 = scalar_lea.vmem [#allocation3], 120
        %v1621 = vld [vmem:[%s1620] ss:$2 sm:$0x7f]
        %v1622 = vadd.f32 %v1619, %v1621
        %s1623 = scalar_lea.vmem [#allocation3], 189
        %v1624 = vld [vmem:[%s1623] ss:$2 sm:$0x7f]
        %v1625 = vadd.f32 %v1622, %v1624
        %s1626 = scalar_lea.vmem [#allocation3], 258
        %v1627 = vld [vmem:[%s1626] ss:$2 sm:$0x7f]
        %v1628 = vadd.f32 %v1625, %v1627
        %v1629 = vld [vmem:[%s6] sm:$0x1]
        %v1631 = vlaneseq
        %v1632 = vshrl.u32 %v1631, 7
        %v1633 = vsub.s32 0, %v1632
        %v1634 = vrot.slane %v1629, %v1633
        %v1636 = vmul.f32 %v1628, %v1634
        %v1637 = vld [vmem:[%s7] sm:$0x1]
        %v1639 = vlaneseq
        %v1640 = vshrl.u32 %v1639, 7
        %v1641 = vsub.s32 0, %v1640
        %v1642 = vrot.slane %v1637, %v1641
        %v1644 = vadd.f32 %v1636, %v1642
        %v1645 = vmax.f32 %v1644, 0.0
        %1646 = vst.msk [vmem:[#allocation4 + $0x15] sm:$0x7f] %vm1558, %v1645
        %v1647 = vld [vmem:[#allocation4] sm:$0xff]
        %v1648 = vld [vmem:[#allocation4 + $0x8] sm:$0xff]
        %v1649 = vld [vmem:[#allocation4 + $0x10] sm:$0xff]
        %v1650 = vld [vmem:[#allocation4 + $0x18] sm:$0xf]
        %v1651 = vld [vmem:[%s8] sm:$0xff]
        %v1652 = vld [vmem:[%s8 + $0x8] sm:$0xff]
        %v1654 = vsel %vm1157, %v1647, 0
        %v1657 = vsel %vm1157, %v1648, 0
        %v1660 = vsel %vm1157, %v1649, 0
        %v1663 = vsel %vm1157, %v1650, 0
        %1665 = vmatprep.subr.mxu0 0.0
        %1666 = vmatpush1.msra.mxu0 0.0
        %1667 = vmatprep.subr.mxu0 0.0
        %1668 = vmatpush1.msra.mxu0 0.0
        %1669 = vmatprep.subr.mxu0 0.0
        %1670 = vmatpush1.msra.mxu0 0.0
        %1671 = vmatprep.subr.mxu0 0.0
        %1672 = vmatpush1.msra.mxu0 0.0
        %1673 = vmatprep.subr.mxu0 0.0
        %1674 = vmatpush1.msra.mxu0 0.0
        %1675 = vmatprep.subr.mxu0 0.0
        %1676 = vmatpush1.msra.mxu0 0.0
        %1677 = vmatprep.subr.mxu0 0.0
        %1678 = vmatpush1.msra.mxu0 0.0
        %1679 = vmatprep.subr.mxu0 0.0
        %1680 = vmatpush1.msra.mxu0 0.0
        %1681 = vmatprep.subr.mxu0 0.0
        %1682 = vmatpush1.msra.mxu0 0.0
        %1683 = vmatprep.subr.mxu0 0.0
        %1684 = vmatpush1.msra.mxu0 0.0
        %1685 = vmatprep.subr.mxu0 0.0
        %1686 = vmatpush1.msra.mxu0 0.0
        %1687 = vmatprep.subr.mxu0 0.0
        %1688 = vmatpush1.msra.mxu0 0.0
        %1689 = vmatprep.subr.mxu0 0.0
        %1690 = vmatpush1.msra.mxu0 0.0
        %1691 = vmatprep.subr.mxu0 0.0
        %1692 = vmatpush1.msra.mxu0 0.0
        %1693 = vmatprep.subr.mxu0 0.0
        %1694 = vmatpush1.msra.mxu0 %v1652
        %1695 = vmatprep.subr.mxu0 0.0
        %1696 = vmatpush1.msra.mxu0 %v1651
        %1697 = vmatprep.subr.mxu0 0.0
        %1698 = vmatpush2.msra.mxu0 0.0
        %1699 = vmatprep.subr.mxu0 0.0
        %1700 = vmatpush2.msra.mxu0 0.0
        %1701 = vmatprep.subr.mxu0 0.0
        %1702 = vmatpush2.msra.mxu0 0.0
        %1703 = vmatprep.subr.mxu0 0.0
        %1704 = vmatpush2.msra.mxu0 0.0
        %1705 = vmatprep.subr.mxu0 0.0
        %1706 = vmatpush2.msra.mxu0 0.0
        %1707 = vmatprep.subr.mxu0 0.0
        %1708 = vmatpush2.msra.mxu0 0.0
        %1709 = vmatprep.subr.mxu0 0.0
        %1710 = vmatpush2.msra.mxu0 0.0
        %1711 = vmatprep.subr.mxu0 0.0
        %1712 = vmatpush2.msra.mxu0 0.0
        %1713 = vmatprep.subr.mxu0 0.0
        %1714 = vmatpush2.msra.mxu0 0.0
        %1715 = vmatprep.subr.mxu0 0.0
        %1716 = vmatpush2.msra.mxu0 0.0
        %1717 = vmatprep.subr.mxu0 0.0
        %1718 = vmatpush2.msra.mxu0 0.0
        %1719 = vmatprep.subr.mxu0 0.0
        %1720 = vmatpush2.msra.mxu0 0.0
        %1721 = vmatprep.subr.mxu0 0.0
        %1722 = vmatpush2.msra.mxu0 0.0
        %1723 = vmatprep.subr.mxu0 0.0
        %1724 = vmatpush2.msra.mxu0 0.0
        %1725 = vmatprep.subr.mxu0 0.0
        %1726 = vmatpush2.msra.mxu0 0.0
        %1727 = vmatprep.subr.mxu0 0.0
        %1728 = vmatpush2.msra.mxu0 0.0
        %1729 = vmatprep.mubr.f32.mxu0 0.0
        %1730 = vmatmul.mubr.f32.gmra.mxu0 %v1654
        %v1731 = vpop.f32.mrf.mxu0
        %v1732 = vadd.f32 0.0, %v1731
        %v1733 = vpop.f32.mrf.mxu0
        %1734 = vmatprep.mubr.f32.mxu0 0.0
        %1735 = vmatmul.mubr.f32.gmra.mxu0 %v1657
        %v1736 = vpop.f32.mrf.mxu0
        %v1737 = vadd.f32 0.0, %v1736
        %v1738 = vpop.f32.mrf.mxu0
        %1739 = vmatprep.mubr.f32.mxu0 0.0
        %1740 = vmatmul.mubr.f32.gmra.mxu0 %v1660
        %v1741 = vpop.f32.mrf.mxu0
        %v1742 = vadd.f32 0.0, %v1741
        %v1743 = vpop.f32.mrf.mxu0
        %1744 = vmatprep.mubr.f32.mxu0 0.0
        %1745 = vmatmul.mubr.f32.gmra.mxu0 %v1663
        %v1746 = vpop.f32.mrf.mxu0
        %v1747 = vadd.f32 0.0, %v1746
        %v1748 = vpop.f32.mrf.mxu0
        %1749 = vdwg.mxu0
        %vm1750 = vcmask 261120
        %1751 = vst.msk [vmem:[#allocation5] sm:$0xff] %vm1750, %v1732
        %1752 = vst.msk [vmem:[#allocation5 + $0x8] sm:$0xff] %vm1750, %v1737
        %1753 = vst.msk [vmem:[#allocation5 + $0x10] sm:$0xff] %vm1750, %v1742
        %vm1754 = vcmask 257024
        %1755 = vst.msk [vmem:[#allocation5 + $0x18] sm:$0xf] %vm1754, %v1747
        %s1756 = scalar_lea.vmem %s8, 16
        %v1757 = vld [vmem:[%s1756] sm:$0xff]
        %v1758 = vld [vmem:[%s1756 + $0x8] sm:$0xff]
        %1759 = vmatprep.subr.mxu0 0.0
        %1760 = vmatpush1.msra.mxu0 0.0
        %1761 = vmatprep.subr.mxu0 0.0
        %1762 = vmatpush1.msra.mxu0 0.0
        %1763 = vmatprep.subr.mxu0 0.0
        %1764 = vmatpush1.msra.mxu0 0.0
        %1765 = vmatprep.subr.mxu0 0.0
        %1766 = vmatpush1.msra.mxu0 0.0
        %1767 = vmatprep.subr.mxu0 0.0
        %1768 = vmatpush1.msra.mxu0 0.0
        %1769 = vmatprep.subr.mxu0 0.0
        %1770 = vmatpush1.msra.mxu0 0.0
        %1771 = vmatprep.subr.mxu0 0.0
        %1772 = vmatpush1.msra.mxu0 0.0
        %1773 = vmatprep.subr.mxu0 0.0
        %1774 = vmatpush1.msra.mxu0 0.0
        %1775 = vmatprep.subr.mxu0 0.0
        %1776 = vmatpush1.msra.mxu0 0.0
        %1777 = vmatprep.subr.mxu0 0.0
        %1778 = vmatpush1.msra.mxu0 0.0
        %1779 = vmatprep.subr.mxu0 0.0
        %1780 = vmatpush1.msra.mxu0 0.0
        %1781 = vmatprep.subr.mxu0 0.0
        %1782 = vmatpush1.msra.mxu0 0.0
        %1783 = vmatprep.subr.mxu0 0.0
        %1784 = vmatpush1.msra.mxu0 0.0
        %1785 = vmatprep.subr.mxu0 0.0
        %1786 = vmatpush1.msra.mxu0 0.0
        %1787 = vmatprep.subr.mxu0 0.0
        %1788 = vmatpush1.msra.mxu0 %v1758
        %1789 = vmatprep.subr.mxu0 0.0
        %1790 = vmatpush1.msra.mxu0 %v1757
        %1791 = vmatprep.subr.mxu0 0.0
        %1792 = vmatpush2.msra.mxu0 0.0
        %1793 = vmatprep.subr.mxu0 0.0
        %1794 = vmatpush2.msra.mxu0 0.0
        %1795 = vmatprep.subr.mxu0 0.0
        %1796 = vmatpush2.msra.mxu0 0.0
        %1797 = vmatprep.subr.mxu0 0.0
        %1798 = vmatpush2.msra.mxu0 0.0
        %1799 = vmatprep.subr.mxu0 0.0
        %1800 = vmatpush2.msra.mxu0 0.0
        %1801 = vmatprep.subr.mxu0 0.0
        %1802 = vmatpush2.msra.mxu0 0.0
        %1803 = vmatprep.subr.mxu0 0.0
        %1804 = vmatpush2.msra.mxu0 0.0
        %1805 = vmatprep.subr.mxu0 0.0
        %1806 = vmatpush2.msra.mxu0 0.0
        %1807 = vmatprep.subr.mxu0 0.0
        %1808 = vmatpush2.msra.mxu0 0.0
        %1809 = vmatprep.subr.mxu0 0.0
        %1810 = vmatpush2.msra.mxu0 0.0
        %1811 = vmatprep.subr.mxu0 0.0
        %1812 = vmatpush2.msra.mxu0 0.0
        %1813 = vmatprep.subr.mxu0 0.0
        %1814 = vmatpush2.msra.mxu0 0.0
        %1815 = vmatprep.subr.mxu0 0.0
        %1816 = vmatpush2.msra.mxu0 0.0
        %1817 = vmatprep.subr.mxu0 0.0
        %1818 = vmatpush2.msra.mxu0 0.0
        %1819 = vmatprep.subr.mxu0 0.0
        %1820 = vmatpush2.msra.mxu0 0.0
        %1821 = vmatprep.subr.mxu0 0.0
        %1822 = vmatpush2.msra.mxu0 0.0
        %1823 = vmatprep.mubr.f32.mxu0 0.0
        %1824 = vmatmul.mubr.f32.gmra.mxu0 %v1654
        %v1825 = vpop.f32.mrf.mxu0
        %v1826 = vadd.f32 0.0, %v1825
        %v1827 = vpop.f32.mrf.mxu0
        %1828 = vmatprep.mubr.f32.mxu0 0.0
        %1829 = vmatmul.mubr.f32.gmra.mxu0 %v1657
        %v1830 = vpop.f32.mrf.mxu0
        %v1831 = vadd.f32 0.0, %v1830
        %v1832 = vpop.f32.mrf.mxu0
        %1833 = vmatprep.mubr.f32.mxu0 0.0
        %1834 = vmatmul.mubr.f32.gmra.mxu0 %v1660
        %v1835 = vpop.f32.mrf.mxu0
        %v1836 = vadd.f32 0.0, %v1835
        %v1837 = vpop.f32.mrf.mxu0
        %1838 = vmatprep.mubr.f32.mxu0 0.0
        %1839 = vmatmul.mubr.f32.gmra.mxu0 %v1663
        %v1840 = vpop.f32.mrf.mxu0
        %v1841 = vadd.f32 0.0, %v1840
        %v1842 = vpop.f32.mrf.mxu0
        %1843 = vdwg.mxu0
        %1844 = vst.msk [vmem:[#allocation5 + $0x1c] sm:$0xff] %vm1750, %v1826
        %1845 = vst.msk [vmem:[#allocation5 + $0x24] sm:$0xff] %vm1750, %v1831
        %1846 = vst.msk [vmem:[#allocation5 + $0x2c] sm:$0xff] %vm1750, %v1836
        %1847 = vst.msk [vmem:[#allocation5 + $0x34] sm:$0xf] %vm1754, %v1841
        %s1848 = scalar_lea.vmem %s8, 32
        %v1849 = vld [vmem:[%s1848] sm:$0xff]
        %v1850 = vld [vmem:[%s1848 + $0x8] sm:$0xff]
        %1851 = vmatprep.subr.mxu0 0.0
        %1852 = vmatpush1.msra.mxu0 0.0
        %1853 = vmatprep.subr.mxu0 0.0
        %1854 = vmatpush1.msra.mxu0 0.0
        %1855 = vmatprep.subr.mxu0 0.0
        %1856 = vmatpush1.msra.mxu0 0.0
        %1857 = vmatprep.subr.mxu0 0.0
        %1858 = vmatpush1.msra.mxu0 0.0
        %1859 = vmatprep.subr.mxu0 0.0
        %1860 = vmatpush1.msra.mxu0 0.0
        %1861 = vmatprep.subr.mxu0 0.0
        %1862 = vmatpush1.msra.mxu0 0.0
        %1863 = vmatprep.subr.mxu0 0.0
        %1864 = vmatpush1.msra.mxu0 0.0
        %1865 = vmatprep.subr.mxu0 0.0
        %1866 = vmatpush1.msra.mxu0 0.0
        %1867 = vmatprep.subr.mxu0 0.0
        %1868 = vmatpush1.msra.mxu0 0.0
        %1869 = vmatprep.subr.mxu0 0.0
        %1870 = vmatpush1.msra.mxu0 0.0
        %1871 = vmatprep.subr.mxu0 0.0
        %1872 = vmatpush1.msra.mxu0 0.0
        %1873 = vmatprep.subr.mxu0 0.0
        %1874 = vmatpush1.msra.mxu0 0.0
        %1875 = vmatprep.subr.mxu0 0.0
        %1876 = vmatpush1.msra.mxu0 0.0
        %1877 = vmatprep.subr.mxu0 0.0
        %1878 = vmatpush1.msra.mxu0 0.0
        %1879 = vmatprep.subr.mxu0 0.0
        %1880 = vmatpush1.msra.mxu0 %v1850
        %1881 = vmatprep.subr.mxu0 0.0
        %1882 = vmatpush1.msra.mxu0 %v1849
        %1883 = vmatprep.subr.mxu0 0.0
        %1884 = vmatpush2.msra.mxu0 0.0
        %1885 = vmatprep.subr.mxu0 0.0
        %1886 = vmatpush2.msra.mxu0 0.0
        %1887 = vmatprep.subr.mxu0 0.0
        %1888 = vmatpush2.msra.mxu0 0.0
        %1889 = vmatprep.subr.mxu0 0.0
        %1890 = vmatpush2.msra.mxu0 0.0
        %1891 = vmatprep.subr.mxu0 0.0
        %1892 = vmatpush2.msra.mxu0 0.0
        %1893 = vmatprep.subr.mxu0 0.0
        %1894 = vmatpush2.msra.mxu0 0.0
        %1895 = vmatprep.subr.mxu0 0.0
        %1896 = vmatpush2.msra.mxu0 0.0
        %1897 = vmatprep.subr.mxu0 0.0
        %1898 = vmatpush2.msra.mxu0 0.0
        %1899 = vmatprep.subr.mxu0 0.0
        %1900 = vmatpush2.msra.mxu0 0.0
        %1901 = vmatprep.subr.mxu0 0.0
        %1902 = vmatpush2.msra.mxu0 0.0
        %1903 = vmatprep.subr.mxu0 0.0
        %1904 = vmatpush2.msra.mxu0 0.0
        %1905 = vmatprep.subr.mxu0 0.0
        %1906 = vmatpush2.msra.mxu0 0.0
        %1907 = vmatprep.subr.mxu0 0.0
        %1908 = vmatpush2.msra.mxu0 0.0
        %1909 = vmatprep.subr.mxu0 0.0
        %1910 = vmatpush2.msra.mxu0 0.0
        %1911 = vmatprep.subr.mxu0 0.0
        %1912 = vmatpush2.msra.mxu0 0.0
        %1913 = vmatprep.subr.mxu0 0.0
        %1914 = vmatpush2.msra.mxu0 0.0
        %1915 = vmatprep.mubr.f32.mxu0 0.0
        %1916 = vmatmul.mubr.f32.gmra.mxu0 %v1654
        %v1917 = vpop.f32.mrf.mxu0
        %v1918 = vadd.f32 0.0, %v1917
        %v1919 = vpop.f32.mrf.mxu0
        %1920 = vmatprep.mubr.f32.mxu0 0.0
        %1921 = vmatmul.mubr.f32.gmra.mxu0 %v1657
        %v1922 = vpop.f32.mrf.mxu0
        %v1923 = vadd.f32 0.0, %v1922
        %v1924 = vpop.f32.mrf.mxu0
        %1925 = vmatprep.mubr.f32.mxu0 0.0
        %1926 = vmatmul.mubr.f32.gmra.mxu0 %v1660
        %v1927 = vpop.f32.mrf.mxu0
        %v1928 = vadd.f32 0.0, %v1927
        %v1929 = vpop.f32.mrf.mxu0
        %1930 = vmatprep.mubr.f32.mxu0 0.0
        %1931 = vmatmul.mubr.f32.gmra.mxu0 %v1663
        %v1932 = vpop.f32.mrf.mxu0
        %v1933 = vadd.f32 0.0, %v1932
        %v1934 = vpop.f32.mrf.mxu0
        %1935 = vdwg.mxu0
        %1936 = vst.msk [vmem:[#allocation5 + $0x38] sm:$0xff] %vm1750, %v1918
        %1937 = vst.msk [vmem:[#allocation5 + $0x40] sm:$0xff] %vm1750, %v1923
        %1938 = vst.msk [vmem:[#allocation5 + $0x48] sm:$0xff] %vm1750, %v1928
        %1939 = vst.msk [vmem:[#allocation5 + $0x50] sm:$0xf] %vm1754, %v1933
        %s1940 = scalar_lea.vmem %s8, 48
        %v1941 = vld [vmem:[%s1940] sm:$0xff]
        %v1942 = vld [vmem:[%s1940 + $0x8] sm:$0xff]
        %1943 = vmatprep.subr.mxu0 0.0
        %1944 = vmatpush1.msra.mxu0 0.0
        %1945 = vmatprep.subr.mxu0 0.0
        %1946 = vmatpush1.msra.mxu0 0.0
        %1947 = vmatprep.subr.mxu0 0.0
        %1948 = vmatpush1.msra.mxu0 0.0
        %1949 = vmatprep.subr.mxu0 0.0
        %1950 = vmatpush1.msra.mxu0 0.0
        %1951 = vmatprep.subr.mxu0 0.0
        %1952 = vmatpush1.msra.mxu0 0.0
        %1953 = vmatprep.subr.mxu0 0.0
        %1954 = vmatpush1.msra.mxu0 0.0
        %1955 = vmatprep.subr.mxu0 0.0
        %1956 = vmatpush1.msra.mxu0 0.0
        %1957 = vmatprep.subr.mxu0 0.0
        %1958 = vmatpush1.msra.mxu0 0.0
        %1959 = vmatprep.subr.mxu0 0.0
        %1960 = vmatpush1.msra.mxu0 0.0
        %1961 = vmatprep.subr.mxu0 0.0
        %1962 = vmatpush1.msra.mxu0 0.0
        %1963 = vmatprep.subr.mxu0 0.0
        %1964 = vmatpush1.msra.mxu0 0.0
        %1965 = vmatprep.subr.mxu0 0.0
        %1966 = vmatpush1.msra.mxu0 0.0
        %1967 = vmatprep.subr.mxu0 0.0
        %1968 = vmatpush1.msra.mxu0 0.0
        %1969 = vmatprep.subr.mxu0 0.0
        %1970 = vmatpush1.msra.mxu0 0.0
        %1971 = vmatprep.subr.mxu0 0.0
        %1972 = vmatpush1.msra.mxu0 %v1942
        %1973 = vmatprep.subr.mxu0 0.0
        %1974 = vmatpush1.msra.mxu0 %v1941
        %1975 = vmatprep.subr.mxu0 0.0
        %1976 = vmatpush2.msra.mxu0 0.0
        %1977 = vmatprep.subr.mxu0 0.0
        %1978 = vmatpush2.msra.mxu0 0.0
        %1979 = vmatprep.subr.mxu0 0.0
        %1980 = vmatpush2.msra.mxu0 0.0
        %1981 = vmatprep.subr.mxu0 0.0
        %1982 = vmatpush2.msra.mxu0 0.0
        %1983 = vmatprep.subr.mxu0 0.0
        %1984 = vmatpush2.msra.mxu0 0.0
        %1985 = vmatprep.subr.mxu0 0.0
        %1986 = vmatpush2.msra.mxu0 0.0
        %1987 = vmatprep.subr.mxu0 0.0
        %1988 = vmatpush2.msra.mxu0 0.0
        %1989 = vmatprep.subr.mxu0 0.0
        %1990 = vmatpush2.msra.mxu0 0.0
        %1991 = vmatprep.subr.mxu0 0.0
        %1992 = vmatpush2.msra.mxu0 0.0
        %1993 = vmatprep.subr.mxu0 0.0
        %1994 = vmatpush2.msra.mxu0 0.0
        %1995 = vmatprep.subr.mxu0 0.0
        %1996 = vmatpush2.msra.mxu0 0.0
        %1997 = vmatprep.subr.mxu0 0.0
        %1998 = vmatpush2.msra.mxu0 0.0
        %1999 = vmatprep.subr.mxu0 0.0
        %2000 = vmatpush2.msra.mxu0 0.0
        %2001 = vmatprep.subr.mxu0 0.0
        %2002 = vmatpush2.msra.mxu0 0.0
        %2003 = vmatprep.subr.mxu0 0.0
        %2004 = vmatpush2.msra.mxu0 0.0
        %2005 = vmatprep.subr.mxu0 0.0
        %2006 = vmatpush2.msra.mxu0 0.0
        %2007 = vmatprep.mubr.f32.mxu0 0.0
        %2008 = vmatmul.mubr.f32.gmra.mxu0 %v1654
        %v2009 = vpop.f32.mrf.mxu0
        %v2010 = vadd.f32 0.0, %v2009
        %v2011 = vpop.f32.mrf.mxu0
        %2012 = vmatprep.mubr.f32.mxu0 0.0
        %2013 = vmatmul.mubr.f32.gmra.mxu0 %v1657
        %v2014 = vpop.f32.mrf.mxu0
        %v2015 = vadd.f32 0.0, %v2014
        %v2016 = vpop.f32.mrf.mxu0
        %2017 = vmatprep.mubr.f32.mxu0 0.0
        %2018 = vmatmul.mubr.f32.gmra.mxu0 %v1660
        %v2019 = vpop.f32.mrf.mxu0
        %v2020 = vadd.f32 0.0, %v2019
        %v2021 = vpop.f32.mrf.mxu0
        %2022 = vmatprep.mubr.f32.mxu0 0.0
        %2023 = vmatmul.mubr.f32.gmra.mxu0 %v1663
        %v2024 = vpop.f32.mrf.mxu0
        %v2025 = vadd.f32 0.0, %v2024
        %v2026 = vpop.f32.mrf.mxu0
        %2027 = vdwg.mxu0
        %2028 = vst.msk [vmem:[#allocation5 + $0x54] sm:$0xff] %vm1750, %v2010
        %2029 = vst.msk [vmem:[#allocation5 + $0x5c] sm:$0xff] %vm1750, %v2015
        %2030 = vst.msk [vmem:[#allocation5 + $0x64] sm:$0xff] %vm1750, %v2020
        %2031 = vst.msk [vmem:[#allocation5 + $0x6c] sm:$0xf] %vm1754, %v2025
        %v2032 = vld [vmem:[#allocation5] ss:$2 sm:$0x3]
        %s2033 = scalar_lea.vmem [#allocation5], 29
        %v2034 = vld [vmem:[%s2033] ss:$2 sm:$0x3]
        %v2035 = vadd.f32 %v2032, %v2034
        %s2036 = scalar_lea.vmem [#allocation5], 58
        %v2037 = vld [vmem:[%s2036] ss:$2 sm:$0x3]
        %v2038 = vadd.f32 %v2035, %v2037
        %s2039 = scalar_lea.vmem [#allocation5], 87
        %v2040 = vld [vmem:[%s2039] ss:$2 sm:$0x3]
        %v2041 = vadd.f32 %v2038, %v2040
        %v2042 = vld [vmem:[%s9] sm:$0x1]
        %v2044 = vlaneseq
        %v2045 = vshrl.u32 %v2044, 7
        %v2046 = vsub.s32 0, %v2045
        %v2047 = vrot.slane %v2042, %v2046
        %v2049 = vmul.f32 %v2041, %v2047
        %v2050 = vld [vmem:[%s10] sm:$0x1]
        %v2052 = vlaneseq
        %v2053 = vshrl.u32 %v2052, 7
        %v2054 = vsub.s32 0, %v2053
        %v2055 = vrot.slane %v2050, %v2054
        %v2057 = vadd.f32 %v2049, %v2055
        %v2058 = vmax.f32 %v2057, 0.0
        %vm2059 = vcmask 254976
        %v2060 = vsel %vm2059, %v2058, -inf
        %v2061 = vrot.slane %v2060, 4
        %v2062 = vmax.f32 %v2060, %v2061
        %v2063 = vrot.slane %v2062, 2
        %v2064 = vmax.f32 %v2062, %v2063
        %v2065 = vrot.slane %v2064, 1
        %v2066 = vmax.f32 %v2064, %v2065
        %vm2067 = vcmask 253952
        %2068 = vst.msk [vmem:[#allocation6] sm:$0x1] %vm2067, %v2066
        %s2069 = scalar_lea.vmem [#allocation5], 7
        %v2070 = vld [vmem:[%s2069] ss:$2 sm:$0x3]
        %s2071 = scalar_lea.vmem [#allocation5], 36
        %v2072 = vld [vmem:[%s2071] ss:$2 sm:$0x3]
        %v2073 = vadd.f32 %v2070, %v2072
        %s2074 = scalar_lea.vmem [#allocation5], 65
        %v2075 = vld [vmem:[%s2074] ss:$2 sm:$0x3]
        %v2076 = vadd.f32 %v2073, %v2075
        %s2077 = scalar_lea.vmem [#allocation5], 94
        %v2078 = vld [vmem:[%s2077] ss:$2 sm:$0x3]
        %v2079 = vadd.f32 %v2076, %v2078
        %v2080 = vld [vmem:[%s9] sm:$0x1]
        %v2082 = vlaneseq
        %v2083 = vshrl.u32 %v2082, 7
        %v2084 = vsub.s32 0, %v2083
        %v2085 = vrot.slane %v2080, %v2084
        %v2087 = vmul.f32 %v2079, %v2085
        %v2088 = vld [vmem:[%s10] sm:$0x1]
        %v2090 = vlaneseq
        %v2091 = vshrl.u32 %v2090, 7
        %v2092 = vsub.s32 0, %v2091
        %v2093 = vrot.slane %v2088, %v2092
        %v2095 = vadd.f32 %v2087, %v2093
        %v2096 = vmax.f32 %v2095, 0.0
        %v2097 = vsel %vm2059, %v2096, -inf
        %v2098 = vrot.slane %v2097, 4
        %v2099 = vmax.f32 %v2097, %v2098
        %v2100 = vrot.slane %v2099, 2
        %v2101 = vmax.f32 %v2099, %v2100
        %v2102 = vrot.slane %v2101, 1
        %v2103 = vmax.f32 %v2101, %v2102
        %2104 = vst.msk [vmem:[#allocation6 + $0x1] sm:$0x1] %vm2067, %v2103
        %s2105 = scalar_lea.vmem [#allocation5], 14
        %v2106 = vld [vmem:[%s2105] ss:$2 sm:$0x3]
        %s2107 = scalar_lea.vmem [#allocation5], 43
        %v2108 = vld [vmem:[%s2107] ss:$2 sm:$0x3]
        %v2109 = vadd.f32 %v2106, %v2108
        %s2110 = scalar_lea.vmem [#allocation5], 72
        %v2111 = vld [vmem:[%s2110] ss:$2 sm:$0x3]
        %v2112 = vadd.f32 %v2109, %v2111
        %s2113 = scalar_lea.vmem [#allocation5], 101
        %v2114 = vld [vmem:[%s2113] ss:$2 sm:$0x3]
        %v2115 = vadd.f32 %v2112, %v2114
        %v2116 = vld [vmem:[%s9] sm:$0x1]
        %v2118 = vlaneseq
        %v2119 = vshrl.u32 %v2118, 7
        %v2120 = vsub.s32 0, %v2119
        %v2121 = vrot.slane %v2116, %v2120
        %v2123 = vmul.f32 %v2115, %v2121
        %v2124 = vld [vmem:[%s10] sm:$0x1]
        %v2126 = vlaneseq
        %v2127 = vshrl.u32 %v2126, 7
        %v2128 = vsub.s32 0, %v2127
        %v2129 = vrot.slane %v2124, %v2128
        %v2131 = vadd.f32 %v2123, %v2129
        %v2132 = vmax.f32 %v2131, 0.0
        %v2133 = vsel %vm2059, %v2132, -inf
        %v2134 = vrot.slane %v2133, 4
        %v2135 = vmax.f32 %v2133, %v2134
        %v2136 = vrot.slane %v2135, 2
        %v2137 = vmax.f32 %v2135, %v2136
        %v2138 = vrot.slane %v2137, 1
        %v2139 = vmax.f32 %v2137, %v2138
        %2140 = vst.msk [vmem:[#allocation6 + $0x2] sm:$0x1] %vm2067, %v2139
        %s2141 = scalar_lea.vmem [#allocation5], 21
        %v2142 = vld [vmem:[%s2141] ss:$2 sm:$0x3]
        %s2143 = scalar_lea.vmem [#allocation5], 50
        %v2144 = vld [vmem:[%s2143] ss:$2 sm:$0x3]
        %v2145 = vadd.f32 %v2142, %v2144
        %s2146 = scalar_lea.vmem [#allocation5], 79
        %v2147 = vld [vmem:[%s2146] ss:$2 sm:$0x3]
        %v2148 = vadd.f32 %v2145, %v2147
        %s2149 = scalar_lea.vmem [#allocation5], 108
        %v2150 = vld [vmem:[%s2149] ss:$2 sm:$0x3]
        %v2151 = vadd.f32 %v2148, %v2150
        %v2152 = vld [vmem:[%s9] sm:$0x1]
        %v2154 = vlaneseq
        %v2155 = vshrl.u32 %v2154, 7
        %v2156 = vsub.s32 0, %v2155
        %v2157 = vrot.slane %v2152, %v2156
        %v2159 = vmul.f32 %v2151, %v2157
        %v2160 = vld [vmem:[%s10] sm:$0x1]
        %v2162 = vlaneseq
        %v2163 = vshrl.u32 %v2162, 7
        %v2164 = vsub.s32 0, %v2163
        %v2165 = vrot.slane %v2160, %v2164
        %v2167 = vadd.f32 %v2159, %v2165
        %v2168 = vmax.f32 %v2167, 0.0
        %v2169 = vsel %vm2059, %v2168, -inf
        %v2170 = vrot.slane %v2169, 4
        %v2171 = vmax.f32 %v2169, %v2170
        %v2172 = vrot.slane %v2171, 2
        %v2173 = vmax.f32 %v2171, %v2172
        %v2174 = vrot.slane %v2173, 1
        %v2175 = vmax.f32 %v2173, %v2174
        %2176 = vst.msk [vmem:[#allocation6 + $0x3] sm:$0x1] %vm2067, %v2175
        %v2177 = vld [vmem:[#allocation6] sm:$0xf]
        %v2178 = vld [vmem:[%s11] sm:$0xf]
        %v2179 = vadd.f32 %v2177, %v2178
        %v2180 = vld [vmem:[%s12] sm:$0xff]
        %v2181 = vld [vmem:[%s12 + $0x8] sm:$0xff]
        %v2182 = vld [vmem:[%s12 + $0x10] sm:$0xff]
        %v2183 = vld [vmem:[%s12 + $0x18] sm:$0xff]
        %v2184 = vld [vmem:[%s13] sm:$0x1]
        %v2186 = vlaneseq
        %v2187 = vshrl.u32 %v2186, 7
        %v2188 = vsub.s32 0, %v2187
        %v2189 = vrot.slane %v2184, %v2188
        %v2192 = vsel %vm1750, %v2179, 0
        %2194 = vmatprep.subr.mxu0 0.0
        %2195 = vmatpush1.msra.mxu0 0.0
        %2196 = vmatprep.subr.mxu0 0.0
        %2197 = vmatpush1.msra.mxu0 0.0
        %2198 = vmatprep.subr.mxu0 0.0
        %2199 = vmatpush1.msra.mxu0 0.0
        %2200 = vmatprep.subr.mxu0 0.0
        %2201 = vmatpush1.msra.mxu0 0.0
        %2202 = vmatprep.subr.mxu0 0.0
        %2203 = vmatpush1.msra.mxu0 0.0
        %2204 = vmatprep.subr.mxu0 0.0
        %2205 = vmatpush1.msra.mxu0 0.0
        %2206 = vmatprep.subr.mxu0 0.0
        %2207 = vmatpush1.msra.mxu0 0.0
        %2208 = vmatprep.subr.mxu0 0.0
        %2209 = vmatpush1.msra.mxu0 0.0
        %2210 = vmatprep.subr.mxu0 0.0
        %2211 = vmatpush1.msra.mxu0 0.0
        %2212 = vmatprep.subr.mxu0 0.0
        %2213 = vmatpush1.msra.mxu0 0.0
        %2214 = vmatprep.subr.mxu0 0.0
        %2215 = vmatpush1.msra.mxu0 0.0
        %2216 = vmatprep.subr.mxu0 0.0
        %2217 = vmatpush1.msra.mxu0 0.0
        %2218 = vmatprep.subr.mxu0 0.0
        %2219 = vmatpush1.msra.mxu0 %v2183
        %2220 = vmatprep.subr.mxu0 0.0
        %2221 = vmatpush1.msra.mxu0 %v2182
        %2222 = vmatprep.subr.mxu0 0.0
        %2223 = vmatpush1.msra.mxu0 %v2181
        %2224 = vmatprep.subr.mxu0 0.0
        %2225 = vmatpush1.msra.mxu0 %v2180
        %2226 = vmatprep.subr.mxu0 0.0
        %2227 = vmatpush2.msra.mxu0 0.0
        %2228 = vmatprep.subr.mxu0 0.0
        %2229 = vmatpush2.msra.mxu0 0.0
        %2230 = vmatprep.subr.mxu0 0.0
        %2231 = vmatpush2.msra.mxu0 0.0
        %2232 = vmatprep.subr.mxu0 0.0
        %2233 = vmatpush2.msra.mxu0 0.0
        %2234 = vmatprep.subr.mxu0 0.0
        %2235 = vmatpush2.msra.mxu0 0.0
        %2236 = vmatprep.subr.mxu0 0.0
        %2237 = vmatpush2.msra.mxu0 0.0
        %2238 = vmatprep.subr.mxu0 0.0
        %2239 = vmatpush2.msra.mxu0 0.0
        %2240 = vmatprep.subr.mxu0 0.0
        %2241 = vmatpush2.msra.mxu0 0.0
        %2242 = vmatprep.subr.mxu0 0.0
        %2243 = vmatpush2.msra.mxu0 0.0
        %2244 = vmatprep.subr.mxu0 0.0
        %2245 = vmatpush2.msra.mxu0 0.0
        %2246 = vmatprep.subr.mxu0 0.0
        %2247 = vmatpush2.msra.mxu0 0.0
        %2248 = vmatprep.subr.mxu0 0.0
        %2249 = vmatpush2.msra.mxu0 0.0
        %2250 = vmatprep.subr.mxu0 0.0
        %2251 = vmatpush2.msra.mxu0 0.0
        %2252 = vmatprep.subr.mxu0 0.0
        %2253 = vmatpush2.msra.mxu0 0.0
        %2254 = vmatprep.subr.mxu0 0.0
        %2255 = vmatpush2.msra.mxu0 0.0
        %2256 = vmatprep.subr.mxu0 0.0
        %2257 = vmatpush2.msra.mxu0 0.0
        %2258 = vmatprep.mubr.f32.mxu0 0.0
        %2259 = vmatmul.mubr.f32.gmra.mxu0 %v2192
        %v2260 = vpop.f32.mrf.mxu0
        %v2261 = vadd.f32 %v2189, %v2260
        %v2262 = vpop.f32.mrf.mxu0
        %2263 = vdwg.mxu0
        %v2264 = vmax.f32 %v2261, 0.0
        %v2265 = vld [vmem:[%s14] sm:$0xff]
        %v2266 = vld [vmem:[%s14 + $0x8] sm:$0xff]
        %v2267 = vld [vmem:[%s14 + $0x10] sm:$0xff]
        %v2268 = vld [vmem:[%s14 + $0x18] sm:$0xff]
        %v2269 = vld [vmem:[%s15] sm:$0x1]
        %v2271 = vlaneseq
        %v2272 = vshrl.u32 %v2271, 7
        %v2273 = vsub.s32 0, %v2272
        %v2274 = vrot.slane %v2269, %v2273
        %v2277 = vsel %vm1750, %v2264, 0
        %2279 = vmatprep.subr.mxu0 0.0
        %2280 = vmatpush1.msra.mxu0 0.0
        %2281 = vmatprep.subr.mxu0 0.0
        %2282 = vmatpush1.msra.mxu0 0.0
        %2283 = vmatprep.subr.mxu0 0.0
        %2284 = vmatpush1.msra.mxu0 0.0
        %2285 = vmatprep.subr.mxu0 0.0
        %2286 = vmatpush1.msra.mxu0 0.0
        %2287 = vmatprep.subr.mxu0 0.0
        %2288 = vmatpush1.msra.mxu0 0.0
        %2289 = vmatprep.subr.mxu0 0.0
        %2290 = vmatpush1.msra.mxu0 0.0
        %2291 = vmatprep.subr.mxu0 0.0
        %2292 = vmatpush1.msra.mxu0 0.0
        %2293 = vmatprep.subr.mxu0 0.0
        %2294 = vmatpush1.msra.mxu0 0.0
        %2295 = vmatprep.subr.mxu0 0.0
        %2296 = vmatpush1.msra.mxu0 0.0
        %2297 = vmatprep.subr.mxu0 0.0
        %2298 = vmatpush1.msra.mxu0 0.0
        %2299 = vmatprep.subr.mxu0 0.0
        %2300 = vmatpush1.msra.mxu0 0.0
        %2301 = vmatprep.subr.mxu0 0.0
        %2302 = vmatpush1.msra.mxu0 0.0
        %2303 = vmatprep.subr.mxu0 0.0
        %2304 = vmatpush1.msra.mxu0 %v2268
        %2305 = vmatprep.subr.mxu0 0.0
        %2306 = vmatpush1.msra.mxu0 %v2267
        %2307 = vmatprep.subr.mxu0 0.0
        %2308 = vmatpush1.msra.mxu0 %v2266
        %2309 = vmatprep.subr.mxu0 0.0
        %2310 = vmatpush1.msra.mxu0 %v2265
        %2311 = vmatprep.subr.mxu0 0.0
        %2312 = vmatpush2.msra.mxu0 0.0
        %2313 = vmatprep.subr.mxu0 0.0
        %2314 = vmatpush2.msra.mxu0 0.0
        %2315 = vmatprep.subr.mxu0 0.0
        %2316 = vmatpush2.msra.mxu0 0.0
        %2317 = vmatprep.subr.mxu0 0.0
        %2318 = vmatpush2.msra.mxu0 0.0
        %2319 = vmatprep.subr.mxu0 0.0
        %2320 = vmatpush2.msra.mxu0 0.0
        %2321 = vmatprep.subr.mxu0 0.0
        %2322 = vmatpush2.msra.mxu0 0.0
        %2323 = vmatprep.subr.mxu0 0.0
        %2324 = vmatpush2.msra.mxu0 0.0
        %2325 = vmatprep.subr.mxu0 0.0
        %2326 = vmatpush2.msra.mxu0 0.0
        %2327 = vmatprep.subr.mxu0 0.0
        %2328 = vmatpush2.msra.mxu0 0.0
        %2329 = vmatprep.subr.mxu0 0.0
        %2330 = vmatpush2.msra.mxu0 0.0
        %2331 = vmatprep.subr.mxu0 0.0
        %2332 = vmatpush2.msra.mxu0 0.0
        %2333 = vmatprep.subr.mxu0 0.0
        %2334 = vmatpush2.msra.mxu0 0.0
        %2335 = vmatprep.subr.mxu0 0.0
        %2336 = vmatpush2.msra.mxu0 0.0
        %2337 = vmatprep.subr.mxu0 0.0
        %2338 = vmatpush2.msra.mxu0 0.0
        %2339 = vmatprep.subr.mxu0 0.0
        %2340 = vmatpush2.msra.mxu0 0.0
        %2341 = vmatprep.subr.mxu0 0.0
        %2342 = vmatpush2.msra.mxu0 0.0
        %2343 = vmatprep.mubr.f32.mxu0 0.0
        %2344 = vmatmul.mubr.f32.gmra.mxu0 %v2277
        %v2345 = vpop.f32.mrf.mxu0
        %v2346 = vadd.f32 %v2274, %v2345
        %v2347 = vpop.f32.mrf.mxu0
        %2348 = vdwg.mxu0
        %v2349 = vtanh.pop %v2346
        %v2350 = vld [vmem:[%s16] sm:$0xff]
        %v2351 = vld [vmem:[%s16 + $0x8] sm:$0xff]
        %v2352 = vld [vmem:[%s16 + $0x10] sm:$0xff]
        %v2353 = vld [vmem:[%s16 + $0x18] sm:$0xff]
        %v2354 = vld [vmem:[#allocation9] sm:$0x1]
        %v2356 = vlaneseq
        %v2357 = vshrl.u32 %v2356, 7
        %v2358 = vsub.s32 0, %v2357
        %v2359 = vrot.slane %v2354, %v2358
        %v2362 = vsel %vm1750, %v2349, 0
        %2364 = vmatprep.subr.mxu0 0.0
        %2365 = vmatpush1.msra.mxu0 0.0
        %2366 = vmatprep.subr.mxu0 0.0
        %2367 = vmatpush1.msra.mxu0 0.0
        %2368 = vmatprep.subr.mxu0 0.0
        %2369 = vmatpush1.msra.mxu0 0.0
        %2370 = vmatprep.subr.mxu0 0.0
        %2371 = vmatpush1.msra.mxu0 0.0
        %2372 = vmatprep.subr.mxu0 0.0
        %2373 = vmatpush1.msra.mxu0 0.0
        %2374 = vmatprep.subr.mxu0 0.0
        %2375 = vmatpush1.msra.mxu0 0.0
        %2376 = vmatprep.subr.mxu0 0.0
        %2377 = vmatpush1.msra.mxu0 0.0
        %2378 = vmatprep.subr.mxu0 0.0
        %2379 = vmatpush1.msra.mxu0 0.0
        %2380 = vmatprep.subr.mxu0 0.0
        %2381 = vmatpush1.msra.mxu0 0.0
        %2382 = vmatprep.subr.mxu0 0.0
        %2383 = vmatpush1.msra.mxu0 0.0
        %2384 = vmatprep.subr.mxu0 0.0
        %2385 = vmatpush1.msra.mxu0 0.0
        %2386 = vmatprep.subr.mxu0 0.0
        %2387 = vmatpush1.msra.mxu0 0.0
        %2388 = vmatprep.subr.mxu0 0.0
        %2389 = vmatpush1.msra.mxu0 %v2353
        %2390 = vmatprep.subr.mxu0 0.0
        %2391 = vmatpush1.msra.mxu0 %v2352
        %2392 = vmatprep.subr.mxu0 0.0
        %2393 = vmatpush1.msra.mxu0 %v2351
        %2394 = vmatprep.subr.mxu0 0.0
        %2395 = vmatpush1.msra.mxu0 %v2350
        %2396 = vmatprep.subr.mxu0 0.0
        %2397 = vmatpush2.msra.mxu0 0.0
        %2398 = vmatprep.subr.mxu0 0.0
        %2399 = vmatpush2.msra.mxu0 0.0
        %2400 = vmatprep.subr.mxu0 0.0
        %2401 = vmatpush2.msra.mxu0 0.0
        %2402 = vmatprep.subr.mxu0 0.0
        %2403 = vmatpush2.msra.mxu0 0.0
        %2404 = vmatprep.subr.mxu0 0.0
        %2405 = vmatpush2.msra.mxu0 0.0
        %2406 = vmatprep.subr.mxu0 0.0
        %2407 = vmatpush2.msra.mxu0 0.0
        %2408 = vmatprep.subr.mxu0 0.0
        %2409 = vmatpush2.msra.mxu0 0.0
        %2410 = vmatprep.subr.mxu0 0.0
        %2411 = vmatpush2.msra.mxu0 0.0
        %2412 = vmatprep.subr.mxu0 0.0
        %2413 = vmatpush2.msra.mxu0 0.0
        %2414 = vmatprep.subr.mxu0 0.0
        %2415 = vmatpush2.msra.mxu0 0.0
        %2416 = vmatprep.subr.mxu0 0.0
        %2417 = vmatpush2.msra.mxu0 0.0
        %2418 = vmatprep.subr.mxu0 0.0
        %2419 = vmatpush2.msra.mxu0 0.0
        %2420 = vmatprep.subr.mxu0 0.0
        %2421 = vmatpush2.msra.mxu0 0.0
        %2422 = vmatprep.subr.mxu0 0.0
        %2423 = vmatpush2.msra.mxu0 0.0
        %2424 = vmatprep.subr.mxu0 0.0
        %2425 = vmatpush2.msra.mxu0 0.0
        %2426 = vmatprep.subr.mxu0 0.0
        %2427 = vmatpush2.msra.mxu0 0.0
        %2428 = vmatprep.mubr.f32.mxu0 0.0
        %2429 = vmatmul.mubr.f32.gmra.mxu0 %v2362
        %v2430 = vpop.f32.mrf.mxu0
        %v2431 = vadd.f32 %v2359, %v2430
        %v2432 = vpop.f32.mrf.mxu0
        %2433 = vdwg.mxu0
        %v2434 = vlaneseq
        %v2435 = vshrl.u32 %v2434, 7
        %s2436 = sld [smem:[#allocation8 + %s44]]
        %v2437 = vstv %s2436
        %vm2438 = vcmp.ge.s32.totalorder %v2435, %v2437
        %v2439 = vsel %vm2438, -inf, %v2431
        %vm2440 = vcmask 3072
        %v2441 = vsel %vm2440, %v2439, -inf
        %v2442 = vrot.slane %v2441, 4
        %v2443 = vmax.f32 %v2441, %v2442
        %v2444 = vrot.slane %v2443, 2
        %v2445 = vmax.f32 %v2443, %v2444
        %v2446 = vrot.slane %v2445, 1
        %v2447 = vmax.f32 %v2445, %v2446
        %v2448 = vsub.f32 %v2439, %v2447
        %v2449 = vmul.f32 %v2448, 1.442695
        %v2450 = vpow.pop %v2449
        %v2451 = vsel %vm2440, %v2450, 0.0
        %v2452 = vrot.slane %v2451, 4
        %v2453 = vadd.f32 %v2451, %v2452
        %v2454 = vrot.slane %v2453, 2
        %v2455 = vadd.f32 %v2453, %v2454
        %v2456 = vrot.slane %v2455, 1
        %v2457 = vadd.f32 %v2455, %v2456
        %v2458 = vrcp.pop %v2457
        %v2459 = vmul.f32 %v2450, %v2458
        %2461 = vset.pattern.permute.xlu0 0
        %2462 = vperm.xlu0 %2461, %v2459
        %v2463 = vpop.permute.xlu0 %2462
        %v2465 = vmul.f32 %v2463, %v2177
        %v2466 = vsel %vm1754, %v2465, 0.0
        %v2467 = vrot.slane %v2466, 4
        %v2468 = vadd.f32 %v2466, %v2467
        %v2469 = vrot.slane %v2468, 2
        %v2470 = vadd.f32 %v2468, %v2469
        %v2471 = vrot.slane %v2470, 1
        %v2472 = vadd.f32 %v2470, %v2471
        %v2473 = vld [vmem:[%s18] sm:$0xff]
        %v2474 = vld [vmem:[%s18 + $0x8] sm:$0xff]
        %v2475 = vld [vmem:[%s18 + $0x10] sm:$0xff]
        %v2476 = vld [vmem:[%s18 + $0x18] sm:$0xff]
        %v2477 = vld [vmem:[%s19] sm:$0x1]
        %v2479 = vsel %vm1750, %v2472, 0
        %2481 = vmatprep.subr.mxu0 0.0
        %2482 = vmatpush1.msra.mxu0 0.0
        %2483 = vmatprep.subr.mxu0 0.0
        %2484 = vmatpush1.msra.mxu0 0.0
        %2485 = vmatprep.subr.mxu0 0.0
        %2486 = vmatpush1.msra.mxu0 0.0
        %2487 = vmatprep.subr.mxu0 0.0
        %2488 = vmatpush1.msra.mxu0 0.0
        %2489 = vmatprep.subr.mxu0 0.0
        %2490 = vmatpush1.msra.mxu0 0.0
        %2491 = vmatprep.subr.mxu0 0.0
        %2492 = vmatpush1.msra.mxu0 0.0
        %2493 = vmatprep.subr.mxu0 0.0
        %2494 = vmatpush1.msra.mxu0 0.0
        %2495 = vmatprep.subr.mxu0 0.0
        %2496 = vmatpush1.msra.mxu0 0.0
        %2497 = vmatprep.subr.mxu0 0.0
        %2498 = vmatpush1.msra.mxu0 0.0
        %2499 = vmatprep.subr.mxu0 0.0
        %2500 = vmatpush1.msra.mxu0 0.0
        %2501 = vmatprep.subr.mxu0 0.0
        %2502 = vmatpush1.msra.mxu0 0.0
        %2503 = vmatprep.subr.mxu0 0.0
        %2504 = vmatpush1.msra.mxu0 0.0
        %2505 = vmatprep.subr.mxu0 0.0
        %2506 = vmatpush1.msra.mxu0 %v2476
        %2507 = vmatprep.subr.mxu0 0.0
        %2508 = vmatpush1.msra.mxu0 %v2475
        %2509 = vmatprep.subr.mxu0 0.0
        %2510 = vmatpush1.msra.mxu0 %v2474
        %2511 = vmatprep.subr.mxu0 0.0
        %2512 = vmatpush1.msra.mxu0 %v2473
        %2513 = vmatprep.subr.mxu0 0.0
        %2514 = vmatpush2.msra.mxu0 0.0
        %2515 = vmatprep.subr.mxu0 0.0
        %2516 = vmatpush2.msra.mxu0 0.0
        %2517 = vmatprep.subr.mxu0 0.0
        %2518 = vmatpush2.msra.mxu0 0.0
        %2519 = vmatprep.subr.mxu0 0.0
        %2520 = vmatpush2.msra.mxu0 0.0
        %2521 = vmatprep.subr.mxu0 0.0
        %2522 = vmatpush2.msra.mxu0 0.0
        %2523 = vmatprep.subr.mxu0 0.0
        %2524 = vmatpush2.msra.mxu0 0.0
        %2525 = vmatprep.subr.mxu0 0.0
        %2526 = vmatpush2.msra.mxu0 0.0
        %2527 = vmatprep.subr.mxu0 0.0
        %2528 = vmatpush2.msra.mxu0 0.0
        %2529 = vmatprep.subr.mxu0 0.0
        %2530 = vmatpush2.msra.mxu0 0.0
        %2531 = vmatprep.subr.mxu0 0.0
        %2532 = vmatpush2.msra.mxu0 0.0
        %2533 = vmatprep.subr.mxu0 0.0
        %2534 = vmatpush2.msra.mxu0 0.0
        %2535 = vmatprep.subr.mxu0 0.0
        %2536 = vmatpush2.msra.mxu0 0.0
        %2537 = vmatprep.subr.mxu0 0.0
        %2538 = vmatpush2.msra.mxu0 0.0
        %2539 = vmatprep.subr.mxu0 0.0
        %2540 = vmatpush2.msra.mxu0 0.0
        %2541 = vmatprep.subr.mxu0 0.0
        %2542 = vmatpush2.msra.mxu0 0.0
        %2543 = vmatprep.subr.mxu0 0.0
        %2544 = vmatpush2.msra.mxu0 0.0
        %2545 = vmatprep.mubr.f32.mxu0 0.0
        %2546 = vmatmul.mubr.f32.gmra.mxu0 %v2479
        %v2547 = vpop.f32.mrf.mxu0
        %v2548 = vadd.f32 %v2477, %v2547
        %v2549 = vpop.f32.mrf.mxu0
        %2550 = vdwg.mxu0
        %v2551 = vmax.f32 %v2548, 0.0
        %v2552 = vld [vmem:[%s20] sm:$0xff]
        %v2553 = vld [vmem:[%s20 + $0x8] sm:$0xff]
        %v2554 = vld [vmem:[%s20 + $0x10] sm:$0xff]
        %v2555 = vld [vmem:[%s20 + $0x18] sm:$0xff]
        %v2556 = vld [vmem:[%s20 + $0x20] sm:$0xff]
        %v2557 = vld [vmem:[%s20 + $0x28] sm:$0xff]
        %v2558 = vld [vmem:[%s20 + $0x30] sm:$0xff]
        %v2559 = vld [vmem:[%s20 + $0x38] sm:$0xff]
        %v2560 = vld [vmem:[%s20 + $0x40] sm:$0xff]
        %v2561 = vld [vmem:[%s20 + $0x48] sm:$0xff]
        %v2562 = vld [vmem:[%s20 + $0x50] sm:$0xff]
        %v2563 = vld [vmem:[%s20 + $0x58] sm:$0xff]
        %v2564 = vld [vmem:[%s20 + $0x60] sm:$0xff]
        %v2565 = vld [vmem:[%s20 + $0x68] sm:$0xff]
        %v2566 = vld [vmem:[%s20 + $0x70] sm:$0xff]
        %v2567 = vld [vmem:[%s20 + $0x78] sm:$0xff]
        %v2568 = vld [vmem:[%s21] sm:$0x1]
        %2569 = vmatprep.subr.mxu0 0.0
        %2570 = vmatpush1.msra.mxu0 %v2567
        %2571 = vmatprep.subr.mxu0 0.0
        %2572 = vmatpush1.msra.mxu0 %v2566
        %2573 = vmatprep.subr.mxu0 0.0
        %2574 = vmatpush1.msra.mxu0 %v2565
        %2575 = vmatprep.subr.mxu0 0.0
        %2576 = vmatpush1.msra.mxu0 %v2564
        %2577 = vmatprep.subr.mxu0 0.0
        %2578 = vmatpush1.msra.mxu0 %v2563
        %2579 = vmatprep.subr.mxu0 0.0
        %2580 = vmatpush1.msra.mxu0 %v2562
        %2581 = vmatprep.subr.mxu0 0.0
        %2582 = vmatpush1.msra.mxu0 %v2561
        %2583 = vmatprep.subr.mxu0 0.0
        %2584 = vmatpush1.msra.mxu0 %v2560
        %2585 = vmatprep.subr.mxu0 0.0
        %2586 = vmatpush1.msra.mxu0 %v2559
        %2587 = vmatprep.subr.mxu0 0.0
        %2588 = vmatpush1.msra.mxu0 %v2558
        %2589 = vmatprep.subr.mxu0 0.0
        %2590 = vmatpush1.msra.mxu0 %v2557
        %2591 = vmatprep.subr.mxu0 0.0
        %2592 = vmatpush1.msra.mxu0 %v2556
        %2593 = vmatprep.subr.mxu0 0.0
        %2594 = vmatpush1.msra.mxu0 %v2555
        %2595 = vmatprep.subr.mxu0 0.0
        %2596 = vmatpush1.msra.mxu0 %v2554
        %2597 = vmatprep.subr.mxu0 0.0
        %2598 = vmatpush1.msra.mxu0 %v2553
        %2599 = vmatprep.subr.mxu0 0.0
        %2600 = vmatpush1.msra.mxu0 %v2552
        %2601 = vmatprep.subr.mxu0 0.0
        %2602 = vmatpush2.msra.mxu0 0.0
        %2603 = vmatprep.subr.mxu0 0.0
        %2604 = vmatpush2.msra.mxu0 0.0
        %2605 = vmatprep.subr.mxu0 0.0
        %2606 = vmatpush2.msra.mxu0 0.0
        %2607 = vmatprep.subr.mxu0 0.0
        %2608 = vmatpush2.msra.mxu0 0.0
        %2609 = vmatprep.subr.mxu0 0.0
        %2610 = vmatpush2.msra.mxu0 0.0
        %2611 = vmatprep.subr.mxu0 0.0
        %2612 = vmatpush2.msra.mxu0 0.0
        %2613 = vmatprep.subr.mxu0 0.0
        %2614 = vmatpush2.msra.mxu0 0.0
        %2615 = vmatprep.subr.mxu0 0.0
        %2616 = vmatpush2.msra.mxu0 0.0
        %2617 = vmatprep.subr.mxu0 0.0
        %2618 = vmatpush2.msra.mxu0 0.0
        %2619 = vmatprep.subr.mxu0 0.0
        %2620 = vmatpush2.msra.mxu0 0.0
        %2621 = vmatprep.subr.mxu0 0.0
        %2622 = vmatpush2.msra.mxu0 0.0
        %2623 = vmatprep.subr.mxu0 0.0
        %2624 = vmatpush2.msra.mxu0 0.0
        %2625 = vmatprep.subr.mxu0 0.0
        %2626 = vmatpush2.msra.mxu0 0.0
        %2627 = vmatprep.subr.mxu0 0.0
        %2628 = vmatpush2.msra.mxu0 0.0
        %2629 = vmatprep.subr.mxu0 0.0
        %2630 = vmatpush2.msra.mxu0 0.0
        %2631 = vmatprep.subr.mxu0 0.0
        %2632 = vmatpush2.msra.mxu0 0.0
        %2633 = vmatprep.mubr.f32.mxu0 0.0
        %2634 = vmatmul.mubr.f32.gmra.mxu0 %v2551
        %v2635 = vpop.f32.mrf.mxu0
        %v2636 = vadd.f32 %v2568, %v2635
        %v2637 = vpop.f32.mrf.mxu0
        %2638 = vdwg.mxu0
        %v2639 = vand.u32 2147483647, %v2636
        %v2640 = vsub.f32 0.0, %v2639
        %v2641 = vmul.f32 %v2640, 1.442695
        %v2642 = vpow.pop %v2641
        %vm2643 = vcmp.ge.f32.partialorder %v2636, 0.0
        %v2644 = vsel %vm2643, 1.0, %v2642
        %v2645 = vadd.f32 %v2642, 1.0
        %v2646 = vrcp.pop %v2645
        %v2647 = vmul.f32 %v2644, %v2646
        %v2648 = vlaneseq
        %v2649 = vand.u32 %v2648, 127
        %v2650 = vadd.s32 %v2435, 2
        %vm2651 = vcmp.eq.s32.totalorder %v2649, %v2650
        %v2652 = vsel %vm2651, %v2463, 0.0
        %vm2653 = vcmask 1043456
        %v2654 = vsel %vm2653, %v2652, 0.0
        %v2655 = vrot.slane %v2654, 4
        %v2656 = vadd.f32 %v2654, %v2655
        %v2657 = vrot.slane %v2656, 2
        %v2658 = vadd.f32 %v2656, %v2657
        %v2659 = vrot.slane %v2658, 1
        %v2660 = vadd.f32 %v2658, %v2659
        %vm2661 = vcmp.lt.s32.totalorder %v2649, 2
        %v2662 = vsel %vm2661, %v2647, %v2660
        %2663 = vst [vmem:[%s657] sm:$0x1] %v2662
        %s2664 = sand.u32 %s498, 1
        %s2665 = scalar_lea.sflag [#allocation11], %s2664
        %s2666 = sand.u32 %s498, 1
        %s2667 = scalar_lea.vmem [#allocation10], %s2666
        // Predicated region
        $region105: #{tpu_custom_call.1} parent=103 // pred_check
          %p2668 = pneg %p508
        $region106: #{tpu_custom_call.1} parent=103 // pred_check_branch
          %2670 = sbr.rel (%p2668) target = $region108
        $region107: #{tpu_custom_call.1} parent=103 // pred_region
          %s2672 = ssub.s32 16, 16
          %2673 = vsyncadd %s2665, %s2672
          %s2674 = smul.addr %s44, 16
          %s2675 = scalar_lea.hbm %s22, %s2674
          %s2677 = sshll.u32 %s2667, 4
          %s2678 = int_to_ptr.vmem [resolvable:$true] %s2677
          %2680 = dma.vmem_to_hbm [thread:$0]  %s2678, 16, %s2675, %s2665
        $region108: #{tpu_custom_call.1} parent=103 // pred_fallthru
          _
      $region104: #{tpu_custom_call.1} parent=5 // pred_fallthru
        _
      %p2681 = scmp.le.s32.totalorder 2, %s39
      // Predicated region
      $region109: #{tpu_custom_call.1} parent=5 // pred_check
        %p2682 = pneg %p2681
      $region110: #{tpu_custom_call.1} parent=5 // pred_check_branch
        %2684 = sbr.rel (%p2682) target = $region112
      $region111: #{tpu_custom_call.1} parent=5 // pred_region
        %s2685 = ssub.s32 %s39, 2
        // Predicated region
        $region113: #{tpu_custom_call.1} parent=111 // pred_check
          %p2686 = pneg %p514
        $region114: #{tpu_custom_call.1} parent=111 // pred_check_branch
          %2688 = sbr.rel (%p2686) target = $region116
        $region115: #{tpu_custom_call.1} parent=111 // pred_region
          %s2689 = sand.u32 %s499, 1
          %s2690 = scalar_lea.sflag [#allocation11], %s2689
          %s2691 = sand.u32 %s499, 1
          %s2692 = scalar_lea.vmem [#allocation10], %s2691
          %2693 = dma.done %s2690, 16
        $region116: #{tpu_custom_call.1} parent=111 // pred_fallthru
          _
      $region112: #{tpu_custom_call.1} parent=5 // pred_fallthru
        _
    $region6: #{tpu_custom_call.1} parent=1 // loop_footer
      %s43 = sadd.s32 1, %s39
    $region7: #{tpu_custom_call.1} parent=1 // loop_footer_branch
      %38 = sbr.rel target = $region3
    $region8: #{tpu_custom_call.1} parent=1 // loop_exit
      _
    %2694 = vsyncpa [#allocation11], 1
    %s2695 = scalar_lea.sflag [#allocation11], 1
    %2696 = vsyncpa %s2695, 1

</llo_original>
